<compile_context>
chip_gen: v6e
topology: v6e:2x2x1
jax: 0.10.0
libtpu: 0.0.40
codegen_flags: <defaults>
</compile_context>

<pallas_src>
import functools

import jax
import jax.numpy as jnp
from jax import lax
from jax.experimental import pallas as pl
from jax.experimental.pallas import tpu as pltpu

EPS = 1e-5  # PyTorch BatchNorm2d default eps


# ---------------------------------------------------------------------------
# kernels
# ---------------------------------------------------------------------------

def _masked_stats(y, tile_rows, valid_rows, padded_rows):
    """Per-tile [sum, sum_sq] over rows of f32 y; zero-padded rows are masked out."""
    if valid_rows != padded_rows:
        r = pl.program_id(0) * tile_rows + lax.broadcasted_iota(jnp.int32, y.shape, 0)
        y = jnp.where(r < valid_rows, y, 0.0)
    return jnp.concatenate(
        [jnp.sum(y, axis=0, keepdims=True),
         jnp.sum(y * y, axis=0, keepdims=True)], axis=0)


def _conv1x1_stats_kernel(x_ref, w_ref, b_ref, y_ref, st_ref,
                          *, tile_rows, valid_rows, padded_rows):
    """y = x @ W + b (f32 accum); store y as bf16; emit per-tile BN partials."""
    y = jnp.dot(x_ref[...].astype(w_ref.dtype), w_ref[...],
                preferred_element_type=jnp.float32) + b_ref[...]
    y_ref[...] = y.astype(y_ref.dtype)
    st_ref[...] = _masked_stats(y, tile_rows, valid_rows, padded_rows)


def _bn_relu_conv3x3_stats_kernel(a_ref, scale_ref, shift_ref, w_ref, b_ref,
                                  y_ref, st_ref, pad_ref):
    """Per-image: relu(BN1(a)) -> 3x3 conv (pad=1) as 3 accumulated K=3*Cr dots."""
    H, W, Cr = a_ref.shape
    bf = pad_ref.dtype

    # BN1 apply (folded scale/shift, f32) + ReLU, then cast once to bf16.
    a = jnp.maximum(a_ref[...] * scale_ref[...] + shift_ref[...], 0.0)
    a16 = a.astype(bf)

    # Build the (H+2, W+2, Cr) bf16 halo scratch with only full-width stores
    # (dim-0 offsets are on the untiled axis; no packed sub-sublane offset stores).
    zrow = jnp.zeros((1, W + 2, Cr), bf)
    zcol = jnp.zeros((H, 1, Cr), bf)
    pad_ref[0:1, :, :] = zrow
    pad_ref[H + 1:H + 2, :, :] = zrow
    pad_ref[1:H + 1, :, :] = jnp.concatenate([zcol, a16, zcol], axis=1)

    # Group the 9 taps by dw: 3 MXU dots of depth 3*Cr, accumulated in f32.
    acc = jnp.zeros((H * W, Cr), jnp.float32)
    for dw in range(3):
        taps = jnp.concatenate(
            [pad_ref[dh:dh + H, dw:dw + W, :] for dh in range(3)], axis=-1)
        acc = acc + jnp.dot(taps.reshape(H * W, 3 * Cr), w_ref[dw],
                            preferred_element_type=jnp.float32)
    y = acc + b_ref[...]

    y_ref[...] = y.reshape(H, W, Cr).astype(y_ref.dtype)
    st_ref[...] = jnp.concatenate(
        [jnp.sum(y, axis=0, keepdims=True),
         jnp.sum(y * y, axis=0, keepdims=True)], axis=0)


def _bn_relu_conv1x1_stats_kernel(a_ref, scale_ref, shift_ref, w_ref, b_ref,
                                  st_ref, *, tile_rows, valid_rows, padded_rows):
    """Stats-only pass: y = relu(BN2(a)) @ W3 + b3; emit per-tile BN3 partials."""
    a = jnp.maximum(a_ref[...] * scale_ref[...] + shift_ref[...], 0.0)
    y = jnp.dot(a.astype(w_ref.dtype), w_ref[...],
                preferred_element_type=jnp.float32) + b_ref[...]
    st_ref[...] = _masked_stats(y, tile_rows, valid_rows, padded_rows)


def _fused_tail_kernel(a_ref, x_ref, scale2_ref, shift2_ref, w_ref, b_ref,
                       scale3_ref, shift3_ref, out_ref):
    """Recompute conv3 from bf16 t2, then BN3 + ReLU + residual add (f32 out)."""
    a = jnp.maximum(a_ref[...] * scale2_ref[...] + shift2_ref[...], 0.0)
    y = jnp.dot(a.astype(w_ref.dtype), w_ref[...],
                preferred_element_type=jnp.float32) + b_ref[...]
    out_ref[...] = (jnp.maximum(y * scale3_ref[...] + shift3_ref[...], 0.0)
                    + x_ref[...])


# ---------------------------------------------------------------------------
# wrapper helpers
# ---------------------------------------------------------------------------

def _round_up(x, m):
    return ((x + m - 1) // m) * m


def _pick_vmem_limit(default=48 * 1024 * 1024):
    """~3/4 of this chip's VMEM (capped at 100 MiB); fall back to 48 MiB."""
    try:
        info = pltpu.get_tpu_info()
    except Exception:
        return default
    for name in ("vmem_capacity_bytes", "vmem_size_bytes", "vmem_bytes"):
        cap = getattr(info, name, None)
        if cap:
            return int(min(cap * 3 // 4, 100 * 1024 * 1024))
    return default


def _finalize_bn(partial, count, gamma, beta):
    """partial: (tiles, 2, C) per-tile [sum, sum_sq] -> folded BN scale/shift (f32)."""
    tot = jnp.sum(partial, axis=0)                         # (2, C)
    mean = tot[0] / count
    var = jnp.maximum(tot[1] / count - mean * mean, 0.0)   # biased var (train-mode BN)
    inv_std = lax.rsqrt(var + EPS)
    scale = gamma.astype(jnp.float32) * inv_std
    shift = beta.astype(jnp.float32) - mean * scale
    return scale.reshape(1, -1), shift.reshape(1, -1)


# ---------------------------------------------------------------------------
# forward
# ---------------------------------------------------------------------------

def resnet_block_pallas(x_nhwc, params, *, compute_dtype=jnp.bfloat16, row_tile=512):
    """ResNetBlock forward. x_nhwc: (N, H, W, C) float32 -> (N, H, W, C) float32."""
    (w1, b1, g1, be1, w2, b2, g2, be2, w3, b3, g3, be3) = params
    N, H, W, C = x_nhwc.shape
    Cr = w1.shape[-1]                       # w1 is HWIO (1, 1, C, Cr)
    M = N * H * W
    f32 = jnp.float32

    # Fixed-size, 8-aligned row tiles; pad M up to a tile multiple (padded rows are
    # masked out of the BN sums and sliced off the final output).
    GM = max(1, -(-M // row_tile))
    TM = _round_up(-(-M // GM), 8)
    M_pad = TM * GM

    x2d = x_nhwc.astype(f32).reshape(M, C)
    x2d_p = jnp.pad(x2d, ((0, M_pad - M), (0, 0))) if M_pad != M else x2d

    # MXU operands in compute_dtype (bf16); biases / BN params stay f32.
    w1k = w1.reshape(C, Cr).astype(compute_dtype)
    # 3x3 weights grouped by the dw tap offset: (dw, dh*Cin, Cout).
    w2k = jnp.transpose(w2, (1, 0, 2, 3)).reshape(3, 3 * Cr, Cr).astype(compute_dtype)
    w3k = w3.reshape(Cr, C).astype(compute_dtype)
    row = lambda v: v.reshape(1, -1).astype(f32)
    b1r, b2r, b3r = row(b1), row(b2), row(b3)

    cparams = pltpu.CompilerParams(
        dimension_semantics=("parallel",),
        vmem_limit_bytes=_pick_vmem_limit(),
    )
    full = lambda shape: pl.BlockSpec(shape, lambda i: (0,) * len(shape))
    row_args = dict(tile_rows=TM, valid_rows=M, padded_rows=M_pad)

    # ---- pass 1: 1x1 conv (bf16 out) + BN1 partial stats ----------------------
    t1, st1 = pl.pallas_call(
        functools.partial(_conv1x1_stats_kernel, **row_args),
        grid=(GM,),
        in_specs=[pl.BlockSpec((TM, C), lambda i: (i, 0)),
                  full((C, Cr)), full((1, Cr))],
        out_specs=[pl.BlockSpec((TM, Cr), lambda i: (i, 0)),
                   pl.BlockSpec((None, 2, Cr), lambda i: (i, 0, 0))],
        out_shape=[jax.ShapeDtypeStruct((M_pad, Cr), compute_dtype),
                   jax.ShapeDtypeStruct((GM, 2, Cr), f32)],
        compiler_params=cparams,
    )(x2d_p, w1k, b1r)
    scale1, shift1 = _finalize_bn(st1, M, g1, be1)

    # ---- pass 2: BN1+ReLU + 3x3 conv (per-image, bf16 out) + BN2 partials -----
    t1_img = (t1[:M] if M_pad != M else t1).reshape(N, H, W, Cr)
    t2, st2 = pl.pallas_call(
        _bn_relu_conv3x3_stats_kernel,
        grid=(N,),
        in_specs=[pl.BlockSpec((None, H, W, Cr), lambda n: (n, 0, 0, 0)),
                  full((1, Cr)), full((1, Cr)),
                  full((3, 3 * Cr, Cr)), full((1, Cr))],
        out_specs=[pl.BlockSpec((None, H, W, Cr), lambda n: (n, 0, 0, 0)),
                   pl.BlockSpec((None, 2, Cr), lambda n: (n, 0, 0))],
        out_shape=[jax.ShapeDtypeStruct((N, H, W, Cr), compute_dtype),
                   jax.ShapeDtypeStruct((N, 2, Cr), f32)],
        scratch_shapes=[pltpu.VMEM((H + 2, W + 2, Cr), compute_dtype)],
        compiler_params=cparams,
    )(t1_img, scale1, shift1, w2k, b2r)
    scale2, shift2 = _finalize_bn(st2, M, g2, be2)

    # ---- pass 3: BN2+ReLU + 1x1 conv, stats only (t3 never written to HBM) ----
    t2_2d = t2.reshape(M, Cr)
    t2_2d_p = jnp.pad(t2_2d, ((0, M_pad - M), (0, 0))) if M_pad != M else t2_2d
    st3 = pl.pallas_call(
        functools.partial(_bn_relu_conv1x1_stats_kernel, **row_args),
        grid=(GM,),
        in_specs=[pl.BlockSpec((TM, Cr), lambda i: (i, 0)),
                  full((1, Cr)), full((1, Cr)),
                  full((Cr, C)), full((1, C))],
        out_specs=pl.BlockSpec((None, 2, C), lambda i: (i, 0, 0)),
        out_shape=jax.ShapeDtypeStruct((GM, 2, C), f32),
        compiler_params=cparams,
    )(t2_2d_p, scale2, shift2, w3k, b3r)
    scale3, shift3 = _finalize_bn(st3, M, g3, be3)

    # ---- pass 4: recompute conv3 + BN3 + ReLU + residual add ------------------
    out2d = pl.pallas_call(
        _fused_tail_kernel,
        grid=(GM,),
        in_specs=[pl.BlockSpec((TM, Cr), lambda i: (i, 0)),
                  pl.BlockSpec((TM, C), lambda i: (i, 0)),
                  full((1, Cr)), full((1, Cr)),
                  full((Cr, C)), full((1, C)),
                  full((1, C)), full((1, C))],
        out_specs=pl.BlockSpec((TM, C), lambda i: (i, 0)),
        out_shape=jax.ShapeDtypeStruct((M_pad, C), f32),
        compiler_params=cparams,
    )(t2_2d_p, x2d_p, scale2, shift2, w3k, b3r, scale3, shift3)
    out2d = out2d[:M] if M_pad != M else out2d

    return out2d.reshape(N, H, W, C)


def resnet_block_pallas_nchw(x_nchw, params, **kw):
    """PyTorch-layout entry point: (N, C, H, W) -> (N, C, H, W)."""
    x = jnp.transpose(x_nchw, (0, 2, 3, 1))
    y = resnet_block_pallas(x, params, **kw)
    return jnp.transpose(y, (0, 3, 1, 2))


# ---------------------------------------------------------------------------
# pure-JAX reference mirroring the kernel's mixed precision
# (bf16 conv operands + bf16 HBM intermediates, f32 accumulation / BN stats)
# ---------------------------------------------------------------------------

def resnet_block_reference(x_nhwc, params, *, compute_dtype=jnp.bfloat16):
    (w1, b1, g1, be1, w2, b2, g2, be2, w3, b3, g3, be3) = params
    dn = ("NHWC", "HWIO", "NHWC")
    f32 = jnp.float32

    def conv(x, w, pad):
        return lax.conv_general_dilated(
            x.astype(compute_dtype), w.astype(compute_dtype), (1, 1),
            [(pad, pad), (pad, pad)], dimension_numbers=dn,
            preferred_element_type=f32)

    def fold_bn(y, g, b):
        mean = jnp.mean(y, axis=(0, 1, 2))
        var = jnp.maximum(jnp.mean(y * y, axis=(0, 1, 2)) - mean * mean, 0.0)
        scale = g * lax.rsqrt(var + EPS)
        return scale, b - mean * scale

    x = x_nhwc.astype(f32)
    y1 = conv(x, w1, 0) + b1
    s1, sh1 = fold_bn(y1, g1, be1)
    a1 = jnp.maximum(y1.astype(compute_dtype) * s1 + sh1, 0.0)   # bf16 t1 storage
    y2 = conv(a1, w2, 1) + b2
    s2, sh2 = fold_bn(y2, g2, be2)
    a2 = jnp.maximum(y2.astype(compute_dtype) * s2 + sh2, 0.0)   # bf16 t2 storage
    y3 = conv(a2, w3, 0) + b3
    s3, sh3 = fold_bn(y3, g3, be3)
    return jnp.maximum(y3 * s3 + sh3, 0.0) + x


def resnet_block_reference_nchw(x_nchw, params, **kw):
    x = jnp.transpose(x_nchw, (0, 2, 3, 1))
    y = resnet_block_reference(x, params, **kw)
    return jnp.transpose(y, (0, 3, 1, 2))


def make_params(key, C, reduction_factor=4):
    Cr = C // reduction_factor
    if Cr == 0:
        Cr = C
    ks = jax.random.split(key, 12)
    f = jnp.float32
    # conv weights stored in HWIO layout
    w1 = jax.random.normal(ks[0], (1, 1, C, Cr), f) * 0.2
    b1 = jax.random.normal(ks[1], (Cr,), f) * 0.1
    g1 = 1.0 + 0.1 * jax.random.normal(ks[2], (Cr,), f)
    be1 = 0.1 * jax.random.normal(ks[3], (Cr,), f)
    w2 = jax.random.normal(ks[4], (3, 3, Cr, Cr), f) * 0.2
    b2 = jax.random.normal(ks[5], (Cr,), f) * 0.1
    g2 = 1.0 + 0.1 * jax.random.normal(ks[6], (Cr,), f)
    be2 = 0.1 * jax.random.normal(ks[7], (Cr,), f)
    w3 = jax.random.normal(ks[8], (1, 1, Cr, C), f) * 0.2
    b3 = jax.random.normal(ks[9], (C,), f) * 0.1
    g3 = 1.0 + 0.1 * jax.random.normal(ks[10], (C,), f)
    be3 = 0.1 * jax.random.normal(ks[11], (C,), f)
    return (w1, b1, g1, be1, w2, b2, g2, be2, w3, b3, g3, be3)


if __name__ == "__main__":
    key = jax.random.PRNGKey(0)
    kx, kp = jax.random.split(key)

    # ResNetBlock(4, 4): C=4, reduced channels Cr=1; PyTorch-style NCHW input.
    N, C, H, W = 2, 4, 16, 16
    x = jax.random.normal(kx, (N, C, H, W), jnp.float32)
    params = make_params(kp, C, reduction_factor=4)

    # row_tile=128 -> a 4-step row grid at this small size, exercising the pipeline.
    run = jax.jit(functools.partial(resnet_block_pallas_nchw, row_tile=128))
    out = jax.block_until_ready(run(x, params))
    ref = resnet_block_reference_nchw(x, params)

    assert out.shape == (N, C, H, W)
    max_err = float(jnp.max(jnp.abs(out - ref)))
    assert bool(jnp.allclose(out, ref, rtol=5e-3, atol=5e-3)), max_err
    print("KERNEL_OK")
</pallas_src>

<mosaic_0001>
module attributes {stable_mosaic.version = 11 : i64} {
  func.func @_conv1x1_stats_kernel(%arg0: i32, %arg1: memref<128x4xf32, #tpu.memory_space<vmem>>, %arg2: memref<4x1xbf16, #tpu.memory_space<vmem>>, %arg3: memref<1x1xf32, #tpu.memory_space<vmem>>, %arg4: memref<128x1xbf16, #tpu.memory_space<vmem>>, %arg5: memref<1x2x1xf32, #tpu.memory_space<vmem>>) attributes {dimension_semantics = [#tpu.dimension_semantics<parallel>], iteration_bounds = array<i64: 4>, scalar_prefetch = 0 : i64, scratch_operands = 0 : i64, tpu.core_type = #tpu.core_type<tc>, window_params = [{transform_indices = @transform_0, window_bounds = array<i64: 128, 4>}, {pipeline_mode = #tpu.pipeline_mode<synchronous>, transform_indices = @transform_1, window_bounds = array<i64: 4, 1>}, {pipeline_mode = #tpu.pipeline_mode<synchronous>, transform_indices = @transform_2, window_bounds = array<i64: 1, 1>}, {transform_indices = @transform_3, window_bounds = array<i64: 128, 1>}, {transform_indices = @transform_4, window_bounds = array<i64: 1, 2, 1>}]} {
    %c0 = arith.constant 0 : index
    %c0_0 = arith.constant 0 : index
    %0 = vector.load %arg1[%c0, %c0_0] : memref<128x4xf32, #tpu.memory_space<vmem>>, vector<128x4xf32>
    %1 = arith.truncf %0 : vector<128x4xf32> to vector<128x4xbf16>
    %c0_1 = arith.constant 0 : index
    %c0_2 = arith.constant 0 : index
    %2 = vector.load %arg2[%c0_1, %c0_2] : memref<4x1xbf16, #tpu.memory_space<vmem>>, vector<4x1xbf16>
    %cst = arith.constant dense<0.000000e+00> : vector<128x1xf32>
    %3 = tpu.matmul %1, %2, %cst {dimension_numbers = #tpu.dot_dimension_numbers<[1], [0], [0], [1], [0, 0, 1, 1], [], []>} : vector<128x4xbf16>, vector<4x1xbf16>, vector<128x1xf32> -> vector<128x1xf32>
    %c0_3 = arith.constant 0 : index
    %c0_4 = arith.constant 0 : index
    %4 = vector.load %arg3[%c0_3, %c0_4] : memref<1x1xf32, #tpu.memory_space<vmem>>, vector<1x1xf32>
    %5 = vector.broadcast %4 : vector<1x1xf32> to vector<128x1xf32>
    %6 = arith.addf %3, %5 : vector<128x1xf32>
    %7 = arith.truncf %6 : vector<128x1xf32> to vector<128x1xbf16>
    %c0_5 = arith.constant 0 : index
    %c0_6 = arith.constant 0 : index
    %8 = vector.load %arg4[%c0_5, %c0_6] : memref<128x1xbf16, #tpu.memory_space<vmem>>, vector<128x1xbf16>
    tpu.vector_store %arg4[%c0_5, %c0_6], %7 {strides = array<i32>} : memref<128x1xbf16, #tpu.memory_space<vmem>>, vector<128x1xbf16>,
    %cst_7 = arith.constant dense<0.000000e+00> : vector<1xf32>
    %9 = vector.multi_reduction <add>, %6, %cst_7 [0] : vector<128x1xf32> to vector<1xf32>
    %10 = vector.shape_cast %9 : vector<1xf32> to vector<1x1xf32>
    %11 = arith.mulf %6, %6 : vector<128x1xf32>
    %cst_8 = arith.constant dense<0.000000e+00> : vector<1xf32>
    %12 = vector.multi_reduction <add>, %11, %cst_8 [0] : vector<128x1xf32> to vector<1xf32>
    %13 = vector.shape_cast %12 : vector<1xf32> to vector<1x1xf32>
    %14 = tpu.concatenate %10, %13 in 0 : vector<1x1xf32>, vector<1x1xf32> -> vector<2x1xf32>
    %c0_9 = arith.constant 0 : index
    %c0_10 = arith.constant 0 : index
    %c0_11 = arith.constant 0 : index
    %15 = vector.load %arg5[%c0_9, %c0_10, %c0_11] : memref<1x2x1xf32, #tpu.memory_space<vmem>>, vector<1x2x1xf32>
    %16 = vector.shape_cast %15 : vector<1x2x1xf32> to vector<2x1xf32>
    %17 = vector.shape_cast %14 : vector<2x1xf32> to vector<1x2x1xf32>
    tpu.vector_store %arg5[%c0_9, %c0_10, %c0_11], %17 {strides = array<i32>} : memref<1x2x1xf32, #tpu.memory_space<vmem>>, vector<1x2x1xf32>,
    return
  }
  func.func @transform_0(%arg0: i32) -> (i32, i32) {
    %c0_i32 = arith.constant 0 : i32
    %c0_i32_0 = arith.constant 0 : i32
    return %arg0, %c0_i32 : i32, i32
  }
  func.func @transform_1(%arg0: i32) -> (i32, i32) {
    %c0_i32 = arith.constant 0 : i32
    %c0_i32_0 = arith.constant 0 : i32
    %c0_i32_1 = arith.constant 0 : i32
    return %c0_i32, %c0_i32_0 : i32, i32
  }
  func.func @transform_2(%arg0: i32) -> (i32, i32) {
    %c0_i32 = arith.constant 0 : i32
    %c0_i32_0 = arith.constant 0 : i32
    %c0_i32_1 = arith.constant 0 : i32
    return %c0_i32, %c0_i32_0 : i32, i32
  }
  func.func @transform_3(%arg0: i32) -> (i32, i32) {
    %c0_i32 = arith.constant 0 : i32
    %c0_i32_0 = arith.constant 0 : i32
    return %arg0, %c0_i32 : i32, i32
  }
  func.func @transform_4(%arg0: i32) -> (i32, i32, i32) {
    %c0_i32 = arith.constant 0 : i32
    %c0_i32_0 = arith.constant 0 : i32
    %c0_i32_1 = arith.constant 0 : i32
    return %arg0, %c0_i32, %c0_i32_0 : i32, i32, i32
  }
}

module attributes {stable_mosaic.version = 11 : i64} {
  func.func @_bn_relu_conv3x3_stats_kernel(%arg0: i32, %arg1: memref<1x16x16x1xbf16, #tpu.memory_space<vmem>>, %arg2: memref<1x1xf32, #tpu.memory_space<vmem>>, %arg3: memref<1x1xf32, #tpu.memory_space<vmem>>, %arg4: memref<3x3x1xbf16, #tpu.memory_space<vmem>>, %arg5: memref<1x1xf32, #tpu.memory_space<vmem>>, %arg6: memref<1x16x16x1xbf16, #tpu.memory_space<vmem>>, %arg7: memref<1x2x1xf32, #tpu.memory_space<vmem>>, %arg8: memref<18x18x1xbf16, #tpu.memory_space<vmem>>) attributes {dimension_semantics = [#tpu.dimension_semantics<parallel>], iteration_bounds = array<i64: 2>, scalar_prefetch = 0 : i64, scratch_operands = 1 : i64, tpu.core_type = #tpu.core_type<tc>, window_params = [{transform_indices = @transform_0, window_bounds = array<i64: 1, 16, 16, 1>}, {pipeline_mode = #tpu.pipeline_mode<synchronous>, transform_indices = @transform_1, window_bounds = array<i64: 1, 1>}, {pipeline_mode = #tpu.pipeline_mode<synchronous>, transform_indices = @transform_2, window_bounds = array<i64: 1, 1>}, {pipeline_mode = #tpu.pipeline_mode<synchronous>, transform_indices = @transform_3, window_bounds = array<i64: 3, 3, 1>}, {pipeline_mode = #tpu.pipeline_mode<synchronous>, transform_indices = @transform_4, window_bounds = array<i64: 1, 1>}, {transform_indices = @transform_5, window_bounds = array<i64: 1, 16, 16, 1>}, {transform_indices = @transform_6, window_bounds = array<i64: 1, 2, 1>}]} {
    %c0 = arith.constant 0 : index
    %c0_0 = arith.constant 0 : index
    %c0_1 = arith.constant 0 : index
    %c0_2 = arith.constant 0 : index
    %0 = vector.load %arg1[%c0, %c0_0, %c0_1, %c0_2] : memref<1x16x16x1xbf16, #tpu.memory_space<vmem>>, vector<1x16x16x1xbf16>
    %1 = vector.shape_cast %0 : vector<1x16x16x1xbf16> to vector<16x16x1xbf16>
    %c0_3 = arith.constant 0 : index
    %c0_4 = arith.constant 0 : index
    %2 = vector.load %arg2[%c0_3, %c0_4] : memref<1x1xf32, #tpu.memory_space<vmem>>, vector<1x1xf32>
    %3 = arith.extf %1 : vector<16x16x1xbf16> to vector<16x16x1xf32>
    %4 = vector.shape_cast %2 : vector<1x1xf32> to vector<1x1x1xf32>
    %5 = vector.broadcast %4 : vector<1x1x1xf32> to vector<16x16x1xf32>
    %6 = arith.mulf %3, %5 : vector<16x16x1xf32>
    %c0_5 = arith.constant 0 : index
    %c0_6 = arith.constant 0 : index
    %7 = vector.load %arg3[%c0_5, %c0_6] : memref<1x1xf32, #tpu.memory_space<vmem>>, vector<1x1xf32>
    %8 = vector.shape_cast %7 : vector<1x1xf32> to vector<1x1x1xf32>
    %9 = vector.broadcast %8 : vector<1x1x1xf32> to vector<16x16x1xf32>
    %10 = arith.addf %6, %9 : vector<16x16x1xf32>
    %cst = arith.constant 0.000000e+00 : f32
    %11 = vector.broadcast %cst : f32 to vector<16x16x1xf32>
    %12 = arith.maximumf %10, %11 : vector<16x16x1xf32>
    %13 = arith.truncf %12 : vector<16x16x1xf32> to vector<16x16x1xbf16>
    %cst_7 = arith.constant 0.000000e+00 : bf16
    %14 = vector.broadcast %cst_7 : bf16 to vector<1x18x1xbf16>
    %cst_8 = arith.constant 0.000000e+00 : bf16
    %15 = vector.broadcast %cst_8 : bf16 to vector<16x1x1xbf16>
    %c0_9 = arith.constant 0 : index
    %c0_10 = arith.constant 0 : index
    %c0_11 = arith.constant 0 : index
    %16 = vector.load %arg8[%c0_9, %c0_10, %c0_11] : memref<18x18x1xbf16, #tpu.memory_space<vmem>>, vector<1x18x1xbf16>
    tpu.vector_store %arg8[%c0_9, %c0_10, %c0_11], %14 {strides = array<i32>} : memref<18x18x1xbf16, #tpu.memory_space<vmem>>, vector<1x18x1xbf16>,
    %c17 = arith.constant 17 : index
    %c0_12 = arith.constant 0 : index
    %c0_13 = arith.constant 0 : index
    %17 = vector.load %arg8[%c17, %c0_12, %c0_13] : memref<18x18x1xbf16, #tpu.memory_space<vmem>>, vector<1x18x1xbf16>
    tpu.vector_store %arg8[%c17, %c0_12, %c0_13], %14 {strides = array<i32>} : memref<18x18x1xbf16, #tpu.memory_space<vmem>>, vector<1x18x1xbf16>,
    %18 = tpu.concatenate %15, %13, %15 in 1 : vector<16x1x1xbf16>, vector<16x16x1xbf16>, vector<16x1x1xbf16> -> vector<16x18x1xbf16>
    %c1 = arith.constant 1 : index
    %c0_14 = arith.constant 0 : index
    %c0_15 = arith.constant 0 : index
    %19 = vector.load %arg8[%c1, %c0_14, %c0_15] : memref<18x18x1xbf16, #tpu.memory_space<vmem>>, vector<16x18x1xbf16>
    tpu.vector_store %arg8[%c1, %c0_14, %c0_15], %18 {strides = array<i32>} : memref<18x18x1xbf16, #tpu.memory_space<vmem>>, vector<16x18x1xbf16>,
    %cst_16 = arith.constant 0.000000e+00 : f32
    %20 = vector.broadcast %cst_16 : f32 to vector<256x1xf32>
    %c0_17 = arith.constant 0 : index
    %c0_18 = arith.constant 0 : index
    %c0_19 = arith.constant 0 : index
    %21 = vector.load %arg8[%c0_17, %c0_18, %c0_19] : memref<18x18x1xbf16, #tpu.memory_space<vmem>>, vector<16x16x1xbf16>
    %c1_20 = arith.constant 1 : index
    %c0_21 = arith.constant 0 : index
    %c0_22 = arith.constant 0 : index
    %22 = vector.load %arg8[%c1_20, %c0_21, %c0_22] : memref<18x18x1xbf16, #tpu.memory_space<vmem>>, vector<16x16x1xbf16>
    %c2 = arith.constant 2 : index
    %c0_23 = arith.constant 0 : index
    %c0_24 = arith.constant 0 : index
    %23 = vector.load %arg8[%c2, %c0_23, %c0_24] : memref<18x18x1xbf16, #tpu.memory_space<vmem>>, vector<16x16x1xbf16>
    %24 = tpu.concatenate %21, %22, %23 in 2 : vector<16x16x1xbf16>, vector<16x16x1xbf16>, vector<16x16x1xbf16> -> vector<16x16x3xbf16>
    %25 = vector.shape_cast %24 : vector<16x16x3xbf16> to vector<256x3xbf16>
    %c0_25 = arith.constant 0 : index
    %c0_26 = arith.constant 0 : index
    %c0_27 = arith.constant 0 : index
    %26 = vector.load %arg4[%c0_25, %c0_26, %c0_27] : memref<3x3x1xbf16, #tpu.memory_space<vmem>>, vector<1x3x1xbf16>
    %27 = vector.shape_cast %26 : vector<1x3x1xbf16> to vector<3x1xbf16>
    %cst_28 = arith.constant dense<0.000000e+00> : vector<256x1xf32>
    %28 = tpu.matmul %25, %27, %cst_28 {dimension_numbers = #tpu.dot_dimension_numbers<[1], [0], [0], [1], [0, 0, 1, 1], [], []>} : vector<256x3xbf16>, vector<3x1xbf16>, vector<256x1xf32> -> vector<256x1xf32>
    %29 = arith.addf %20, %28 : vector<256x1xf32>
    %c0_29 = arith.constant 0 : index
    %c1_30 = arith.constant 1 : index
    %c0_31 = arith.constant 0 : index
    %30 = vector.load %arg8[%c0_29, %c1_30, %c0_31] : memref<18x18x1xbf16, #tpu.memory_space<vmem>>, vector<16x16x1xbf16>
    %c1_32 = arith.constant 1 : index
    %c1_33 = arith.constant 1 : index
    %c0_34 = arith.constant 0 : index
    %31 = vector.load %arg8[%c1_32, %c1_33, %c0_34] : memref<18x18x1xbf16, #tpu.memory_space<vmem>>, vector<16x16x1xbf16>
    %c2_35 = arith.constant 2 : index
    %c1_36 = arith.constant 1 : index
    %c0_37 = arith.constant 0 : index
    %32 = vector.load %arg8[%c2_35, %c1_36, %c0_37] : memref<18x18x1xbf16, #tpu.memory_space<vmem>>, vector<16x16x1xbf16>
    %33 = tpu.concatenate %30, %31, %32 in 2 : vector<16x16x1xbf16>, vector<16x16x1xbf16>, vector<16x16x1xbf16> -> vector<16x16x3xbf16>
    %34 = vector.shape_cast %33 : vector<16x16x3xbf16> to vector<256x3xbf16>
    %c1_38 = arith.constant 1 : index
    %c0_39 = arith.constant 0 : index
    %c0_40 = arith.constant 0 : index
    %35 = vector.load %arg4[%c1_38, %c0_39, %c0_40] : memref<3x3x1xbf16, #tpu.memory_space<vmem>>, vector<1x3x1xbf16>
    %36 = vector.shape_cast %35 : vector<1x3x1xbf16> to vector<3x1xbf16>
    %cst_41 = arith.constant dense<0.000000e+00> : vector<256x1xf32>
    %37 = tpu.matmul %34, %36, %cst_41 {dimension_numbers = #tpu.dot_dimension_numbers<[1], [0], [0], [1], [0, 0, 1, 1], [], []>} : vector<256x3xbf16>, vector<3x1xbf16>, vector<256x1xf32> -> vector<256x1xf32>
    %38 = arith.addf %29, %37 : vector<256x1xf32>
    %c0_42 = arith.constant 0 : index
    %c2_43 = arith.constant 2 : index
    %c0_44 = arith.constant 0 : index
    %39 = vector.load %arg8[%c0_42, %c2_43, %c0_44] : memref<18x18x1xbf16, #tpu.memory_space<vmem>>, vector<16x16x1xbf16>
    %c1_45 = arith.constant 1 : index
    %c2_46 = arith.constant 2 : index
    %c0_47 = arith.constant 0 : index
    %40 = vector.load %arg8[%c1_45, %c2_46, %c0_47] : memref<18x18x1xbf16, #tpu.memory_space<vmem>>, vector<16x16x1xbf16>
    %c2_48 = arith.constant 2 : index
    %c2_49 = arith.constant 2 : index
    %c0_50 = arith.constant 0 : index
    %41 = vector.load %arg8[%c2_48, %c2_49, %c0_50] : memref<18x18x1xbf16, #tpu.memory_space<vmem>>, vector<16x16x1xbf16>
    %42 = tpu.concatenate %39, %40, %41 in 2 : vector<16x16x1xbf16>, vector<16x16x1xbf16>, vector<16x16x1xbf16> -> vector<16x16x3xbf16>
    %43 = vector.shape_cast %42 : vector<16x16x3xbf16> to vector<256x3xbf16>
    %c2_51 = arith.constant 2 : index
    %c0_52 = arith.constant 0 : index
    %c0_53 = arith.constant 0 : index
    %44 = vector.load %arg4[%c2_51, %c0_52, %c0_53] : memref<3x3x1xbf16, #tpu.memory_space<vmem>>, vector<1x3x1xbf16>
    %45 = vector.shape_cast %44 : vector<1x3x1xbf16> to vector<3x1xbf16>
    %cst_54 = arith.constant dense<0.000000e+00> : vector<256x1xf32>
    %46 = tpu.matmul %43, %45, %cst_54 {dimension_numbers = #tpu.dot_dimension_numbers<[1], [0], [0], [1], [0, 0, 1, 1], [], []>} : vector<256x3xbf16>, vector<3x1xbf16>, vector<256x1xf32> -> vector<256x1xf32>
    %47 = arith.addf %38, %46 : vector<256x1xf32>
    %c0_55 = arith.constant 0 : index
    %c0_56 = arith.constant 0 : index
    %48 = vector.load %arg5[%c0_55, %c0_56] : memref<1x1xf32, #tpu.memory_space<vmem>>, vector<1x1xf32>
    %49 = vector.broadcast %48 : vector<1x1xf32> to vector<256x1xf32>
    %50 = arith.addf %47, %49 : vector<256x1xf32>
    %51 = vector.shape_cast %50 : vector<256x1xf32> to vector<16x16x1xf32>
    %52 = arith.truncf %51 : vector<16x16x1xf32> to vector<16x16x1xbf16>
    %c0_57 = arith.constant 0 : index
    %c0_58 = arith.constant 0 : index
    %c0_59 = arith.constant 0 : index
    %c0_60 = arith.constant 0 : index
    %53 = vector.load %arg6[%c0_57, %c0_58, %c0_59, %c0_60] : memref<1x16x16x1xbf16, #tpu.memory_space<vmem>>, vector<1x16x16x1xbf16>
    %54 = vector.shape_cast %53 : vector<1x16x16x1xbf16> to vector<16x16x1xbf16>
    %55 = vector.shape_cast %52 : vector<16x16x1xbf16> to vector<1x16x16x1xbf16>
    tpu.vector_store %arg6[%c0_57, %c0_58, %c0_59, %c0_60], %55 {strides = array<i32>} : memref<1x16x16x1xbf16, #tpu.memory_space<vmem>>, vector<1x16x16x1xbf16>,
    %cst_61 = arith.constant dense<0.000000e+00> : vector<1xf32>
    %56 = vector.multi_reduction <add>, %50, %cst_61 [0] : vector<256x1xf32> to vector<1xf32>
    %57 = vector.shape_cast %56 : vector<1xf32> to vector<1x1xf32>
    %58 = arith.mulf %50, %50 : vector<256x1xf32>
    %cst_62 = arith.constant dense<0.000000e+00> : vector<1xf32>
    %59 = vector.multi_reduction <add>, %58, %cst_62 [0] : vector<256x1xf32> to vector<1xf32>
    %60 = vector.shape_cast %59 : vector<1xf32> to vector<1x1xf32>
    %61 = tpu.concatenate %57, %60 in 0 : vector<1x1xf32>, vector<1x1xf32> -> vector<2x1xf32>
    %c0_63 = arith.constant 0 : index
    %c0_64 = arith.constant 0 : index
    %c0_65 = arith.constant 0 : index
    %62 = vector.load %arg7[%c0_63, %c0_64, %c0_65] : memref<1x2x1xf32, #tpu.memory_space<vmem>>, vector<1x2x1xf32>
    %63 = vector.shape_cast %62 : vector<1x2x1xf32> to vector<2x1xf32>
    %64 = vector.shape_cast %61 : vector<2x1xf32> to vector<1x2x1xf32>
    tpu.vector_store %arg7[%c0_63, %c0_64, %c0_65], %64 {strides = array<i32>} : memref<1x2x1xf32, #tpu.memory_space<vmem>>, vector<1x2x1xf32>,
    return
  }
  func.func @transform_0(%arg0: i32) -> (i32, i32, i32, i32) {
    %c0_i32 = arith.constant 0 : i32
    %c0_i32_0 = arith.constant 0 : i32
    %c0_i32_1 = arith.constant 0 : i32
    %c0_i32_2 = arith.constant 0 : i32
    return %arg0, %c0_i32, %c0_i32_0, %c0_i32_1 : i32, i32, i32, i32
  }
  func.func @transform_1(%arg0: i32) -> (i32, i32) {
    %c0_i32 = arith.constant 0 : i32
    %c0_i32_0 = arith.constant 0 : i32
    %c0_i32_1 = arith.constant 0 : i32
    return %c0_i32, %c0_i32_0 : i32, i32
  }
  func.func @transform_2(%arg0: i32) -> (i32, i32) {
    %c0_i32 = arith.constant 0 : i32
    %c0_i32_0 = arith.constant 0 : i32
    %c0_i32_1 = arith.constant 0 : i32
    return %c0_i32, %c0_i32_0 : i32, i32
  }
  func.func @transform_3(%arg0: i32) -> (i32, i32, i32) {
    %c0_i32 = arith.constant 0 : i32
    %c0_i32_0 = arith.constant 0 : i32
    %c0_i32_1 = arith.constant 0 : i32
    %c0_i32_2 = arith.constant 0 : i32
    return %c0_i32, %c0_i32_0, %c0_i32_1 : i32, i32, i32
  }
  func.func @transform_4(%arg0: i32) -> (i32, i32) {
    %c0_i32 = arith.constant 0 : i32
    %c0_i32_0 = arith.constant 0 : i32
    %c0_i32_1 = arith.constant 0 : i32
    return %c0_i32, %c0_i32_0 : i32, i32
  }
  func.func @transform_5(%arg0: i32) -> (i32, i32, i32, i32) {
    %c0_i32 = arith.constant 0 : i32
    %c0_i32_0 = arith.constant 0 : i32
    %c0_i32_1 = arith.constant 0 : i32
    %c0_i32_2 = arith.constant 0 : i32
    return %arg0, %c0_i32, %c0_i32_0, %c0_i32_1 : i32, i32, i32, i32
  }
  func.func @transform_6(%arg0: i32) -> (i32, i32, i32) {
    %c0_i32 = arith.constant 0 : i32
    %c0_i32_0 = arith.constant 0 : i32
    %c0_i32_1 = arith.constant 0 : i32
    return %arg0, %c0_i32, %c0_i32_0 : i32, i32, i32
  }
}

module attributes {stable_mosaic.version = 11 : i64} {
  func.func @_bn_relu_conv1x1_stats_kernel(%arg0: i32, %arg1: memref<128x1xbf16, #tpu.memory_space<vmem>>, %arg2: memref<1x1xf32, #tpu.memory_space<vmem>>, %arg3: memref<1x1xf32, #tpu.memory_space<vmem>>, %arg4: memref<1x4xbf16, #tpu.memory_space<vmem>>, %arg5: memref<1x4xf32, #tpu.memory_space<vmem>>, %arg6: memref<1x2x4xf32, #tpu.memory_space<vmem>>) attributes {dimension_semantics = [#tpu.dimension_semantics<parallel>], iteration_bounds = array<i64: 4>, scalar_prefetch = 0 : i64, scratch_operands = 0 : i64, tpu.core_type = #tpu.core_type<tc>, window_params = [{transform_indices = @transform_0, window_bounds = array<i64: 128, 1>}, {pipeline_mode = #tpu.pipeline_mode<synchronous>, transform_indices = @transform_1, window_bounds = array<i64: 1, 1>}, {pipeline_mode = #tpu.pipeline_mode<synchronous>, transform_indices = @transform_2, window_bounds = array<i64: 1, 1>}, {pipeline_mode = #tpu.pipeline_mode<synchronous>, transform_indices = @transform_3, window_bounds = array<i64: 1, 4>}, {pipeline_mode = #tpu.pipeline_mode<synchronous>, transform_indices = @transform_4, window_bounds = array<i64: 1, 4>}, {transform_indices = @transform_5, window_bounds = array<i64: 1, 2, 4>}]} {
    %c0 = arith.constant 0 : index
    %c0_0 = arith.constant 0 : index
    %0 = vector.load %arg1[%c0, %c0_0] : memref<128x1xbf16, #tpu.memory_space<vmem>>, vector<128x1xbf16>
    %c0_1 = arith.constant 0 : index
    %c0_2 = arith.constant 0 : index
    %1 = vector.load %arg2[%c0_1, %c0_2] : memref<1x1xf32, #tpu.memory_space<vmem>>, vector<1x1xf32>
    %2 = arith.extf %0 : vector<128x1xbf16> to vector<128x1xf32>
    %3 = vector.broadcast %1 : vector<1x1xf32> to vector<128x1xf32>
    %4 = arith.mulf %2, %3 : vector<128x1xf32>
    %c0_3 = arith.constant 0 : index
    %c0_4 = arith.constant 0 : index
    %5 = vector.load %arg3[%c0_3, %c0_4] : memref<1x1xf32, #tpu.memory_space<vmem>>, vector<1x1xf32>
    %6 = vector.broadcast %5 : vector<1x1xf32> to vector<128x1xf32>
    %7 = arith.addf %4, %6 : vector<128x1xf32>
    %cst = arith.constant 0.000000e+00 : f32
    %8 = vector.broadcast %cst : f32 to vector<128x1xf32>
    %9 = arith.maximumf %7, %8 : vector<128x1xf32>
    %10 = arith.truncf %9 : vector<128x1xf32> to vector<128x1xbf16>
    %c0_5 = arith.constant 0 : index
    %c0_6 = arith.constant 0 : index
    %11 = vector.load %arg4[%c0_5, %c0_6] : memref<1x4xbf16, #tpu.memory_space<vmem>>, vector<1x4xbf16>
    %cst_7 = arith.constant dense<0.000000e+00> : vector<128x4xf32>
    %12 = tpu.matmul %10, %11, %cst_7 {dimension_numbers = #tpu.dot_dimension_numbers<[1], [0], [0], [1], [0, 0, 1, 1], [], []>} : vector<128x1xbf16>, vector<1x4xbf16>, vector<128x4xf32> -> vector<128x4xf32>
    %c0_8 = arith.constant 0 : index
    %c0_9 = arith.constant 0 : index
    %13 = vector.load %arg5[%c0_8, %c0_9] : memref<1x4xf32, #tpu.memory_space<vmem>>, vector<1x4xf32>
    %14 = vector.broadcast %13 : vector<1x4xf32> to vector<128x4xf32>
    %15 = arith.addf %12, %14 : vector<128x4xf32>
    %cst_10 = arith.constant dense<0.000000e+00> : vector<4xf32>
    %16 = vector.multi_reduction <add>, %15, %cst_10 [0] : vector<128x4xf32> to vector<4xf32>
    %17 = vector.shape_cast %16 : vector<4xf32> to vector<1x4xf32>
    %18 = arith.mulf %15, %15 : vector<128x4xf32>
    %cst_11 = arith.constant dense<0.000000e+00> : vector<4xf32>
    %19 = vector.multi_reduction <add>, %18, %cst_11 [0] : vector<128x4xf32> to vector<4xf32>
    %20 = vector.shape_cast %19 : vector<4xf32> to vector<1x4xf32>
    %21 = tpu.concatenate %17, %20 in 0 : vector<1x4xf32>, vector<1x4xf32> -> vector<2x4xf32>
    %c0_12 = arith.constant 0 : index
    %c0_13 = arith.constant 0 : index
    %c0_14 = arith.constant 0 : index
    %22 = vector.load %arg6[%c0_12, %c0_13, %c0_14] : memref<1x2x4xf32, #tpu.memory_space<vmem>>, vector<1x2x4xf32>
    %23 = vector.shape_cast %22 : vector<1x2x4xf32> to vector<2x4xf32>
    %24 = vector.shape_cast %21 : vector<2x4xf32> to vector<1x2x4xf32>
    tpu.vector_store %arg6[%c0_12, %c0_13, %c0_14], %24 {strides = array<i32>} : memref<1x2x4xf32, #tpu.memory_space<vmem>>, vector<1x2x4xf32>,
    return
  }
  func.func @transform_0(%arg0: i32) -> (i32, i32) {
    %c0_i32 = arith.constant 0 : i32
    %c0_i32_0 = arith.constant 0 : i32
    return %arg0, %c0_i32 : i32, i32
  }
  func.func @transform_1(%arg0: i32) -> (i32, i32) {
    %c0_i32 = arith.constant 0 : i32
    %c0_i32_0 = arith.constant 0 : i32
    %c0_i32_1 = arith.constant 0 : i32
    return %c0_i32, %c0_i32_0 : i32, i32
  }
  func.func @transform_2(%arg0: i32) -> (i32, i32) {
    %c0_i32 = arith.constant 0 : i32
    %c0_i32_0 = arith.constant 0 : i32
    %c0_i32_1 = arith.constant 0 : i32
    return %c0_i32, %c0_i32_0 : i32, i32
  }
  func.func @transform_3(%arg0: i32) -> (i32, i32) {
    %c0_i32 = arith.constant 0 : i32
    %c0_i32_0 = arith.constant 0 : i32
    %c0_i32_1 = arith.constant 0 : i32
    return %c0_i32, %c0_i32_0 : i32, i32
  }
  func.func @transform_4(%arg0: i32) -> (i32, i32) {
    %c0_i32 = arith.constant 0 : i32
    %c0_i32_0 = arith.constant 0 : i32
    %c0_i32_1 = arith.constant 0 : i32
    return %c0_i32, %c0_i32_0 : i32, i32
  }
  func.func @transform_5(%arg0: i32) -> (i32, i32, i32) {
    %c0_i32 = arith.constant 0 : i32
    %c0_i32_0 = arith.constant 0 : i32
    %c0_i32_1 = arith.constant 0 : i32
    return %arg0, %c0_i32, %c0_i32_0 : i32, i32, i32
  }
}

module attributes {stable_mosaic.version = 11 : i64} {
  func.func @_fused_tail_kernel(%arg0: i32, %arg1: memref<128x1xbf16, #tpu.memory_space<vmem>>, %arg2: memref<128x4xf32, #tpu.memory_space<vmem>>, %arg3: memref<1x1xf32, #tpu.memory_space<vmem>>, %arg4: memref<1x1xf32, #tpu.memory_space<vmem>>, %arg5: memref<1x4xbf16, #tpu.memory_space<vmem>>, %arg6: memref<1x4xf32, #tpu.memory_space<vmem>>, %arg7: memref<1x4xf32, #tpu.memory_space<vmem>>, %arg8: memref<1x4xf32, #tpu.memory_space<vmem>>, %arg9: memref<128x4xf32, #tpu.memory_space<vmem>>) attributes {dimension_semantics = [#tpu.dimension_semantics<parallel>], iteration_bounds = array<i64: 4>, scalar_prefetch = 0 : i64, scratch_operands = 0 : i64, tpu.core_type = #tpu.core_type<tc>, window_params = [{transform_indices = @transform_0, window_bounds = array<i64: 128, 1>}, {transform_indices = @transform_1, window_bounds = array<i64: 128, 4>}, {pipeline_mode = #tpu.pipeline_mode<synchronous>, transform_indices = @transform_2, window_bounds = array<i64: 1, 1>}, {pipeline_mode = #tpu.pipeline_mode<synchronous>, transform_indices = @transform_3, window_bounds = array<i64: 1, 1>}, {pipeline_mode = #tpu.pipeline_mode<synchronous>, transform_indices = @transform_4, window_bounds = array<i64: 1, 4>}, {pipeline_mode = #tpu.pipeline_mode<synchronous>, transform_indices = @transform_5, window_bounds = array<i64: 1, 4>}, {pipeline_mode = #tpu.pipeline_mode<synchronous>, transform_indices = @transform_6, window_bounds = array<i64: 1, 4>}, {pipeline_mode = #tpu.pipeline_mode<synchronous>, transform_indices = @transform_7, window_bounds = array<i64: 1, 4>}, {transform_indices = @transform_8, window_bounds = array<i64: 128, 4>}]} {
    %c0 = arith.constant 0 : index
    %c0_0 = arith.constant 0 : index
    %0 = vector.load %arg1[%c0, %c0_0] : memref<128x1xbf16, #tpu.memory_space<vmem>>, vector<128x1xbf16>
    %c0_1 = arith.constant 0 : index
    %c0_2 = arith.constant 0 : index
    %1 = vector.load %arg3[%c0_1, %c0_2] : memref<1x1xf32, #tpu.memory_space<vmem>>, vector<1x1xf32>
    %2 = arith.extf %0 : vector<128x1xbf16> to vector<128x1xf32>
    %3 = vector.broadcast %1 : vector<1x1xf32> to vector<128x1xf32>
    %4 = arith.mulf %2, %3 : vector<128x1xf32>
    %c0_3 = arith.constant 0 : index
    %c0_4 = arith.constant 0 : index
    %5 = vector.load %arg4[%c0_3, %c0_4] : memref<1x1xf32, #tpu.memory_space<vmem>>, vector<1x1xf32>
    %6 = vector.broadcast %5 : vector<1x1xf32> to vector<128x1xf32>
    %7 = arith.addf %4, %6 : vector<128x1xf32>
    %cst = arith.constant 0.000000e+00 : f32
    %8 = vector.broadcast %cst : f32 to vector<128x1xf32>
    %9 = arith.maximumf %7, %8 : vector<128x1xf32>
    %10 = arith.truncf %9 : vector<128x1xf32> to vector<128x1xbf16>
    %c0_5 = arith.constant 0 : index
    %c0_6 = arith.constant 0 : index
    %11 = vector.load %arg5[%c0_5, %c0_6] : memref<1x4xbf16, #tpu.memory_space<vmem>>, vector<1x4xbf16>
    %cst_7 = arith.constant dense<0.000000e+00> : vector<128x4xf32>
    %12 = tpu.matmul %10, %11, %cst_7 {dimension_numbers = #tpu.dot_dimension_numbers<[1], [0], [0], [1], [0, 0, 1, 1], [], []>} : vector<128x1xbf16>, vector<1x4xbf16>, vector<128x4xf32> -> vector<128x4xf32>
    %c0_8 = arith.constant 0 : index
    %c0_9 = arith.constant 0 : index
    %13 = vector.load %arg6[%c0_8, %c0_9] : memref<1x4xf32, #tpu.memory_space<vmem>>, vector<1x4xf32>
    %14 = vector.broadcast %13 : vector<1x4xf32> to vector<128x4xf32>
    %15 = arith.addf %12, %14 : vector<128x4xf32>
    %c0_10 = arith.constant 0 : index
    %c0_11 = arith.constant 0 : index
    %16 = vector.load %arg7[%c0_10, %c0_11] : memref<1x4xf32, #tpu.memory_space<vmem>>, vector<1x4xf32>
    %17 = vector.broadcast %16 : vector<1x4xf32> to vector<128x4xf32>
    %18 = arith.mulf %15, %17 : vector<128x4xf32>
    %c0_12 = arith.constant 0 : index
    %c0_13 = arith.constant 0 : index
    %19 = vector.load %arg8[%c0_12, %c0_13] : memref<1x4xf32, #tpu.memory_space<vmem>>, vector<1x4xf32>
    %20 = vector.broadcast %19 : vector<1x4xf32> to vector<128x4xf32>
    %21 = arith.addf %18, %20 : vector<128x4xf32>
    %cst_14 = arith.constant 0.000000e+00 : f32
    %22 = vector.broadcast %cst_14 : f32 to vector<128x4xf32>
    %23 = arith.maximumf %21, %22 : vector<128x4xf32>
    %c0_15 = arith.constant 0 : index
    %c0_16 = arith.constant 0 : index
    %24 = vector.load %arg2[%c0_15, %c0_16] : memref<128x4xf32, #tpu.memory_space<vmem>>, vector<128x4xf32>
    %25 = arith.addf %23, %24 : vector<128x4xf32>
    %c0_17 = arith.constant 0 : index
    %c0_18 = arith.constant 0 : index
    %26 = vector.load %arg9[%c0_17, %c0_18] : memref<128x4xf32, #tpu.memory_space<vmem>>, vector<128x4xf32>
    tpu.vector_store %arg9[%c0_17, %c0_18], %25 {strides = array<i32>} : memref<128x4xf32, #tpu.memory_space<vmem>>, vector<128x4xf32>,
    return
  }
  func.func @transform_0(%arg0: i32) -> (i32, i32) {
    %c0_i32 = arith.constant 0 : i32
    %c0_i32_0 = arith.constant 0 : i32
    return %arg0, %c0_i32 : i32, i32
  }
  func.func @transform_1(%arg0: i32) -> (i32, i32) {
    %c0_i32 = arith.constant 0 : i32
    %c0_i32_0 = arith.constant 0 : i32
    return %arg0, %c0_i32 : i32, i32
  }
  func.func @transform_2(%arg0: i32) -> (i32, i32) {
    %c0_i32 = arith.constant 0 : i32
    %c0_i32_0 = arith.constant 0 : i32
    %c0_i32_1 = arith.constant 0 : i32
    return %c0_i32, %c0_i32_0 : i32, i32
  }
  func.func @transform_3(%arg0: i32) -> (i32, i32) {
    %c0_i32 = arith.constant 0 : i32
    %c0_i32_0 = arith.constant 0 : i32
    %c0_i32_1 = arith.constant 0 : i32
    return %c0_i32, %c0_i32_0 : i32, i32
  }
  func.func @transform_4(%arg0: i32) -> (i32, i32) {
    %c0_i32 = arith.constant 0 : i32
    %c0_i32_0 = arith.constant 0 : i32
    %c0_i32_1 = arith.constant 0 : i32
    return %c0_i32, %c0_i32_0 : i32, i32
  }
  func.func @transform_5(%arg0: i32) -> (i32, i32) {
    %c0_i32 = arith.constant 0 : i32
    %c0_i32_0 = arith.constant 0 : i32
    %c0_i32_1 = arith.constant 0 : i32
    return %c0_i32, %c0_i32_0 : i32, i32
  }
  func.func @transform_6(%arg0: i32) -> (i32, i32) {
    %c0_i32 = arith.constant 0 : i32
    %c0_i32_0 = arith.constant 0 : i32
    %c0_i32_1 = arith.constant 0 : i32
    return %c0_i32, %c0_i32_0 : i32, i32
  }
  func.func @transform_7(%arg0: i32) -> (i32, i32) {
    %c0_i32 = arith.constant 0 : i32
    %c0_i32_0 = arith.constant 0 : i32
    %c0_i32_1 = arith.constant 0 : i32
    return %c0_i32, %c0_i32_0 : i32, i32
  }
  func.func @transform_8(%arg0: i32) -> (i32, i32) {
    %c0_i32 = arith.constant 0 : i32
    %c0_i32_0 = arith.constant 0 : i32
    return %arg0, %c0_i32 : i32, i32
  }
}

</mosaic_0001>

<llo_original>
// kernel: resnet_block_pallas_nchw.7
$region0: #{resnet_block_pallas_nchw.7}
  #allocation0 [shape = 'u32[]', space=smem, size = 0x4, offset = 0x4, fixed_abs, tag = 'smem constant byte address 0x4 - core index']
  #allocation1 [shape = 'u32[144,128]{1,0:T(1,128)}', space=vmem, size = 0x12000, scoped, tag = 'internal scratch']
  #allocation2 [shape = 'f32[1,1]{1,0:T(1,128)S(1)}', space=vmem, size = 0x200, scoped, tag = 'scoped memory for resnet_block_pallas_nchw.7']
  #allocation3 [shape = 'f32[1,1]{1,0:T(1,128)S(1)}', space=vmem, size = 0x200, scoped, tag = 'scoped memory for resnet_block_pallas_nchw.7']
  %s0 = inlined_call_operand.vmem [shape: bf16[512,1], index: 0, kind: input, shape index: {}]
  %s1 = inlined_call_operand.vmem [shape: f32[512,4], index: 1, kind: input, shape index: {}]
  %s2 = inlined_call_operand.<no memory space> [shape: f32[1,1], index: 2, kind: input, shape index: {}]
  %s3 = inlined_call_operand.<no memory space> [shape: f32[1,1], index: 3, kind: input, shape index: {}]
  %s4 = inlined_call_operand.vmem [shape: bf16[1,4], index: 4, kind: input, shape index: {}]
  %s5 = inlined_call_operand.vmem [shape: f32[1,4], index: 5, kind: input, shape index: {}]
  %s6 = inlined_call_operand.vmem [shape: f32[1,4], index: 6, kind: input, shape index: {}]
  %s7 = inlined_call_operand.vmem [shape: f32[1,4], index: 7, kind: input, shape index: {}]
  %s8 = inlined_call_operand.vmem [shape: f32[512,4], index: 8, kind: output, shape index: {}]
  %s9 = sld [smem:[#allocation0]]
  $region65: #{resnet_block_pallas_nchw.7} parent=0
    _
  %s11 = ssub.s32 1, %s9
  %s12 = scalar_select 0, %s11, %s9
  %v13 = vstv %s2
  %14 = vst [vmem:[#allocation2] sm:$0x1] %v13
  %v15 = vstv %s3
  %16 = vst [vmem:[#allocation3] sm:$0x1] %v15
  loop: start=0, step=1, limit=6
  $region2: #{resnet_block_pallas_nchw.7} parent=0 // loop_pre_header
    _
  $region3: #{resnet_block_pallas_nchw.7} parent=0 // loop_header
    %s18 = sphi 0, %s22
    %p19 = scmp.ge.s32.totalorder %s18, 6
    %s28 = sphi 0, %s30
    %s31 = sphi 0, %s28
    %s32 = sphi 0, %s31
    %s48 = sphi 0, %s32
    %s54 = sphi 0, %s56
    %s57 = sphi 0, %s54
    %s58 = sphi 0, %s57
    %s74 = sphi 0, %s58
    %s78 = sphi 0, %s78
    %s80 = sphi 0, %s78
    %s81 = sphi 0, %s80
    %s95 = sphi 0, %s81
    %s99 = sphi 0, %s99
    %s101 = sphi 0, %s99
    %s102 = sphi 0, %s101
    %s116 = sphi 0, %s102
    %s120 = sphi 0, %s120
    %s122 = sphi 0, %s120
    %s123 = sphi 0, %s122
    %s137 = sphi 0, %s123
    %s141 = sphi 0, %s141
    %s143 = sphi 0, %s141
    %s144 = sphi 0, %s143
    %s158 = sphi 0, %s144
    %s162 = sphi 0, %s162
    %s164 = sphi 0, %s162
    %s165 = sphi 0, %s164
    %s179 = sphi 0, %s165
    %s183 = sphi 0, %s183
    %s185 = sphi 0, %s183
    %s186 = sphi 0, %s185
    %s200 = sphi 0, %s186
    %s206 = sphi 0, %s208
    %s209 = sphi 0, %s206
    %s210 = sphi 0, %s209
    %s226 = sphi 0, %s210
  $region4: #{resnet_block_pallas_nchw.7} parent=0 // loop_header_branch
    %21 = sbr.rel (%p19) target = $region8
  $region5: #{resnet_block_pallas_nchw.7} parent=0 // loop_body
    %s23 = ssub.s32 %s18, 1
    %s24 = ssub.s32 %s18, 2
    %s25 = sadd.s32 %s18, 1
    %s26 = ssub.s32 %s18, %s25
    %p27 = scmp.eq.s32.totalorder %s26, 0
    %s29 = sadd.s32 %s28, 1
    %s30 = scalar_select %p27, %s28, %s29
    %p33 = pneg %p27
    %p34 = scmp.eq.s32.totalorder %s18, 3
    %p35 = por %p33, %p34
    %p36 = scmp.ne.s32.totalorder %s28, %s31
    %p37 = scmp.eq.s32.totalorder %s18, 0
    %p38 = por %p36, %p37
    %p39 = scmp.ne.s32.totalorder %s28, %s31
    %p40 = scmp.eq.s32.totalorder %s23, 3
    %p41 = por %p39, %p40
    %p42 = scmp.ne.s32.totalorder %s31, %s32
    %p43 = scmp.eq.s32.totalorder %s23, 0
    %p44 = por %p42, %p43
    %p45 = scmp.ne.s32.totalorder %s31, %s32
    %p46 = scmp.eq.s32.totalorder %s24, 3
    %p47 = por %p45, %p46
    %p49 = scmp.ne.s32.totalorder %s32, %s48
    %p50 = scmp.eq.s32.totalorder %s24, 0
    %p51 = por %p49, %p50
    %s52 = ssub.s32 %s18, %s25
    %p53 = scmp.eq.s32.totalorder %s52, 0
    %s55 = sadd.s32 %s54, 1
    %s56 = scalar_select %p53, %s54, %s55
    %p59 = pneg %p53
    %p60 = scmp.eq.s32.totalorder %s18, 3
    %p61 = por %p59, %p60
    %p62 = scmp.ne.s32.totalorder %s54, %s57
    %p63 = scmp.eq.s32.totalorder %s18, 0
    %p64 = por %p62, %p63
    %p65 = scmp.ne.s32.totalorder %s54, %s57
    %p66 = scmp.eq.s32.totalorder %s23, 3
    %p67 = por %p65, %p66
    %p68 = scmp.ne.s32.totalorder %s57, %s58
    %p69 = scmp.eq.s32.totalorder %s23, 0
    %p70 = por %p68, %p69
    %p71 = scmp.ne.s32.totalorder %s57, %s58
    %p72 = scmp.eq.s32.totalorder %s24, 3
    %p73 = por %p71, %p72
    %p75 = scmp.ne.s32.totalorder %s58, %s74
    %p76 = scmp.eq.s32.totalorder %s24, 0
    %p77 = por %p75, %p76
    %s79 = sadd.s32 %s78, 1
    %p82 = scmp.eq.s32.totalorder %s18, 3
    %p83 = scmp.ne.s32.totalorder %s78, %s80
    %p84 = scmp.eq.s32.totalorder %s18, 0
    %p85 = por %p83, %p84
    %p86 = scmp.ne.s32.totalorder %s78, %s80
    %p87 = scmp.eq.s32.totalorder %s23, 3
    %p88 = por %p86, %p87
    %p89 = scmp.ne.s32.totalorder %s80, %s81
    %p90 = scmp.eq.s32.totalorder %s23, 0
    %p91 = por %p89, %p90
    %p92 = scmp.ne.s32.totalorder %s80, %s81
    %p93 = scmp.eq.s32.totalorder %s24, 3
    %p94 = por %p92, %p93
    %p96 = scmp.ne.s32.totalorder %s81, %s95
    %p97 = scmp.eq.s32.totalorder %s24, 0
    %p98 = por %p96, %p97
    %s100 = sadd.s32 %s99, 1
    %p103 = scmp.eq.s32.totalorder %s18, 3
    %p104 = scmp.ne.s32.totalorder %s99, %s101
    %p105 = scmp.eq.s32.totalorder %s18, 0
    %p106 = por %p104, %p105
    %p107 = scmp.ne.s32.totalorder %s99, %s101
    %p108 = scmp.eq.s32.totalorder %s23, 3
    %p109 = por %p107, %p108
    %p110 = scmp.ne.s32.totalorder %s101, %s102
    %p111 = scmp.eq.s32.totalorder %s23, 0
    %p112 = por %p110, %p111
    %p113 = scmp.ne.s32.totalorder %s101, %s102
    %p114 = scmp.eq.s32.totalorder %s24, 3
    %p115 = por %p113, %p114
    %p117 = scmp.ne.s32.totalorder %s102, %s116
    %p118 = scmp.eq.s32.totalorder %s24, 0
    %p119 = por %p117, %p118
    %s121 = sadd.s32 %s120, 1
    %p124 = scmp.eq.s32.totalorder %s18, 3
    %p125 = scmp.ne.s32.totalorder %s120, %s122
    %p126 = scmp.eq.s32.totalorder %s18, 0
    %p127 = por %p125, %p126
    %p128 = scmp.ne.s32.totalorder %s120, %s122
    %p129 = scmp.eq.s32.totalorder %s23, 3
    %p130 = por %p128, %p129
    %p131 = scmp.ne.s32.totalorder %s122, %s123
    %p132 = scmp.eq.s32.totalorder %s23, 0
    %p133 = por %p131, %p132
    %p134 = scmp.ne.s32.totalorder %s122, %s123
    %p135 = scmp.eq.s32.totalorder %s24, 3
    %p136 = por %p134, %p135
    %p138 = scmp.ne.s32.totalorder %s123, %s137
    %p139 = scmp.eq.s32.totalorder %s24, 0
    %p140 = por %p138, %p139
    %s142 = sadd.s32 %s141, 1
    %p145 = scmp.eq.s32.totalorder %s18, 3
    %p146 = scmp.ne.s32.totalorder %s141, %s143
    %p147 = scmp.eq.s32.totalorder %s18, 0
    %p148 = por %p146, %p147
    %p149 = scmp.ne.s32.totalorder %s141, %s143
    %p150 = scmp.eq.s32.totalorder %s23, 3
    %p151 = por %p149, %p150
    %p152 = scmp.ne.s32.totalorder %s143, %s144
    %p153 = scmp.eq.s32.totalorder %s23, 0
    %p154 = por %p152, %p153
    %p155 = scmp.ne.s32.totalorder %s143, %s144
    %p156 = scmp.eq.s32.totalorder %s24, 3
    %p157 = por %p155, %p156
    %p159 = scmp.ne.s32.totalorder %s144, %s158
    %p160 = scmp.eq.s32.totalorder %s24, 0
    %p161 = por %p159, %p160
    %s163 = sadd.s32 %s162, 1
    %p166 = scmp.eq.s32.totalorder %s18, 3
    %p167 = scmp.ne.s32.totalorder %s162, %s164
    %p168 = scmp.eq.s32.totalorder %s18, 0
    %p169 = por %p167, %p168
    %p170 = scmp.ne.s32.totalorder %s162, %s164
    %p171 = scmp.eq.s32.totalorder %s23, 3
    %p172 = por %p170, %p171
    %p173 = scmp.ne.s32.totalorder %s164, %s165
    %p174 = scmp.eq.s32.totalorder %s23, 0
    %p175 = por %p173, %p174
    %p176 = scmp.ne.s32.totalorder %s164, %s165
    %p177 = scmp.eq.s32.totalorder %s24, 3
    %p178 = por %p176, %p177
    %p180 = scmp.ne.s32.totalorder %s165, %s179
    %p181 = scmp.eq.s32.totalorder %s24, 0
    %p182 = por %p180, %p181
    %s184 = sadd.s32 %s183, 1
    %p187 = scmp.eq.s32.totalorder %s18, 3
    %p188 = scmp.ne.s32.totalorder %s183, %s185
    %p189 = scmp.eq.s32.totalorder %s18, 0
    %p190 = por %p188, %p189
    %p191 = scmp.ne.s32.totalorder %s183, %s185
    %p192 = scmp.eq.s32.totalorder %s23, 3
    %p193 = por %p191, %p192
    %p194 = scmp.ne.s32.totalorder %s185, %s186
    %p195 = scmp.eq.s32.totalorder %s23, 0
    %p196 = por %p194, %p195
    %p197 = scmp.ne.s32.totalorder %s185, %s186
    %p198 = scmp.eq.s32.totalorder %s24, 3
    %p199 = por %p197, %p198
    %p201 = scmp.ne.s32.totalorder %s186, %s200
    %p202 = scmp.eq.s32.totalorder %s24, 0
    %p203 = por %p201, %p202
    %s204 = ssub.s32 %s18, %s25
    %p205 = scmp.eq.s32.totalorder %s204, 0
    %s207 = sadd.s32 %s206, 1
    %s208 = scalar_select %p205, %s206, %s207
    %p211 = pneg %p205
    %p212 = scmp.eq.s32.totalorder %s18, 3
    %p213 = por %p211, %p212
    %p214 = scmp.ne.s32.totalorder %s206, %s209
    %p215 = scmp.eq.s32.totalorder %s18, 0
    %p216 = por %p214, %p215
    %p217 = scmp.ne.s32.totalorder %s206, %s209
    %p218 = scmp.eq.s32.totalorder %s23, 3
    %p219 = por %p217, %p218
    %p220 = scmp.ne.s32.totalorder %s209, %s210
    %p221 = scmp.eq.s32.totalorder %s23, 0
    %p222 = por %p220, %p221
    %p223 = scmp.ne.s32.totalorder %s209, %s210
    %p224 = scmp.eq.s32.totalorder %s24, 3
    %p225 = por %p223, %p224
    %p227 = scmp.ne.s32.totalorder %s210, %s226
    %p228 = scmp.eq.s32.totalorder %s24, 0
    %p229 = por %p227, %p228
    %p230 = scmp.le.s32.totalorder 1, %s18
    %p231 = scmp.lt.s32.totalorder %s18, 5
    %p232 = pnand %p230, %p231
    %p233 = pneg %p232
    // Predicated region
    $region9: #{resnet_block_pallas_nchw.7} parent=5 // pred_check
      _
    $region10: #{resnet_block_pallas_nchw.7} parent=5 // pred_check_branch
      %235 = sbr.rel (%p232) target = $region12
    $region11: #{resnet_block_pallas_nchw.7} parent=5 // pred_region
      %s236 = ssub.s32 %s18, 1
      // Predicated region
      $region13: #{resnet_block_pallas_nchw.7} parent=11 // pred_check
        %p237 = pneg %p91
      $region14: #{resnet_block_pallas_nchw.7} parent=11 // pred_check_branch
        %239 = sbr.rel (%p237) target = $region16
      $region15: #{resnet_block_pallas_nchw.7} parent=11 // pred_region
        _
      $region16: #{resnet_block_pallas_nchw.7} parent=11 // pred_fallthru
        _
      // Predicated region
      $region17: #{resnet_block_pallas_nchw.7} parent=11 // pred_check
        %p240 = pneg %p112
      $region18: #{resnet_block_pallas_nchw.7} parent=11 // pred_check_branch
        %242 = sbr.rel (%p240) target = $region20
      $region19: #{resnet_block_pallas_nchw.7} parent=11 // pred_region
        _
      $region20: #{resnet_block_pallas_nchw.7} parent=11 // pred_fallthru
        _
      // Predicated region
      $region21: #{resnet_block_pallas_nchw.7} parent=11 // pred_check
        %p243 = pneg %p133
      $region22: #{resnet_block_pallas_nchw.7} parent=11 // pred_check_branch
        %245 = sbr.rel (%p243) target = $region24
      $region23: #{resnet_block_pallas_nchw.7} parent=11 // pred_region
        _
      $region24: #{resnet_block_pallas_nchw.7} parent=11 // pred_fallthru
        _
      // Predicated region
      $region25: #{resnet_block_pallas_nchw.7} parent=11 // pred_check
        %p246 = pneg %p154
      $region26: #{resnet_block_pallas_nchw.7} parent=11 // pred_check_branch
        %248 = sbr.rel (%p246) target = $region28
      $region27: #{resnet_block_pallas_nchw.7} parent=11 // pred_region
        _
      $region28: #{resnet_block_pallas_nchw.7} parent=11 // pred_fallthru
        _
      // Predicated region
      $region29: #{resnet_block_pallas_nchw.7} parent=11 // pred_check
        %p249 = pneg %p175
      $region30: #{resnet_block_pallas_nchw.7} parent=11 // pred_check_branch
        %251 = sbr.rel (%p249) target = $region32
      $region31: #{resnet_block_pallas_nchw.7} parent=11 // pred_region
        _
      $region32: #{resnet_block_pallas_nchw.7} parent=11 // pred_fallthru
        _
      // Predicated region
      $region33: #{resnet_block_pallas_nchw.7} parent=11 // pred_check
        %p252 = pneg %p196
      $region34: #{resnet_block_pallas_nchw.7} parent=11 // pred_check_branch
        %254 = sbr.rel (%p252) target = $region36
      $region35: #{resnet_block_pallas_nchw.7} parent=11 // pred_region
        _
      $region36: #{resnet_block_pallas_nchw.7} parent=11 // pred_fallthru
        _
    $region12: #{resnet_block_pallas_nchw.7} parent=5 // pred_fallthru
      _
    %p255 = scmp.lt.s32.totalorder %s18, 4
    // Predicated region
    $region37: #{resnet_block_pallas_nchw.7} parent=5 // pred_check
      %p256 = pneg %p255
    $region38: #{resnet_block_pallas_nchw.7} parent=5 // pred_check_branch
      %258 = sbr.rel (%p256) target = $region40
    $region39: #{resnet_block_pallas_nchw.7} parent=5 // pred_region
      // Predicated region
      $region41: #{resnet_block_pallas_nchw.7} parent=39 // pred_check
        %p259 = pneg %p38
      $region42: #{resnet_block_pallas_nchw.7} parent=39 // pred_check_branch
        %261 = sbr.rel (%p259) target = $region44
      $region43: #{resnet_block_pallas_nchw.7} parent=39 // pred_region
        %s262 = smul.u32 16, %s18
        %p263 = scmp.lt.s32.totalorder %s262, 63
        %s264 = scalar_select %p263, %s262, 63
        %s265 = smul.addr %s264, 4
        %s266 = scalar_lea.vmem %s0, %s265
        %s267 = smul.u32 16, %s18
      $region44: #{resnet_block_pallas_nchw.7} parent=39 // pred_fallthru
        _
      // Predicated region
      $region45: #{resnet_block_pallas_nchw.7} parent=39 // pred_check
        %p268 = pneg %p64
      $region46: #{resnet_block_pallas_nchw.7} parent=39 // pred_check_branch
        %270 = sbr.rel (%p268) target = $region48
      $region47: #{resnet_block_pallas_nchw.7} parent=39 // pred_region
        %s271 = smul.u32 16, %s18
        %p272 = scmp.lt.s32.totalorder %s271, 63
        %s273 = scalar_select %p272, %s271, 63
        %s274 = smul.addr %s273, 8
        %s275 = scalar_lea.vmem %s1, %s274
        %s276 = smul.u32 16, %s18
      $region48: #{resnet_block_pallas_nchw.7} parent=39 // pred_fallthru
        _
    $region40: #{resnet_block_pallas_nchw.7} parent=5 // pred_fallthru
      _
    %p277 = scmp.le.s32.totalorder 1, %s18
    %p278 = scmp.lt.s32.totalorder %s18, 5
    %p279 = pnand %p277, %p278
    %p280 = pneg %p279
    // Predicated region
    $region49: #{resnet_block_pallas_nchw.7} parent=5 // pred_check
      _
    $region50: #{resnet_block_pallas_nchw.7} parent=5 // pred_check_branch
      %282 = sbr.rel (%p279) target = $region52
    $region51: #{resnet_block_pallas_nchw.7} parent=5 // pred_region
      %s283 = ssub.s32 %s18, 1
      %s284 = smul.u32 16, %s23
      %p285 = scmp.lt.s32.totalorder %s284, 63
      %s286 = scalar_select %p285, %s284, 63
      %s287 = smul.addr %s286, 4
      %s288 = scalar_lea.vmem %s0, %s287
      %p289 = pneg %p44
      %p290 = pneg %p41
      %s291 = smul.u32 16, %s23
      %p292 = scmp.lt.s32.totalorder %s291, 63
      %s293 = scalar_select %p292, %s291, 63
      %s294 = smul.addr %s293, 8
      %s295 = scalar_lea.vmem %s1, %s294
      %p296 = pneg %p70
      %p297 = pneg %p67
      %p298 = pneg %p91
      %p299 = pneg %p88
      %p300 = pneg %p112
      %p301 = pneg %p109
      %p302 = pneg %p133
      %p303 = pneg %p130
      %p304 = pneg %p154
      %p305 = pneg %p151
      %p306 = pneg %p175
      %p307 = pneg %p172
      %p308 = pneg %p196
      %p309 = pneg %p193
      %p310 = pneg %p222
      %p311 = pneg %p219
      %s312 = smul.u32 16, %s23
      %p313 = scmp.lt.s32.totalorder %s312, 63
      %s314 = scalar_select %p313, %s312, 63
      %s315 = smul.addr %s314, 8
      %s316 = scalar_lea.vmem %s8, %s315
      %s317 = smul.u32 16, %s23
      %p318 = scmp.lt.s32.totalorder %s317, 63
      %s319 = scalar_select %p318, %s317, 63
      %s320 = smul.addr %s319, 4
      %s321 = scalar_lea.vmem %s0, %s320
      %s322 = smul.u32 16, %s23
      %s323 = smul.u32 16, %s23
      %p324 = scmp.lt.s32.totalorder %s323, 63
      %s325 = scalar_select %p324, %s323, 63
      %s326 = smul.addr %s325, 8
      %s327 = scalar_lea.vmem %s1, %s326
      %s328 = smul.u32 16, %s23
      %s329 = smul.u32 16, %s23
      %p330 = scmp.lt.s32.totalorder %s329, 63
      %s331 = scalar_select %p330, %s329, 63
      %s332 = smul.addr %s331, 8
      %s333 = scalar_lea.vmem %s8, %s332
      %s334 = smul.u32 16, %s23
      %v336 = vld [vmem:[%s321] sm:$0xf]
      %v337 = vld [vmem:[%s321 + $0x4] sm:$0xf]
      %v338 = vld [vmem:[%s321 + $0x8] sm:$0xf]
      %v339 = vld [vmem:[%s321 + $0xc] sm:$0xf]
      %v340 = vld [vmem:[%s321 + $0x10] sm:$0xf]
      %v341 = vld [vmem:[%s321 + $0x14] sm:$0xf]
      %v342 = vld [vmem:[%s321 + $0x18] sm:$0xf]
      %v343 = vld [vmem:[%s321 + $0x1c] sm:$0xf]
      %v344 = vld [vmem:[%s321 + $0x20] sm:$0xf]
      %v345 = vld [vmem:[%s321 + $0x24] sm:$0xf]
      %v346 = vld [vmem:[%s321 + $0x28] sm:$0xf]
      %v347 = vld [vmem:[%s321 + $0x2c] sm:$0xf]
      %v348 = vld [vmem:[%s321 + $0x30] sm:$0xf]
      %v349 = vld [vmem:[%s321 + $0x34] sm:$0xf]
      %v350 = vld [vmem:[%s321 + $0x38] sm:$0xf]
      %v351 = vld [vmem:[%s321 + $0x3c] sm:$0xf]
      %v352 = vld [vmem:[#allocation2] sm:$0x1]
      %v353 = vunpack.c.l.bf16 %v336
      %v354 = vunpack.c.l.bf16 %v337
      %v355 = vunpack.c.l.bf16 %v338
      %v356 = vunpack.c.l.bf16 %v339
      %v357 = vunpack.c.l.bf16 %v340
      %v358 = vunpack.c.l.bf16 %v341
      %v359 = vunpack.c.l.bf16 %v342
      %v360 = vunpack.c.l.bf16 %v343
      %v361 = vunpack.c.l.bf16 %v344
      %v362 = vunpack.c.l.bf16 %v345
      %v363 = vunpack.c.l.bf16 %v346
      %v364 = vunpack.c.l.bf16 %v347
      %v365 = vunpack.c.l.bf16 %v348
      %v366 = vunpack.c.l.bf16 %v349
      %v367 = vunpack.c.l.bf16 %v350
      %v368 = vunpack.c.l.bf16 %v351
      %v370 = vlaneseq
      %v371 = vshrl.u32 %v370, 7
      %v372 = vsub.s32 0, %v371
      %v373 = vrot.slane %v352, %v372
      %v375 = vmul.f32 %v353, %v373
      %v376 = vmul.f32 %v354, %v373
      %v377 = vmul.f32 %v355, %v373
      %v378 = vmul.f32 %v356, %v373
      %v379 = vmul.f32 %v357, %v373
      %v380 = vmul.f32 %v358, %v373
      %v381 = vmul.f32 %v359, %v373
      %v382 = vmul.f32 %v360, %v373
      %v383 = vmul.f32 %v361, %v373
      %v384 = vmul.f32 %v362, %v373
      %v385 = vmul.f32 %v363, %v373
      %v386 = vmul.f32 %v364, %v373
      %v387 = vmul.f32 %v365, %v373
      %v388 = vmul.f32 %v366, %v373
      %v389 = vmul.f32 %v367, %v373
      %v390 = vmul.f32 %v368, %v373
      %v391 = vld [vmem:[#allocation3] sm:$0x1]
      %v393 = vlaneseq
      %v394 = vshrl.u32 %v393, 7
      %v395 = vsub.s32 0, %v394
      %v396 = vrot.slane %v391, %v395
      %v398 = vadd.f32 %v375, %v396
      %v399 = vadd.f32 %v376, %v396
      %v400 = vadd.f32 %v377, %v396
      %v401 = vadd.f32 %v378, %v396
      %v402 = vadd.f32 %v379, %v396
      %v403 = vadd.f32 %v380, %v396
      %v404 = vadd.f32 %v381, %v396
      %v405 = vadd.f32 %v382, %v396
      %v406 = vadd.f32 %v383, %v396
      %v407 = vadd.f32 %v384, %v396
      %v408 = vadd.f32 %v385, %v396
      %v409 = vadd.f32 %v386, %v396
      %v410 = vadd.f32 %v387, %v396
      %v411 = vadd.f32 %v388, %v396
      %v412 = vadd.f32 %v389, %v396
      %v413 = vadd.f32 %v390, %v396
      %v414 = vmax.f32 %v398, 0.0
      %v415 = vmax.f32 %v399, 0.0
      %v416 = vmax.f32 %v400, 0.0
      %v417 = vmax.f32 %v401, 0.0
      %v418 = vmax.f32 %v402, 0.0
      %v419 = vmax.f32 %v403, 0.0
      %v420 = vmax.f32 %v404, 0.0
      %v421 = vmax.f32 %v405, 0.0
      %v422 = vmax.f32 %v406, 0.0
      %v423 = vmax.f32 %v407, 0.0
      %v424 = vmax.f32 %v408, 0.0
      %v425 = vmax.f32 %v409, 0.0
      %v426 = vmax.f32 %v410, 0.0
      %v427 = vmax.f32 %v411, 0.0
      %v428 = vmax.f32 %v412, 0.0
      %v429 = vmax.f32 %v413, 0.0
      %v430 = vpack.c.bf16 %v415, %v414
      %v431 = vpack.c.bf16 %v417, %v416
      %v432 = vpack.c.bf16 %v419, %v418
      %v433 = vpack.c.bf16 %v421, %v420
      %v434 = vpack.c.bf16 %v423, %v422
      %v435 = vpack.c.bf16 %v425, %v424
      %v436 = vpack.c.bf16 %v427, %v426
      %v437 = vpack.c.bf16 %v429, %v428
      %v438 = vld [vmem:[%s4] sm:$0x1]
      %v439 = vld [vmem:[%s5] sm:$0x1]
      %v441 = vlaneseq
      %v442 = vshrl.u32 %v441, 7
      %v443 = vsub.s32 0, %v442
      %v444 = vrot.slane %v439, %v443
      %vm446 = vcmask 7168
      %v448 = vsel %vm446, %v430, 0
      %v451 = vsel %vm446, %v431, 0
      %v454 = vsel %vm446, %v432, 0
      %v457 = vsel %vm446, %v433, 0
      %v460 = vsel %vm446, %v434, 0
      %v463 = vsel %vm446, %v435, 0
      %v466 = vsel %vm446, %v436, 0
      %v469 = vsel %vm446, %v437, 0
      %vm471 = vcmask 1040384
      %v472 = vsel 0, 4294967295, 65535
      %v473 = vsel %vm471, %v472, 0
      %v475 = vand.u32 %v438, %v473
      %477 = vmatprep.subr.bf16.mxu0 0
      %478 = vmatpush1.bf16.msra.mxu0 0
      %479 = vmatprep.subr.bf16.mxu0 0
      %480 = vmatpush1.bf16.msra.mxu0 0
      %481 = vmatprep.subr.bf16.mxu0 0
      %482 = vmatpush1.bf16.msra.mxu0 0
      %483 = vmatprep.subr.bf16.mxu0 0
      %484 = vmatpush1.bf16.msra.mxu0 0
      %485 = vmatprep.subr.bf16.mxu0 0
      %486 = vmatpush1.bf16.msra.mxu0 0
      %487 = vmatprep.subr.bf16.mxu0 0
      %488 = vmatpush1.bf16.msra.mxu0 0
      %489 = vmatprep.subr.bf16.mxu0 0
      %490 = vmatpush1.bf16.msra.mxu0 0
      %491 = vmatprep.subr.bf16.mxu0 0
      %492 = vmatpush1.bf16.msra.mxu0 %v475
      %493 = vmatprep.subr.bf16.mxu0 0
      %494 = vmatpush2.bf16.msra.mxu0 0
      %495 = vmatprep.subr.bf16.mxu0 0
      %496 = vmatpush2.bf16.msra.mxu0 0
      %497 = vmatprep.subr.bf16.mxu0 0
      %498 = vmatpush2.bf16.msra.mxu0 0
      %499 = vmatprep.subr.bf16.mxu0 0
      %500 = vmatpush2.bf16.msra.mxu0 0
      %501 = vmatprep.subr.bf16.mxu0 0
      %502 = vmatpush2.bf16.msra.mxu0 0
      %503 = vmatprep.subr.bf16.mxu0 0
      %504 = vmatpush2.bf16.msra.mxu0 0
      %505 = vmatprep.subr.bf16.mxu0 0
      %506 = vmatpush2.bf16.msra.mxu0 0
      %507 = vmatprep.subr.bf16.mxu0 0
      %508 = vmatpush2.bf16.msra.mxu0 0
      %509 = vmatprep.mubr.bf16.mxu0 0
      %510 = vmatmul.mubr.bf16.gmra.mxu0 %v448
      %v511 = vpop.f32.mrf.mxu0
      %v512 = vadd.f32 %v444, %v511
      %v513 = vpop.f32.mrf.mxu0
      %v514 = vpop.f32.mrf.mxu0
      %v515 = vadd.f32 %v444, %v514
      %v516 = vpop.f32.mrf.mxu0
      %517 = vmatprep.mubr.bf16.mxu0 0
      %518 = vmatmul.mubr.bf16.gmra.mxu0 %v451
      %v519 = vpop.f32.mrf.mxu0
      %v520 = vadd.f32 %v444, %v519
      %v521 = vpop.f32.mrf.mxu0
      %v522 = vpop.f32.mrf.mxu0
      %v523 = vadd.f32 %v444, %v522
      %v524 = vpop.f32.mrf.mxu0
      %525 = vmatprep.mubr.bf16.mxu0 0
      %526 = vmatmul.mubr.bf16.gmra.mxu0 %v454
      %v527 = vpop.f32.mrf.mxu0
      %v528 = vadd.f32 %v444, %v527
      %v529 = vpop.f32.mrf.mxu0
      %v530 = vpop.f32.mrf.mxu0
      %v531 = vadd.f32 %v444, %v530
      %v532 = vpop.f32.mrf.mxu0
      %533 = vmatprep.mubr.bf16.mxu0 0
      %534 = vmatmul.mubr.bf16.gmra.mxu0 %v457
      %v535 = vpop.f32.mrf.mxu0
      %v536 = vadd.f32 %v444, %v535
      %v537 = vpop.f32.mrf.mxu0
      %v538 = vpop.f32.mrf.mxu0
      %v539 = vadd.f32 %v444, %v538
      %v540 = vpop.f32.mrf.mxu0
      %541 = vmatprep.mubr.bf16.mxu0 0
      %542 = vmatmul.mubr.bf16.gmra.mxu0 %v460
      %v543 = vpop.f32.mrf.mxu0
      %v544 = vadd.f32 %v444, %v543
      %v545 = vpop.f32.mrf.mxu0
      %v546 = vpop.f32.mrf.mxu0
      %v547 = vadd.f32 %v444, %v546
      %v548 = vpop.f32.mrf.mxu0
      %549 = vmatprep.mubr.bf16.mxu0 0
      %550 = vmatmul.mubr.bf16.gmra.mxu0 %v463
      %v551 = vpop.f32.mrf.mxu0
      %v552 = vadd.f32 %v444, %v551
      %v553 = vpop.f32.mrf.mxu0
      %v554 = vpop.f32.mrf.mxu0
      %v555 = vadd.f32 %v444, %v554
      %v556 = vpop.f32.mrf.mxu0
      %557 = vmatprep.mubr.bf16.mxu0 0
      %558 = vmatmul.mubr.bf16.gmra.mxu0 %v466
      %v559 = vpop.f32.mrf.mxu0
      %v560 = vadd.f32 %v444, %v559
      %v561 = vpop.f32.mrf.mxu0
      %v562 = vpop.f32.mrf.mxu0
      %v563 = vadd.f32 %v444, %v562
      %v564 = vpop.f32.mrf.mxu0
      %565 = vmatprep.mubr.bf16.mxu0 0
      %566 = vmatmul.mubr.bf16.gmra.mxu0 %v469
      %v567 = vpop.f32.mrf.mxu0
      %v568 = vadd.f32 %v444, %v567
      %v569 = vpop.f32.mrf.mxu0
      %v570 = vpop.f32.mrf.mxu0
      %v571 = vadd.f32 %v444, %v570
      %v572 = vpop.f32.mrf.mxu0
      %573 = vdwg.mxu0
      %v574 = vld [vmem:[%s6] sm:$0x1]
      %v576 = vlaneseq
      %v577 = vshrl.u32 %v576, 7
      %v578 = vsub.s32 0, %v577
      %v579 = vrot.slane %v574, %v578
      %v581 = vmul.f32 %v512, %v579
      %v582 = vmul.f32 %v515, %v579
      %v583 = vmul.f32 %v520, %v579
      %v584 = vmul.f32 %v523, %v579
      %v585 = vmul.f32 %v528, %v579
      %v586 = vmul.f32 %v531, %v579
      %v587 = vmul.f32 %v536, %v579
      %v588 = vmul.f32 %v539, %v579
      %v589 = vmul.f32 %v544, %v579
      %v590 = vmul.f32 %v547, %v579
      %v591 = vmul.f32 %v552, %v579
      %v592 = vmul.f32 %v555, %v579
      %v593 = vmul.f32 %v560, %v579
      %v594 = vmul.f32 %v563, %v579
      %v595 = vmul.f32 %v568, %v579
      %v596 = vmul.f32 %v571, %v579
      %v597 = vld [vmem:[%s7] sm:$0x1]
      %v599 = vlaneseq
      %v600 = vshrl.u32 %v599, 7
      %v601 = vsub.s32 0, %v600
      %v602 = vrot.slane %v597, %v601
      %v604 = vadd.f32 %v581, %v602
      %v605 = vadd.f32 %v582, %v602
      %v606 = vadd.f32 %v583, %v602
      %v607 = vadd.f32 %v584, %v602
      %v608 = vadd.f32 %v585, %v602
      %v609 = vadd.f32 %v586, %v602
      %v610 = vadd.f32 %v587, %v602
      %v611 = vadd.f32 %v588, %v602
      %v612 = vadd.f32 %v589, %v602
      %v613 = vadd.f32 %v590, %v602
      %v614 = vadd.f32 %v591, %v602
      %v615 = vadd.f32 %v592, %v602
      %v616 = vadd.f32 %v593, %v602
      %v617 = vadd.f32 %v594, %v602
      %v618 = vadd.f32 %v595, %v602
      %v619 = vadd.f32 %v596, %v602
      %v620 = vmax.f32 %v604, 0.0
      %v621 = vmax.f32 %v605, 0.0
      %v622 = vmax.f32 %v606, 0.0
      %v623 = vmax.f32 %v607, 0.0
      %v624 = vmax.f32 %v608, 0.0
      %v625 = vmax.f32 %v609, 0.0
      %v626 = vmax.f32 %v610, 0.0
      %v627 = vmax.f32 %v611, 0.0
      %v628 = vmax.f32 %v612, 0.0
      %v629 = vmax.f32 %v613, 0.0
      %v630 = vmax.f32 %v614, 0.0
      %v631 = vmax.f32 %v615, 0.0
      %v632 = vmax.f32 %v616, 0.0
      %v633 = vmax.f32 %v617, 0.0
      %v634 = vmax.f32 %v618, 0.0
      %v635 = vmax.f32 %v619, 0.0
      %v636 = vld [vmem:[%s327] sm:$0xff]
      %v637 = vld [vmem:[%s327 + $0x8] sm:$0xff]
      %v638 = vld [vmem:[%s327 + $0x10] sm:$0xff]
      %v639 = vld [vmem:[%s327 + $0x18] sm:$0xff]
      %v640 = vld [vmem:[%s327 + $0x20] sm:$0xff]
      %v641 = vld [vmem:[%s327 + $0x28] sm:$0xff]
      %v642 = vld [vmem:[%s327 + $0x30] sm:$0xff]
      %v643 = vld [vmem:[%s327 + $0x38] sm:$0xff]
      %v644 = vld [vmem:[%s327 + $0x40] sm:$0xff]
      %v645 = vld [vmem:[%s327 + $0x48] sm:$0xff]
      %v646 = vld [vmem:[%s327 + $0x50] sm:$0xff]
      %v647 = vld [vmem:[%s327 + $0x58] sm:$0xff]
      %v648 = vld [vmem:[%s327 + $0x60] sm:$0xff]
      %v649 = vld [vmem:[%s327 + $0x68] sm:$0xff]
      %v650 = vld [vmem:[%s327 + $0x70] sm:$0xff]
      %v651 = vld [vmem:[%s327 + $0x78] sm:$0xff]
      %v652 = vadd.f32 %v620, %v636
      %v653 = vadd.f32 %v621, %v637
      %v654 = vadd.f32 %v622, %v638
      %v655 = vadd.f32 %v623, %v639
      %v656 = vadd.f32 %v624, %v640
      %v657 = vadd.f32 %v625, %v641
      %v658 = vadd.f32 %v626, %v642
      %v659 = vadd.f32 %v627, %v643
      %v660 = vadd.f32 %v628, %v644
      %v661 = vadd.f32 %v629, %v645
      %v662 = vadd.f32 %v630, %v646
      %v663 = vadd.f32 %v631, %v647
      %v664 = vadd.f32 %v632, %v648
      %v665 = vadd.f32 %v633, %v649
      %v666 = vadd.f32 %v634, %v650
      %v667 = vadd.f32 %v635, %v651
      %vm668 = vcmask 31744
      %669 = vst.msk [vmem:[%s333] sm:$0xff] %vm668, %v652
      %670 = vst.msk [vmem:[%s333 + $0x8] sm:$0xff] %vm668, %v653
      %671 = vst.msk [vmem:[%s333 + $0x10] sm:$0xff] %vm668, %v654
      %672 = vst.msk [vmem:[%s333 + $0x18] sm:$0xff] %vm668, %v655
      %673 = vst.msk [vmem:[%s333 + $0x20] sm:$0xff] %vm668, %v656
      %674 = vst.msk [vmem:[%s333 + $0x28] sm:$0xff] %vm668, %v657
      %675 = vst.msk [vmem:[%s333 + $0x30] sm:$0xff] %vm668, %v658
      %676 = vst.msk [vmem:[%s333 + $0x38] sm:$0xff] %vm668, %v659
      %677 = vst.msk [vmem:[%s333 + $0x40] sm:$0xff] %vm668, %v660
      %678 = vst.msk [vmem:[%s333 + $0x48] sm:$0xff] %vm668, %v661
      %679 = vst.msk [vmem:[%s333 + $0x50] sm:$0xff] %vm668, %v662
      %680 = vst.msk [vmem:[%s333 + $0x58] sm:$0xff] %vm668, %v663
      %681 = vst.msk [vmem:[%s333 + $0x60] sm:$0xff] %vm668, %v664
      %682 = vst.msk [vmem:[%s333 + $0x68] sm:$0xff] %vm668, %v665
      %683 = vst.msk [vmem:[%s333 + $0x70] sm:$0xff] %vm668, %v666
      %684 = vst.msk [vmem:[%s333 + $0x78] sm:$0xff] %vm668, %v667
      %s685 = smul.u32 16, %s23
      %p686 = scmp.lt.s32.totalorder %s685, 63
      %s687 = scalar_select %p686, %s685, 63
      %s688 = smul.addr %s687, 8
      %s689 = scalar_lea.vmem %s8, %s688
      // Predicated region
      $region53: #{resnet_block_pallas_nchw.7} parent=51 // pred_check
        %p690 = pneg %p219
      $region54: #{resnet_block_pallas_nchw.7} parent=51 // pred_check_branch
        %692 = sbr.rel (%p690) target = $region56
      $region55: #{resnet_block_pallas_nchw.7} parent=51 // pred_region
        %s693 = smul.u32 16, %s23
      $region56: #{resnet_block_pallas_nchw.7} parent=51 // pred_fallthru
        _
    $region52: #{resnet_block_pallas_nchw.7} parent=5 // pred_fallthru
      _
    %p694 = scmp.le.s32.totalorder 2, %s18
    // Predicated region
    $region57: #{resnet_block_pallas_nchw.7} parent=5 // pred_check
      %p695 = pneg %p694
    $region58: #{resnet_block_pallas_nchw.7} parent=5 // pred_check_branch
      %697 = sbr.rel (%p695) target = $region60
    $region59: #{resnet_block_pallas_nchw.7} parent=5 // pred_region
      %s698 = ssub.s32 %s18, 2
      // Predicated region
      $region61: #{resnet_block_pallas_nchw.7} parent=59 // pred_check
        %p699 = pneg %p225
      $region62: #{resnet_block_pallas_nchw.7} parent=59 // pred_check_branch
        %701 = sbr.rel (%p699) target = $region64
      $region63: #{resnet_block_pallas_nchw.7} parent=59 // pred_region
        %s702 = smul.u32 16, %s24
        %p703 = scmp.lt.s32.totalorder %s702, 63
        %s704 = scalar_select %p703, %s702, 63
        %s705 = smul.addr %s704, 8
        %s706 = scalar_lea.vmem %s8, %s705
      $region64: #{resnet_block_pallas_nchw.7} parent=59 // pred_fallthru
        _
    $region60: #{resnet_block_pallas_nchw.7} parent=5 // pred_fallthru
      _
  $region6: #{resnet_block_pallas_nchw.7} parent=0 // loop_footer
    %s22 = sadd.s32 1, %s18
  $region7: #{resnet_block_pallas_nchw.7} parent=0 // loop_footer_branch
    %17 = sbr.rel target = $region3
  $region8: #{resnet_block_pallas_nchw.7} parent=0 // loop_exit
    _

// kernel: resnet_block_pallas_nchw.4
$region0: #{resnet_block_pallas_nchw.4}
  #allocation0 [shape = 'u32[]', space=smem, size = 0x4, offset = 0x4, fixed_abs, tag = 'smem constant byte address 0x4 - core index']
  #allocation1 [shape = 'u32[144,128]{1,0:T(1,128)}', space=vmem, size = 0x12000, scoped, tag = 'internal scratch']
  #allocation2 [shape = 'f32[1,1]{1,0:T(1,128)S(1)}', space=vmem, size = 0x200, scoped, tag = 'scoped memory for resnet_block_pallas_nchw.4']
  %s0 = inlined_call_operand.vmem [shape: f32[512,4], index: 0, kind: input, shape index: {}]
  %s1 = inlined_call_operand.vmem [shape: bf16[4,1], index: 1, kind: input, shape index: {}]
  %s2 = inlined_call_operand.<no memory space> [shape: f32[1,1], index: 2, kind: input, shape index: {}]
  %s3 = inlined_call_operand.vmem [shape: bf16[512,1], index: 3, kind: output, shape index: {0}]
  %s4 = inlined_call_operand.vmem [shape: f32[4,2,1], index: 4, kind: output, shape index: {1}]
  %5 = xla_tuple %s3, %s4
  %s6 = sld [smem:[#allocation0]]
  $region53: #{resnet_block_pallas_nchw.4} parent=0
    _
  %s8 = ssub.s32 1, %s6
  %s9 = scalar_select 0, %s8, %s6
  %v10 = vstv %s2
  %11 = vst [vmem:[#allocation2] sm:$0x1] %v10
  loop: start=0, step=1, limit=6
  $region2: #{resnet_block_pallas_nchw.4} parent=0 // loop_pre_header
    _
  $region3: #{resnet_block_pallas_nchw.4} parent=0 // loop_header
    %s13 = sphi 0, %s17
    %p14 = scmp.ge.s32.totalorder %s13, 6
    %s23 = sphi 0, %s25
    %s26 = sphi 0, %s23
    %s27 = sphi 0, %s26
    %s43 = sphi 0, %s27
    %s47 = sphi 0, %s47
    %s49 = sphi 0, %s47
    %s50 = sphi 0, %s49
    %s64 = sphi 0, %s50
    %s68 = sphi 0, %s68
    %s70 = sphi 0, %s68
    %s71 = sphi 0, %s70
    %s85 = sphi 0, %s71
    %s91 = sphi 0, %s93
    %s94 = sphi 0, %s91
    %s95 = sphi 0, %s94
    %s111 = sphi 0, %s95
    %s117 = sphi 0, %s119
    %s120 = sphi 0, %s117
    %s121 = sphi 0, %s120
    %s137 = sphi 0, %s121
  $region4: #{resnet_block_pallas_nchw.4} parent=0 // loop_header_branch
    %16 = sbr.rel (%p14) target = $region8
  $region5: #{resnet_block_pallas_nchw.4} parent=0 // loop_body
    %s18 = ssub.s32 %s13, 1
    %s19 = ssub.s32 %s13, 2
    %s20 = sadd.s32 %s13, 1
    %s21 = ssub.s32 %s13, %s20
    %p22 = scmp.eq.s32.totalorder %s21, 0
    %s24 = sadd.s32 %s23, 1
    %s25 = scalar_select %p22, %s23, %s24
    %p28 = pneg %p22
    %p29 = scmp.eq.s32.totalorder %s13, 3
    %p30 = por %p28, %p29
    %p31 = scmp.ne.s32.totalorder %s23, %s26
    %p32 = scmp.eq.s32.totalorder %s13, 0
    %p33 = por %p31, %p32
    %p34 = scmp.ne.s32.totalorder %s23, %s26
    %p35 = scmp.eq.s32.totalorder %s18, 3
    %p36 = por %p34, %p35
    %p37 = scmp.ne.s32.totalorder %s26, %s27
    %p38 = scmp.eq.s32.totalorder %s18, 0
    %p39 = por %p37, %p38
    %p40 = scmp.ne.s32.totalorder %s26, %s27
    %p41 = scmp.eq.s32.totalorder %s19, 3
    %p42 = por %p40, %p41
    %p44 = scmp.ne.s32.totalorder %s27, %s43
    %p45 = scmp.eq.s32.totalorder %s19, 0
    %p46 = por %p44, %p45
    %s48 = sadd.s32 %s47, 1
    %p51 = scmp.eq.s32.totalorder %s13, 3
    %p52 = scmp.ne.s32.totalorder %s47, %s49
    %p53 = scmp.eq.s32.totalorder %s13, 0
    %p54 = por %p52, %p53
    %p55 = scmp.ne.s32.totalorder %s47, %s49
    %p56 = scmp.eq.s32.totalorder %s18, 3
    %p57 = por %p55, %p56
    %p58 = scmp.ne.s32.totalorder %s49, %s50
    %p59 = scmp.eq.s32.totalorder %s18, 0
    %p60 = por %p58, %p59
    %p61 = scmp.ne.s32.totalorder %s49, %s50
    %p62 = scmp.eq.s32.totalorder %s19, 3
    %p63 = por %p61, %p62
    %p65 = scmp.ne.s32.totalorder %s50, %s64
    %p66 = scmp.eq.s32.totalorder %s19, 0
    %p67 = por %p65, %p66
    %s69 = sadd.s32 %s68, 1
    %p72 = scmp.eq.s32.totalorder %s13, 3
    %p73 = scmp.ne.s32.totalorder %s68, %s70
    %p74 = scmp.eq.s32.totalorder %s13, 0
    %p75 = por %p73, %p74
    %p76 = scmp.ne.s32.totalorder %s68, %s70
    %p77 = scmp.eq.s32.totalorder %s18, 3
    %p78 = por %p76, %p77
    %p79 = scmp.ne.s32.totalorder %s70, %s71
    %p80 = scmp.eq.s32.totalorder %s18, 0
    %p81 = por %p79, %p80
    %p82 = scmp.ne.s32.totalorder %s70, %s71
    %p83 = scmp.eq.s32.totalorder %s19, 3
    %p84 = por %p82, %p83
    %p86 = scmp.ne.s32.totalorder %s71, %s85
    %p87 = scmp.eq.s32.totalorder %s19, 0
    %p88 = por %p86, %p87
    %s89 = ssub.s32 %s13, %s20
    %p90 = scmp.eq.s32.totalorder %s89, 0
    %s92 = sadd.s32 %s91, 1
    %s93 = scalar_select %p90, %s91, %s92
    %p96 = pneg %p90
    %p97 = scmp.eq.s32.totalorder %s13, 3
    %p98 = por %p96, %p97
    %p99 = scmp.ne.s32.totalorder %s91, %s94
    %p100 = scmp.eq.s32.totalorder %s13, 0
    %p101 = por %p99, %p100
    %p102 = scmp.ne.s32.totalorder %s91, %s94
    %p103 = scmp.eq.s32.totalorder %s18, 3
    %p104 = por %p102, %p103
    %p105 = scmp.ne.s32.totalorder %s94, %s95
    %p106 = scmp.eq.s32.totalorder %s18, 0
    %p107 = por %p105, %p106
    %p108 = scmp.ne.s32.totalorder %s94, %s95
    %p109 = scmp.eq.s32.totalorder %s19, 3
    %p110 = por %p108, %p109
    %p112 = scmp.ne.s32.totalorder %s95, %s111
    %p113 = scmp.eq.s32.totalorder %s19, 0
    %p114 = por %p112, %p113
    %s115 = ssub.s32 %s13, %s20
    %p116 = scmp.eq.s32.totalorder %s115, 0
    %s118 = sadd.s32 %s117, 1
    %s119 = scalar_select %p116, %s117, %s118
    %p122 = pneg %p116
    %p123 = scmp.eq.s32.totalorder %s13, 3
    %p124 = por %p122, %p123
    %p125 = scmp.ne.s32.totalorder %s117, %s120
    %p126 = scmp.eq.s32.totalorder %s13, 0
    %p127 = por %p125, %p126
    %p128 = scmp.ne.s32.totalorder %s117, %s120
    %p129 = scmp.eq.s32.totalorder %s18, 3
    %p130 = por %p128, %p129
    %p131 = scmp.ne.s32.totalorder %s120, %s121
    %p132 = scmp.eq.s32.totalorder %s18, 0
    %p133 = por %p131, %p132
    %p134 = scmp.ne.s32.totalorder %s120, %s121
    %p135 = scmp.eq.s32.totalorder %s19, 3
    %p136 = por %p134, %p135
    %p138 = scmp.ne.s32.totalorder %s121, %s137
    %p139 = scmp.eq.s32.totalorder %s19, 0
    %p140 = por %p138, %p139
    %p141 = scmp.le.s32.totalorder 1, %s13
    %p142 = scmp.lt.s32.totalorder %s13, 5
    %p143 = pnand %p141, %p142
    %p144 = pneg %p143
    // Predicated region
    $region9: #{resnet_block_pallas_nchw.4} parent=5 // pred_check
      _
    $region10: #{resnet_block_pallas_nchw.4} parent=5 // pred_check_branch
      %146 = sbr.rel (%p143) target = $region12
    $region11: #{resnet_block_pallas_nchw.4} parent=5 // pred_region
      %s147 = ssub.s32 %s13, 1
      // Predicated region
      $region13: #{resnet_block_pallas_nchw.4} parent=11 // pred_check
        %p148 = pneg %p60
      $region14: #{resnet_block_pallas_nchw.4} parent=11 // pred_check_branch
        %150 = sbr.rel (%p148) target = $region16
      $region15: #{resnet_block_pallas_nchw.4} parent=11 // pred_region
        _
      $region16: #{resnet_block_pallas_nchw.4} parent=11 // pred_fallthru
        _
      // Predicated region
      $region17: #{resnet_block_pallas_nchw.4} parent=11 // pred_check
        %p151 = pneg %p81
      $region18: #{resnet_block_pallas_nchw.4} parent=11 // pred_check_branch
        %153 = sbr.rel (%p151) target = $region20
      $region19: #{resnet_block_pallas_nchw.4} parent=11 // pred_region
        _
      $region20: #{resnet_block_pallas_nchw.4} parent=11 // pred_fallthru
        _
    $region12: #{resnet_block_pallas_nchw.4} parent=5 // pred_fallthru
      _
    %p154 = scmp.lt.s32.totalorder %s13, 4
    // Predicated region
    $region21: #{resnet_block_pallas_nchw.4} parent=5 // pred_check
      %p155 = pneg %p154
    $region22: #{resnet_block_pallas_nchw.4} parent=5 // pred_check_branch
      %157 = sbr.rel (%p155) target = $region24
    $region23: #{resnet_block_pallas_nchw.4} parent=5 // pred_region
      // Predicated region
      $region25: #{resnet_block_pallas_nchw.4} parent=23 // pred_check
        %p158 = pneg %p33
      $region26: #{resnet_block_pallas_nchw.4} parent=23 // pred_check_branch
        %160 = sbr.rel (%p158) target = $region28
      $region27: #{resnet_block_pallas_nchw.4} parent=23 // pred_region
        %s161 = smul.u32 16, %s13
        %p162 = scmp.lt.s32.totalorder %s161, 63
        %s163 = scalar_select %p162, %s161, 63
        %s164 = smul.addr %s163, 8
        %s165 = scalar_lea.vmem %s0, %s164
        %s166 = smul.u32 16, %s13
      $region28: #{resnet_block_pallas_nchw.4} parent=23 // pred_fallthru
        _
    $region24: #{resnet_block_pallas_nchw.4} parent=5 // pred_fallthru
      _
    %p167 = scmp.le.s32.totalorder 1, %s13
    %p168 = scmp.lt.s32.totalorder %s13, 5
    %p169 = pnand %p167, %p168
    %p170 = pneg %p169
    // Predicated region
    $region29: #{resnet_block_pallas_nchw.4} parent=5 // pred_check
      _
    $region30: #{resnet_block_pallas_nchw.4} parent=5 // pred_check_branch
      %172 = sbr.rel (%p169) target = $region32
    $region31: #{resnet_block_pallas_nchw.4} parent=5 // pred_region
      %s173 = ssub.s32 %s13, 1
      %s174 = smul.u32 16, %s18
      %p175 = scmp.lt.s32.totalorder %s174, 63
      %s176 = scalar_select %p175, %s174, 63
      %s177 = smul.addr %s176, 8
      %s178 = scalar_lea.vmem %s0, %s177
      %p179 = pneg %p39
      %p180 = pneg %p36
      %p181 = pneg %p60
      %p182 = pneg %p57
      %p183 = pneg %p81
      %p184 = pneg %p78
      %p185 = pneg %p107
      %p186 = pneg %p104
      %s187 = smul.u32 16, %s18
      %p188 = scmp.lt.s32.totalorder %s187, 63
      %s189 = scalar_select %p188, %s187, 63
      %s190 = smul.addr %s189, 4
      %s191 = scalar_lea.vmem %s3, %s190
      %p192 = pneg %p133
      %p193 = pneg %p130
      %p194 = scmp.lt.s32.totalorder %s18, 3
      %s195 = scalar_select %p194, %s18, 3
      %s196 = smul.addr %s195, 2
      %s197 = scalar_lea.vmem %s4, %s196
      %s198 = smul.u32 16, %s18
      %p199 = scmp.lt.s32.totalorder %s198, 63
      %s200 = scalar_select %p199, %s198, 63
      %s201 = smul.addr %s200, 8
      %s202 = scalar_lea.vmem %s0, %s201
      %s203 = smul.u32 16, %s18
      %s204 = smul.u32 16, %s18
      %p205 = scmp.lt.s32.totalorder %s204, 63
      %s206 = scalar_select %p205, %s204, 63
      %s207 = smul.addr %s206, 4
      %s208 = scalar_lea.vmem %s3, %s207
      %s209 = smul.u32 16, %s18
      %p210 = scmp.lt.s32.totalorder %s18, 3
      %s211 = scalar_select %p210, %s18, 3
      %s212 = smul.addr %s211, 2
      %s213 = scalar_lea.vmem %s4, %s212
      %v215 = vld [vmem:[%s202] sm:$0xff]
      %v216 = vld [vmem:[%s202 + $0x8] sm:$0xff]
      %v217 = vld [vmem:[%s202 + $0x10] sm:$0xff]
      %v218 = vld [vmem:[%s202 + $0x18] sm:$0xff]
      %v219 = vld [vmem:[%s202 + $0x20] sm:$0xff]
      %v220 = vld [vmem:[%s202 + $0x28] sm:$0xff]
      %v221 = vld [vmem:[%s202 + $0x30] sm:$0xff]
      %v222 = vld [vmem:[%s202 + $0x38] sm:$0xff]
      %v223 = vld [vmem:[%s202 + $0x40] sm:$0xff]
      %v224 = vld [vmem:[%s202 + $0x48] sm:$0xff]
      %v225 = vld [vmem:[%s202 + $0x50] sm:$0xff]
      %v226 = vld [vmem:[%s202 + $0x58] sm:$0xff]
      %v227 = vld [vmem:[%s202 + $0x60] sm:$0xff]
      %v228 = vld [vmem:[%s202 + $0x68] sm:$0xff]
      %v229 = vld [vmem:[%s202 + $0x70] sm:$0xff]
      %v230 = vld [vmem:[%s202 + $0x78] sm:$0xff]
      %v231 = vpack.c.bf16 %v216, %v215
      %v232 = vpack.c.bf16 %v218, %v217
      %v233 = vpack.c.bf16 %v220, %v219
      %v234 = vpack.c.bf16 %v222, %v221
      %v235 = vpack.c.bf16 %v224, %v223
      %v236 = vpack.c.bf16 %v226, %v225
      %v237 = vpack.c.bf16 %v228, %v227
      %v238 = vpack.c.bf16 %v230, %v229
      %v239 = vld [vmem:[%s1] sm:$0x3]
      %v240 = vld [vmem:[#allocation2] sm:$0x1]
      %v242 = vlaneseq
      %v243 = vshrl.u32 %v242, 7
      %v244 = vsub.s32 0, %v243
      %v245 = vrot.slane %v240, %v244
      %vm247 = vcmask 31744
      %v249 = vsel %vm247, %v231, 0
      %v252 = vsel %vm247, %v232, 0
      %v255 = vsel %vm247, %v233, 0
      %v258 = vsel %vm247, %v234, 0
      %v261 = vsel %vm247, %v235, 0
      %v264 = vsel %vm247, %v236, 0
      %v267 = vsel %vm247, %v237, 0
      %v270 = vsel %vm247, %v238, 0
      %vm272 = vcmask 1041408
      %v274 = vsel %vm272, %v239, 0
      %276 = vmatprep.subr.bf16.mxu0 0
      %277 = vmatpush1.bf16.msra.mxu0 0
      %278 = vmatprep.subr.bf16.mxu0 0
      %279 = vmatpush1.bf16.msra.mxu0 0
      %280 = vmatprep.subr.bf16.mxu0 0
      %281 = vmatpush1.bf16.msra.mxu0 0
      %282 = vmatprep.subr.bf16.mxu0 0
      %283 = vmatpush1.bf16.msra.mxu0 0
      %284 = vmatprep.subr.bf16.mxu0 0
      %285 = vmatpush1.bf16.msra.mxu0 0
      %286 = vmatprep.subr.bf16.mxu0 0
      %287 = vmatpush1.bf16.msra.mxu0 0
      %288 = vmatprep.subr.bf16.mxu0 0
      %289 = vmatpush1.bf16.msra.mxu0 0
      %290 = vmatprep.subr.bf16.mxu0 0
      %291 = vmatpush1.bf16.msra.mxu0 %v274
      %292 = vmatprep.subr.bf16.mxu0 0
      %293 = vmatpush2.bf16.msra.mxu0 0
      %294 = vmatprep.subr.bf16.mxu0 0
      %295 = vmatpush2.bf16.msra.mxu0 0
      %296 = vmatprep.subr.bf16.mxu0 0
      %297 = vmatpush2.bf16.msra.mxu0 0
      %298 = vmatprep.subr.bf16.mxu0 0
      %299 = vmatpush2.bf16.msra.mxu0 0
      %300 = vmatprep.subr.bf16.mxu0 0
      %301 = vmatpush2.bf16.msra.mxu0 0
      %302 = vmatprep.subr.bf16.mxu0 0
      %303 = vmatpush2.bf16.msra.mxu0 0
      %304 = vmatprep.subr.bf16.mxu0 0
      %305 = vmatpush2.bf16.msra.mxu0 0
      %306 = vmatprep.subr.bf16.mxu0 0
      %307 = vmatpush2.bf16.msra.mxu0 0
      %308 = vmatprep.mubr.bf16.mxu0 0
      %309 = vmatmul.mubr.bf16.gmra.mxu0 %v249
      %v310 = vpop.f32.mrf.mxu0
      %v311 = vadd.f32 %v245, %v310
      %v312 = vpop.f32.mrf.mxu0
      %v313 = vpop.f32.mrf.mxu0
      %v314 = vadd.f32 %v245, %v313
      %v315 = vpop.f32.mrf.mxu0
      %316 = vmatprep.mubr.bf16.mxu0 0
      %317 = vmatmul.mubr.bf16.gmra.mxu0 %v252
      %v318 = vpop.f32.mrf.mxu0
      %v319 = vadd.f32 %v245, %v318
      %v320 = vpop.f32.mrf.mxu0
      %v321 = vpop.f32.mrf.mxu0
      %v322 = vadd.f32 %v245, %v321
      %v323 = vpop.f32.mrf.mxu0
      %324 = vmatprep.mubr.bf16.mxu0 0
      %325 = vmatmul.mubr.bf16.gmra.mxu0 %v255
      %v326 = vpop.f32.mrf.mxu0
      %v327 = vadd.f32 %v245, %v326
      %v328 = vpop.f32.mrf.mxu0
      %v329 = vpop.f32.mrf.mxu0
      %v330 = vadd.f32 %v245, %v329
      %v331 = vpop.f32.mrf.mxu0
      %332 = vmatprep.mubr.bf16.mxu0 0
      %333 = vmatmul.mubr.bf16.gmra.mxu0 %v258
      %v334 = vpop.f32.mrf.mxu0
      %v335 = vadd.f32 %v245, %v334
      %v336 = vpop.f32.mrf.mxu0
      %v337 = vpop.f32.mrf.mxu0
      %v338 = vadd.f32 %v245, %v337
      %v339 = vpop.f32.mrf.mxu0
      %340 = vmatprep.mubr.bf16.mxu0 0
      %341 = vmatmul.mubr.bf16.gmra.mxu0 %v261
      %v342 = vpop.f32.mrf.mxu0
      %v343 = vadd.f32 %v245, %v342
      %v344 = vpop.f32.mrf.mxu0
      %v345 = vpop.f32.mrf.mxu0
      %v346 = vadd.f32 %v245, %v345
      %v347 = vpop.f32.mrf.mxu0
      %348 = vmatprep.mubr.bf16.mxu0 0
      %349 = vmatmul.mubr.bf16.gmra.mxu0 %v264
      %v350 = vpop.f32.mrf.mxu0
      %v351 = vadd.f32 %v245, %v350
      %v352 = vpop.f32.mrf.mxu0
      %v353 = vpop.f32.mrf.mxu0
      %v354 = vadd.f32 %v245, %v353
      %v355 = vpop.f32.mrf.mxu0
      %356 = vmatprep.mubr.bf16.mxu0 0
      %357 = vmatmul.mubr.bf16.gmra.mxu0 %v267
      %v358 = vpop.f32.mrf.mxu0
      %v359 = vadd.f32 %v245, %v358
      %v360 = vpop.f32.mrf.mxu0
      %v361 = vpop.f32.mrf.mxu0
      %v362 = vadd.f32 %v245, %v361
      %v363 = vpop.f32.mrf.mxu0
      %364 = vmatprep.mubr.bf16.mxu0 0
      %365 = vmatmul.mubr.bf16.gmra.mxu0 %v270
      %v366 = vpop.f32.mrf.mxu0
      %v367 = vadd.f32 %v245, %v366
      %v368 = vpop.f32.mrf.mxu0
      %v369 = vpop.f32.mrf.mxu0
      %v370 = vadd.f32 %v245, %v369
      %v371 = vpop.f32.mrf.mxu0
      %372 = vdwg.mxu0
      %v373 = vpack.c.bf16 %v314, %v311
      %v374 = vpack.c.bf16 %v322, %v319
      %v375 = vpack.c.bf16 %v330, %v327
      %v376 = vpack.c.bf16 %v338, %v335
      %v377 = vpack.c.bf16 %v346, %v343
      %v378 = vpack.c.bf16 %v354, %v351
      %v379 = vpack.c.bf16 %v362, %v359
      %v380 = vpack.c.bf16 %v370, %v367
      %v389 = vunpack.c.l.b16 %v373
      %v390 = vunpack.c.h.b16 %v373
      %v391 = vunpack.c.l.b16 %v374
      %v392 = vunpack.c.h.b16 %v374
      %v393 = vunpack.c.l.b16 %v375
      %v394 = vunpack.c.h.b16 %v375
      %v395 = vunpack.c.l.b16 %v376
      %v396 = vunpack.c.h.b16 %v376
      %v397 = vunpack.c.l.b16 %v377
      %v398 = vunpack.c.h.b16 %v377
      %v399 = vunpack.c.l.b16 %v378
      %v400 = vunpack.c.h.b16 %v378
      %v401 = vunpack.c.l.b16 %v379
      %v402 = vunpack.c.h.b16 %v379
      %v403 = vunpack.c.l.b16 %v380
      %v404 = vunpack.c.h.b16 %v380
      %v405 = vpack.c.b16 %v389, %v389
      %v406 = vpack.c.b16 %v390, %v390
      %v407 = vpack.c.b16 %v391, %v391
      %v408 = vpack.c.b16 %v392, %v392
      %v409 = vpack.c.b16 %v393, %v393
      %v410 = vpack.c.b16 %v394, %v394
      %v411 = vpack.c.b16 %v395, %v395
      %v412 = vpack.c.b16 %v396, %v396
      %v413 = vpack.c.b16 %v397, %v397
      %v414 = vpack.c.b16 %v398, %v398
      %v415 = vpack.c.b16 %v399, %v399
      %v416 = vpack.c.b16 %v400, %v400
      %v417 = vpack.c.b16 %v401, %v401
      %v418 = vpack.c.b16 %v402, %v402
      %v419 = vpack.c.b16 %v403, %v403
      %v420 = vpack.c.b16 %v404, %v404
      %vm437 = vcmask 3072
      %438 = vst.msk [vmem:[%s208] sm:$0xf] %vm437, %v405
      %439 = vst.msk [vmem:[%s208 + $0x4] sm:$0xf] %vm437, %v406
      %440 = vst.msk [vmem:[%s208 + $0x8] sm:$0xf] %vm437, %v407
      %441 = vst.msk [vmem:[%s208 + $0xc] sm:$0xf] %vm437, %v408
      %442 = vst.msk [vmem:[%s208 + $0x10] sm:$0xf] %vm437, %v409
      %443 = vst.msk [vmem:[%s208 + $0x14] sm:$0xf] %vm437, %v410
      %444 = vst.msk [vmem:[%s208 + $0x18] sm:$0xf] %vm437, %v411
      %445 = vst.msk [vmem:[%s208 + $0x1c] sm:$0xf] %vm437, %v412
      %446 = vst.msk [vmem:[%s208 + $0x20] sm:$0xf] %vm437, %v413
      %447 = vst.msk [vmem:[%s208 + $0x24] sm:$0xf] %vm437, %v414
      %448 = vst.msk [vmem:[%s208 + $0x28] sm:$0xf] %vm437, %v415
      %449 = vst.msk [vmem:[%s208 + $0x2c] sm:$0xf] %vm437, %v416
      %450 = vst.msk [vmem:[%s208 + $0x30] sm:$0xf] %vm437, %v417
      %451 = vst.msk [vmem:[%s208 + $0x34] sm:$0xf] %vm437, %v418
      %452 = vst.msk [vmem:[%s208 + $0x38] sm:$0xf] %vm437, %v419
      %453 = vst.msk [vmem:[%s208 + $0x3c] sm:$0xf] %vm437, %v420
      %vm454 = vcmask 7168
      %v455 = vsel %vm454, %v311, 0.0
      %v456 = vsel %vm454, %v314, 0.0
      %v457 = vadd.f32 %v455, %v456
      %v458 = vsel %vm454, %v319, 0.0
      %v459 = vadd.f32 %v457, %v458
      %v460 = vsel %vm454, %v322, 0.0
      %v461 = vadd.f32 %v459, %v460
      %v462 = vsel %vm454, %v327, 0.0
      %v463 = vadd.f32 %v461, %v462
      %v464 = vsel %vm454, %v330, 0.0
      %v465 = vadd.f32 %v463, %v464
      %v466 = vsel %vm454, %v335, 0.0
      %v467 = vadd.f32 %v465, %v466
      %v468 = vsel %vm454, %v338, 0.0
      %v469 = vadd.f32 %v467, %v468
      %v470 = vsel %vm454, %v343, 0.0
      %v471 = vadd.f32 %v469, %v470
      %v472 = vsel %vm454, %v346, 0.0
      %v473 = vadd.f32 %v471, %v472
      %v474 = vsel %vm454, %v351, 0.0
      %v475 = vadd.f32 %v473, %v474
      %v476 = vsel %vm454, %v354, 0.0
      %v477 = vadd.f32 %v475, %v476
      %v478 = vsel %vm454, %v359, 0.0
      %v479 = vadd.f32 %v477, %v478
      %v480 = vsel %vm454, %v362, 0.0
      %v481 = vadd.f32 %v479, %v480
      %v482 = vsel %vm454, %v367, 0.0
      %v483 = vadd.f32 %v481, %v482
      %v484 = vsel %vm454, %v370, 0.0
      %v485 = vadd.f32 %v483, %v484
      %v486 = vrot.slane %v485, 4
      %v487 = vadd.f32 %v485, %v486
      %v488 = vrot.slane %v487, 2
      %v489 = vadd.f32 %v487, %v488
      %v490 = vrot.slane %v489, 1
      %v491 = vadd.f32 %v489, %v490
      %v492 = vmul.f32 %v311, %v311
      %v493 = vmul.f32 %v314, %v314
      %v494 = vmul.f32 %v319, %v319
      %v495 = vmul.f32 %v322, %v322
      %v496 = vmul.f32 %v327, %v327
      %v497 = vmul.f32 %v330, %v330
      %v498 = vmul.f32 %v335, %v335
      %v499 = vmul.f32 %v338, %v338
      %v500 = vmul.f32 %v343, %v343
      %v501 = vmul.f32 %v346, %v346
      %v502 = vmul.f32 %v351, %v351
      %v503 = vmul.f32 %v354, %v354
      %v504 = vmul.f32 %v359, %v359
      %v505 = vmul.f32 %v362, %v362
      %v506 = vmul.f32 %v367, %v367
      %v507 = vmul.f32 %v370, %v370
      %v508 = vsel %vm454, %v492, 0.0
      %v509 = vsel %vm454, %v493, 0.0
      %v510 = vadd.f32 %v508, %v509
      %v511 = vsel %vm454, %v494, 0.0
      %v512 = vadd.f32 %v510, %v511
      %v513 = vsel %vm454, %v495, 0.0
      %v514 = vadd.f32 %v512, %v513
      %v515 = vsel %vm454, %v496, 0.0
      %v516 = vadd.f32 %v514, %v515
      %v517 = vsel %vm454, %v497, 0.0
      %v518 = vadd.f32 %v516, %v517
      %v519 = vsel %vm454, %v498, 0.0
      %v520 = vadd.f32 %v518, %v519
      %v521 = vsel %vm454, %v499, 0.0
      %v522 = vadd.f32 %v520, %v521
      %v523 = vsel %vm454, %v500, 0.0
      %v524 = vadd.f32 %v522, %v523
      %v525 = vsel %vm454, %v501, 0.0
      %v526 = vadd.f32 %v524, %v525
      %v527 = vsel %vm454, %v502, 0.0
      %v528 = vadd.f32 %v526, %v527
      %v529 = vsel %vm454, %v503, 0.0
      %v530 = vadd.f32 %v528, %v529
      %v531 = vsel %vm454, %v504, 0.0
      %v532 = vadd.f32 %v530, %v531
      %v533 = vsel %vm454, %v505, 0.0
      %v534 = vadd.f32 %v532, %v533
      %v535 = vsel %vm454, %v506, 0.0
      %v536 = vadd.f32 %v534, %v535
      %v537 = vsel %vm454, %v507, 0.0
      %v538 = vadd.f32 %v536, %v537
      %v539 = vrot.slane %v538, 4
      %v540 = vadd.f32 %v538, %v539
      %v541 = vrot.slane %v540, 2
      %v542 = vadd.f32 %v540, %v541
      %v543 = vrot.slane %v542, 1
      %v544 = vadd.f32 %v542, %v543
      %vm545 = vcmask 1040384
      %v546 = vsel %vm545, %v491, %v544
      %vm547 = vcmask 1024
      %548 = vst.msk [vmem:[%s213] sm:$0x3] %vm547, %v546
      %s549 = smul.u32 16, %s18
      %p550 = scmp.lt.s32.totalorder %s549, 63
      %s551 = scalar_select %p550, %s549, 63
      %s552 = smul.addr %s551, 4
      %s553 = scalar_lea.vmem %s3, %s552
      %p554 = scmp.lt.s32.totalorder %s18, 3
      %s555 = scalar_select %p554, %s18, 3
      %s556 = smul.addr %s555, 2
      %s557 = scalar_lea.vmem %s4, %s556
      // Predicated region
      $region33: #{resnet_block_pallas_nchw.4} parent=31 // pred_check
        %p558 = pneg %p104
      $region34: #{resnet_block_pallas_nchw.4} parent=31 // pred_check_branch
        %560 = sbr.rel (%p558) target = $region36
      $region35: #{resnet_block_pallas_nchw.4} parent=31 // pred_region
        %s561 = smul.u32 16, %s18
      $region36: #{resnet_block_pallas_nchw.4} parent=31 // pred_fallthru
        _
      // Predicated region
      $region37: #{resnet_block_pallas_nchw.4} parent=31 // pred_check
        %p562 = pneg %p130
      $region38: #{resnet_block_pallas_nchw.4} parent=31 // pred_check_branch
        %564 = sbr.rel (%p562) target = $region40
      $region39: #{resnet_block_pallas_nchw.4} parent=31 // pred_region
        _
      $region40: #{resnet_block_pallas_nchw.4} parent=31 // pred_fallthru
        _
    $region32: #{resnet_block_pallas_nchw.4} parent=5 // pred_fallthru
      _
    %p565 = scmp.le.s32.totalorder 2, %s13
    // Predicated region
    $region41: #{resnet_block_pallas_nchw.4} parent=5 // pred_check
      %p566 = pneg %p565
    $region42: #{resnet_block_pallas_nchw.4} parent=5 // pred_check_branch
      %568 = sbr.rel (%p566) target = $region44
    $region43: #{resnet_block_pallas_nchw.4} parent=5 // pred_region
      %s569 = ssub.s32 %s13, 2
      // Predicated region
      $region45: #{resnet_block_pallas_nchw.4} parent=43 // pred_check
        %p570 = pneg %p110
      $region46: #{resnet_block_pallas_nchw.4} parent=43 // pred_check_branch
        %572 = sbr.rel (%p570) target = $region48
      $region47: #{resnet_block_pallas_nchw.4} parent=43 // pred_region
        %s573 = smul.u32 16, %s19
        %p574 = scmp.lt.s32.totalorder %s573, 63
        %s575 = scalar_select %p574, %s573, 63
        %s576 = smul.addr %s575, 4
        %s577 = scalar_lea.vmem %s3, %s576
      $region48: #{resnet_block_pallas_nchw.4} parent=43 // pred_fallthru
        _
      // Predicated region
      $region49: #{resnet_block_pallas_nchw.4} parent=43 // pred_check
        %p578 = pneg %p136
      $region50: #{resnet_block_pallas_nchw.4} parent=43 // pred_check_branch
        %580 = sbr.rel (%p578) target = $region52
      $region51: #{resnet_block_pallas_nchw.4} parent=43 // pred_region
        %p581 = scmp.lt.s32.totalorder %s19, 3
        %s582 = scalar_select %p581, %s19, 3
        %s583 = smul.addr %s582, 2
        %s584 = scalar_lea.vmem %s4, %s583
      $region52: #{resnet_block_pallas_nchw.4} parent=43 // pred_fallthru
        _
    $region44: #{resnet_block_pallas_nchw.4} parent=5 // pred_fallthru
      _
  $region6: #{resnet_block_pallas_nchw.4} parent=0 // loop_footer
    %s17 = sadd.s32 1, %s13
  $region7: #{resnet_block_pallas_nchw.4} parent=0 // loop_footer_branch
    %12 = sbr.rel target = $region3
  $region8: #{resnet_block_pallas_nchw.4} parent=0 // loop_exit
    _

// kernel: resnet_block_pallas_nchw.6
$region0: #{resnet_block_pallas_nchw.6}
  #allocation0 [shape = 'u32[]', space=smem, size = 0x4, offset = 0x4, fixed_abs, tag = 'smem constant byte address 0x4 - core index']
  #allocation1 [shape = 'u32[144,128]{1,0:T(1,128)}', space=vmem, size = 0x12000, scoped, tag = 'internal scratch']
  #allocation2 [shape = 'f32[1,1]{1,0:T(1,128)S(1)}', space=vmem, size = 0x200, scoped, tag = 'scoped memory for resnet_block_pallas_nchw.6']
  #allocation3 [shape = 'f32[1,1]{1,0:T(1,128)S(1)}', space=vmem, size = 0x200, scoped, tag = 'scoped memory for resnet_block_pallas_nchw.6']
  %s0 = inlined_call_operand.vmem [shape: bf16[512,1], index: 0, kind: input, shape index: {}]
  %s1 = inlined_call_operand.<no memory space> [shape: f32[1,1], index: 1, kind: input, shape index: {}]
  %s2 = inlined_call_operand.<no memory space> [shape: f32[1,1], index: 2, kind: input, shape index: {}]
  %s3 = inlined_call_operand.vmem [shape: bf16[1,4], index: 3, kind: input, shape index: {}]
  %s4 = inlined_call_operand.vmem [shape: f32[1,4], index: 4, kind: input, shape index: {}]
  %s5 = inlined_call_operand.vmem [shape: f32[4,2,4], index: 5, kind: output, shape index: {}]
  %s6 = sld [smem:[#allocation0]]
  $region53: #{resnet_block_pallas_nchw.6} parent=0
    _
  %s8 = ssub.s32 1, %s6
  %s9 = scalar_select 0, %s8, %s6
  %v10 = vstv %s1
  %11 = vst [vmem:[#allocation2] sm:$0x1] %v10
  %v12 = vstv %s2
  %13 = vst [vmem:[#allocation3] sm:$0x1] %v12
  loop: start=0, step=1, limit=6
  $region2: #{resnet_block_pallas_nchw.6} parent=0 // loop_pre_header
    _
  $region3: #{resnet_block_pallas_nchw.6} parent=0 // loop_header
    %s15 = sphi 0, %s19
    %p16 = scmp.ge.s32.totalorder %s15, 6
    %s25 = sphi 0, %s27
    %s28 = sphi 0, %s25
    %s29 = sphi 0, %s28
    %s45 = sphi 0, %s29
    %s49 = sphi 0, %s49
    %s51 = sphi 0, %s49
    %s52 = sphi 0, %s51
    %s66 = sphi 0, %s52
    %s70 = sphi 0, %s70
    %s72 = sphi 0, %s70
    %s73 = sphi 0, %s72
    %s87 = sphi 0, %s73
    %s91 = sphi 0, %s91
    %s93 = sphi 0, %s91
    %s94 = sphi 0, %s93
    %s108 = sphi 0, %s94
    %s112 = sphi 0, %s112
    %s114 = sphi 0, %s112
    %s115 = sphi 0, %s114
    %s129 = sphi 0, %s115
    %s135 = sphi 0, %s137
    %s138 = sphi 0, %s135
    %s139 = sphi 0, %s138
    %s155 = sphi 0, %s139
  $region4: #{resnet_block_pallas_nchw.6} parent=0 // loop_header_branch
    %18 = sbr.rel (%p16) target = $region8
  $region5: #{resnet_block_pallas_nchw.6} parent=0 // loop_body
    %s20 = ssub.s32 %s15, 1
    %s21 = ssub.s32 %s15, 2
    %s22 = sadd.s32 %s15, 1
    %s23 = ssub.s32 %s15, %s22
    %p24 = scmp.eq.s32.totalorder %s23, 0
    %s26 = sadd.s32 %s25, 1
    %s27 = scalar_select %p24, %s25, %s26
    %p30 = pneg %p24
    %p31 = scmp.eq.s32.totalorder %s15, 3
    %p32 = por %p30, %p31
    %p33 = scmp.ne.s32.totalorder %s25, %s28
    %p34 = scmp.eq.s32.totalorder %s15, 0
    %p35 = por %p33, %p34
    %p36 = scmp.ne.s32.totalorder %s25, %s28
    %p37 = scmp.eq.s32.totalorder %s20, 3
    %p38 = por %p36, %p37
    %p39 = scmp.ne.s32.totalorder %s28, %s29
    %p40 = scmp.eq.s32.totalorder %s20, 0
    %p41 = por %p39, %p40
    %p42 = scmp.ne.s32.totalorder %s28, %s29
    %p43 = scmp.eq.s32.totalorder %s21, 3
    %p44 = por %p42, %p43
    %p46 = scmp.ne.s32.totalorder %s29, %s45
    %p47 = scmp.eq.s32.totalorder %s21, 0
    %p48 = por %p46, %p47
    %s50 = sadd.s32 %s49, 1
    %p53 = scmp.eq.s32.totalorder %s15, 3
    %p54 = scmp.ne.s32.totalorder %s49, %s51
    %p55 = scmp.eq.s32.totalorder %s15, 0
    %p56 = por %p54, %p55
    %p57 = scmp.ne.s32.totalorder %s49, %s51
    %p58 = scmp.eq.s32.totalorder %s20, 3
    %p59 = por %p57, %p58
    %p60 = scmp.ne.s32.totalorder %s51, %s52
    %p61 = scmp.eq.s32.totalorder %s20, 0
    %p62 = por %p60, %p61
    %p63 = scmp.ne.s32.totalorder %s51, %s52
    %p64 = scmp.eq.s32.totalorder %s21, 3
    %p65 = por %p63, %p64
    %p67 = scmp.ne.s32.totalorder %s52, %s66
    %p68 = scmp.eq.s32.totalorder %s21, 0
    %p69 = por %p67, %p68
    %s71 = sadd.s32 %s70, 1
    %p74 = scmp.eq.s32.totalorder %s15, 3
    %p75 = scmp.ne.s32.totalorder %s70, %s72
    %p76 = scmp.eq.s32.totalorder %s15, 0
    %p77 = por %p75, %p76
    %p78 = scmp.ne.s32.totalorder %s70, %s72
    %p79 = scmp.eq.s32.totalorder %s20, 3
    %p80 = por %p78, %p79
    %p81 = scmp.ne.s32.totalorder %s72, %s73
    %p82 = scmp.eq.s32.totalorder %s20, 0
    %p83 = por %p81, %p82
    %p84 = scmp.ne.s32.totalorder %s72, %s73
    %p85 = scmp.eq.s32.totalorder %s21, 3
    %p86 = por %p84, %p85
    %p88 = scmp.ne.s32.totalorder %s73, %s87
    %p89 = scmp.eq.s32.totalorder %s21, 0
    %p90 = por %p88, %p89
    %s92 = sadd.s32 %s91, 1
    %p95 = scmp.eq.s32.totalorder %s15, 3
    %p96 = scmp.ne.s32.totalorder %s91, %s93
    %p97 = scmp.eq.s32.totalorder %s15, 0
    %p98 = por %p96, %p97
    %p99 = scmp.ne.s32.totalorder %s91, %s93
    %p100 = scmp.eq.s32.totalorder %s20, 3
    %p101 = por %p99, %p100
    %p102 = scmp.ne.s32.totalorder %s93, %s94
    %p103 = scmp.eq.s32.totalorder %s20, 0
    %p104 = por %p102, %p103
    %p105 = scmp.ne.s32.totalorder %s93, %s94
    %p106 = scmp.eq.s32.totalorder %s21, 3
    %p107 = por %p105, %p106
    %p109 = scmp.ne.s32.totalorder %s94, %s108
    %p110 = scmp.eq.s32.totalorder %s21, 0
    %p111 = por %p109, %p110
    %s113 = sadd.s32 %s112, 1
    %p116 = scmp.eq.s32.totalorder %s15, 3
    %p117 = scmp.ne.s32.totalorder %s112, %s114
    %p118 = scmp.eq.s32.totalorder %s15, 0
    %p119 = por %p117, %p118
    %p120 = scmp.ne.s32.totalorder %s112, %s114
    %p121 = scmp.eq.s32.totalorder %s20, 3
    %p122 = por %p120, %p121
    %p123 = scmp.ne.s32.totalorder %s114, %s115
    %p124 = scmp.eq.s32.totalorder %s20, 0
    %p125 = por %p123, %p124
    %p126 = scmp.ne.s32.totalorder %s114, %s115
    %p127 = scmp.eq.s32.totalorder %s21, 3
    %p128 = por %p126, %p127
    %p130 = scmp.ne.s32.totalorder %s115, %s129
    %p131 = scmp.eq.s32.totalorder %s21, 0
    %p132 = por %p130, %p131
    %s133 = ssub.s32 %s15, %s22
    %p134 = scmp.eq.s32.totalorder %s133, 0
    %s136 = sadd.s32 %s135, 1
    %s137 = scalar_select %p134, %s135, %s136
    %p140 = pneg %p134
    %p141 = scmp.eq.s32.totalorder %s15, 3
    %p142 = por %p140, %p141
    %p143 = scmp.ne.s32.totalorder %s135, %s138
    %p144 = scmp.eq.s32.totalorder %s15, 0
    %p145 = por %p143, %p144
    %p146 = scmp.ne.s32.totalorder %s135, %s138
    %p147 = scmp.eq.s32.totalorder %s20, 3
    %p148 = por %p146, %p147
    %p149 = scmp.ne.s32.totalorder %s138, %s139
    %p150 = scmp.eq.s32.totalorder %s20, 0
    %p151 = por %p149, %p150
    %p152 = scmp.ne.s32.totalorder %s138, %s139
    %p153 = scmp.eq.s32.totalorder %s21, 3
    %p154 = por %p152, %p153
    %p156 = scmp.ne.s32.totalorder %s139, %s155
    %p157 = scmp.eq.s32.totalorder %s21, 0
    %p158 = por %p156, %p157
    %p159 = scmp.le.s32.totalorder 1, %s15
    %p160 = scmp.lt.s32.totalorder %s15, 5
    %p161 = pnand %p159, %p160
    %p162 = pneg %p161
    // Predicated region
    $region9: #{resnet_block_pallas_nchw.6} parent=5 // pred_check
      _
    $region10: #{resnet_block_pallas_nchw.6} parent=5 // pred_check_branch
      %164 = sbr.rel (%p161) target = $region12
    $region11: #{resnet_block_pallas_nchw.6} parent=5 // pred_region
      %s165 = ssub.s32 %s15, 1
      // Predicated region
      $region13: #{resnet_block_pallas_nchw.6} parent=11 // pred_check
        %p166 = pneg %p62
      $region14: #{resnet_block_pallas_nchw.6} parent=11 // pred_check_branch
        %168 = sbr.rel (%p166) target = $region16
      $region15: #{resnet_block_pallas_nchw.6} parent=11 // pred_region
        _
      $region16: #{resnet_block_pallas_nchw.6} parent=11 // pred_fallthru
        _
      // Predicated region
      $region17: #{resnet_block_pallas_nchw.6} parent=11 // pred_check
        %p169 = pneg %p83
      $region18: #{resnet_block_pallas_nchw.6} parent=11 // pred_check_branch
        %171 = sbr.rel (%p169) target = $region20
      $region19: #{resnet_block_pallas_nchw.6} parent=11 // pred_region
        _
      $region20: #{resnet_block_pallas_nchw.6} parent=11 // pred_fallthru
        _
      // Predicated region
      $region21: #{resnet_block_pallas_nchw.6} parent=11 // pred_check
        %p172 = pneg %p104
      $region22: #{resnet_block_pallas_nchw.6} parent=11 // pred_check_branch
        %174 = sbr.rel (%p172) target = $region24
      $region23: #{resnet_block_pallas_nchw.6} parent=11 // pred_region
        _
      $region24: #{resnet_block_pallas_nchw.6} parent=11 // pred_fallthru
        _
      // Predicated region
      $region25: #{resnet_block_pallas_nchw.6} parent=11 // pred_check
        %p175 = pneg %p125
      $region26: #{resnet_block_pallas_nchw.6} parent=11 // pred_check_branch
        %177 = sbr.rel (%p175) target = $region28
      $region27: #{resnet_block_pallas_nchw.6} parent=11 // pred_region
        _
      $region28: #{resnet_block_pallas_nchw.6} parent=11 // pred_fallthru
        _
    $region12: #{resnet_block_pallas_nchw.6} parent=5 // pred_fallthru
      _
    %p178 = scmp.lt.s32.totalorder %s15, 4
    // Predicated region
    $region29: #{resnet_block_pallas_nchw.6} parent=5 // pred_check
      %p179 = pneg %p178
    $region30: #{resnet_block_pallas_nchw.6} parent=5 // pred_check_branch
      %181 = sbr.rel (%p179) target = $region32
    $region31: #{resnet_block_pallas_nchw.6} parent=5 // pred_region
      // Predicated region
      $region33: #{resnet_block_pallas_nchw.6} parent=31 // pred_check
        %p182 = pneg %p35
      $region34: #{resnet_block_pallas_nchw.6} parent=31 // pred_check_branch
        %184 = sbr.rel (%p182) target = $region36
      $region35: #{resnet_block_pallas_nchw.6} parent=31 // pred_region
        %s185 = smul.u32 16, %s15
        %p186 = scmp.lt.s32.totalorder %s185, 63
        %s187 = scalar_select %p186, %s185, 63
        %s188 = smul.addr %s187, 4
        %s189 = scalar_lea.vmem %s0, %s188
        %s190 = smul.u32 16, %s15
      $region36: #{resnet_block_pallas_nchw.6} parent=31 // pred_fallthru
        _
    $region32: #{resnet_block_pallas_nchw.6} parent=5 // pred_fallthru
      _
    %p191 = scmp.le.s32.totalorder 1, %s15
    %p192 = scmp.lt.s32.totalorder %s15, 5
    %p193 = pnand %p191, %p192
    %p194 = pneg %p193
    // Predicated region
    $region37: #{resnet_block_pallas_nchw.6} parent=5 // pred_check
      _
    $region38: #{resnet_block_pallas_nchw.6} parent=5 // pred_check_branch
      %196 = sbr.rel (%p193) target = $region40
    $region39: #{resnet_block_pallas_nchw.6} parent=5 // pred_region
      %s197 = ssub.s32 %s15, 1
      %s198 = smul.u32 16, %s20
      %p199 = scmp.lt.s32.totalorder %s198, 63
      %s200 = scalar_select %p199, %s198, 63
      %s201 = smul.addr %s200, 4
      %s202 = scalar_lea.vmem %s0, %s201
      %p203 = pneg %p41
      %p204 = pneg %p38
      %p205 = pneg %p62
      %p206 = pneg %p59
      %p207 = pneg %p83
      %p208 = pneg %p80
      %p209 = pneg %p104
      %p210 = pneg %p101
      %p211 = pneg %p125
      %p212 = pneg %p122
      %p213 = pneg %p151
      %p214 = pneg %p148
      %p215 = scmp.lt.s32.totalorder %s20, 3
      %s216 = scalar_select %p215, %s20, 3
      %s217 = smul.addr %s216, 2
      %s218 = scalar_lea.vmem %s5, %s217
      %s219 = smul.u32 16, %s20
      %p220 = scmp.lt.s32.totalorder %s219, 63
      %s221 = scalar_select %p220, %s219, 63
      %s222 = smul.addr %s221, 4
      %s223 = scalar_lea.vmem %s0, %s222
      %s224 = smul.u32 16, %s20
      %p225 = scmp.lt.s32.totalorder %s20, 3
      %s226 = scalar_select %p225, %s20, 3
      %s227 = smul.addr %s226, 2
      %s228 = scalar_lea.vmem %s5, %s227
      %v230 = vld [vmem:[%s223] sm:$0xf]
      %v231 = vld [vmem:[%s223 + $0x4] sm:$0xf]
      %v232 = vld [vmem:[%s223 + $0x8] sm:$0xf]
      %v233 = vld [vmem:[%s223 + $0xc] sm:$0xf]
      %v234 = vld [vmem:[%s223 + $0x10] sm:$0xf]
      %v235 = vld [vmem:[%s223 + $0x14] sm:$0xf]
      %v236 = vld [vmem:[%s223 + $0x18] sm:$0xf]
      %v237 = vld [vmem:[%s223 + $0x1c] sm:$0xf]
      %v238 = vld [vmem:[%s223 + $0x20] sm:$0xf]
      %v239 = vld [vmem:[%s223 + $0x24] sm:$0xf]
      %v240 = vld [vmem:[%s223 + $0x28] sm:$0xf]
      %v241 = vld [vmem:[%s223 + $0x2c] sm:$0xf]
      %v242 = vld [vmem:[%s223 + $0x30] sm:$0xf]
      %v243 = vld [vmem:[%s223 + $0x34] sm:$0xf]
      %v244 = vld [vmem:[%s223 + $0x38] sm:$0xf]
      %v245 = vld [vmem:[%s223 + $0x3c] sm:$0xf]
      %v246 = vld [vmem:[#allocation2] sm:$0x1]
      %v247 = vunpack.c.l.bf16 %v230
      %v248 = vunpack.c.l.bf16 %v231
      %v249 = vunpack.c.l.bf16 %v232
      %v250 = vunpack.c.l.bf16 %v233
      %v251 = vunpack.c.l.bf16 %v234
      %v252 = vunpack.c.l.bf16 %v235
      %v253 = vunpack.c.l.bf16 %v236
      %v254 = vunpack.c.l.bf16 %v237
      %v255 = vunpack.c.l.bf16 %v238
      %v256 = vunpack.c.l.bf16 %v239
      %v257 = vunpack.c.l.bf16 %v240
      %v258 = vunpack.c.l.bf16 %v241
      %v259 = vunpack.c.l.bf16 %v242
      %v260 = vunpack.c.l.bf16 %v243
      %v261 = vunpack.c.l.bf16 %v244
      %v262 = vunpack.c.l.bf16 %v245
      %v264 = vlaneseq
      %v265 = vshrl.u32 %v264, 7
      %v266 = vsub.s32 0, %v265
      %v267 = vrot.slane %v246, %v266
      %v269 = vmul.f32 %v247, %v267
      %v270 = vmul.f32 %v248, %v267
      %v271 = vmul.f32 %v249, %v267
      %v272 = vmul.f32 %v250, %v267
      %v273 = vmul.f32 %v251, %v267
      %v274 = vmul.f32 %v252, %v267
      %v275 = vmul.f32 %v253, %v267
      %v276 = vmul.f32 %v254, %v267
      %v277 = vmul.f32 %v255, %v267
      %v278 = vmul.f32 %v256, %v267
      %v279 = vmul.f32 %v257, %v267
      %v280 = vmul.f32 %v258, %v267
      %v281 = vmul.f32 %v259, %v267
      %v282 = vmul.f32 %v260, %v267
      %v283 = vmul.f32 %v261, %v267
      %v284 = vmul.f32 %v262, %v267
      %v285 = vld [vmem:[#allocation3] sm:$0x1]
      %v287 = vlaneseq
      %v288 = vshrl.u32 %v287, 7
      %v289 = vsub.s32 0, %v288
      %v290 = vrot.slane %v285, %v289
      %v292 = vadd.f32 %v269, %v290
      %v293 = vadd.f32 %v270, %v290
      %v294 = vadd.f32 %v271, %v290
      %v295 = vadd.f32 %v272, %v290
      %v296 = vadd.f32 %v273, %v290
      %v297 = vadd.f32 %v274, %v290
      %v298 = vadd.f32 %v275, %v290
      %v299 = vadd.f32 %v276, %v290
      %v300 = vadd.f32 %v277, %v290
      %v301 = vadd.f32 %v278, %v290
      %v302 = vadd.f32 %v279, %v290
      %v303 = vadd.f32 %v280, %v290
      %v304 = vadd.f32 %v281, %v290
      %v305 = vadd.f32 %v282, %v290
      %v306 = vadd.f32 %v283, %v290
      %v307 = vadd.f32 %v284, %v290
      %v308 = vmax.f32 %v292, 0.0
      %v309 = vmax.f32 %v293, 0.0
      %v310 = vmax.f32 %v294, 0.0
      %v311 = vmax.f32 %v295, 0.0
      %v312 = vmax.f32 %v296, 0.0
      %v313 = vmax.f32 %v297, 0.0
      %v314 = vmax.f32 %v298, 0.0
      %v315 = vmax.f32 %v299, 0.0
      %v316 = vmax.f32 %v300, 0.0
      %v317 = vmax.f32 %v301, 0.0
      %v318 = vmax.f32 %v302, 0.0
      %v319 = vmax.f32 %v303, 0.0
      %v320 = vmax.f32 %v304, 0.0
      %v321 = vmax.f32 %v305, 0.0
      %v322 = vmax.f32 %v306, 0.0
      %v323 = vmax.f32 %v307, 0.0
      %v324 = vpack.c.bf16 %v309, %v308
      %v325 = vpack.c.bf16 %v311, %v310
      %v326 = vpack.c.bf16 %v313, %v312
      %v327 = vpack.c.bf16 %v315, %v314
      %v328 = vpack.c.bf16 %v317, %v316
      %v329 = vpack.c.bf16 %v319, %v318
      %v330 = vpack.c.bf16 %v321, %v320
      %v331 = vpack.c.bf16 %v323, %v322
      %v332 = vld [vmem:[%s3] sm:$0x1]
      %v333 = vld [vmem:[%s4] sm:$0x1]
      %v335 = vlaneseq
      %v336 = vshrl.u32 %v335, 7
      %v337 = vsub.s32 0, %v336
      %v338 = vrot.slane %v333, %v337
      %vm340 = vcmask 7168
      %v342 = vsel %vm340, %v324, 0
      %v345 = vsel %vm340, %v325, 0
      %v348 = vsel %vm340, %v326, 0
      %v351 = vsel %vm340, %v327, 0
      %v354 = vsel %vm340, %v328, 0
      %v357 = vsel %vm340, %v329, 0
      %v360 = vsel %vm340, %v330, 0
      %v363 = vsel %vm340, %v331, 0
      %vm365 = vcmask 1040384
      %v366 = vsel 0, 4294967295, 65535
      %v367 = vsel %vm365, %v366, 0
      %v369 = vand.u32 %v332, %v367
      %371 = vmatprep.subr.bf16.mxu0 0
      %372 = vmatpush1.bf16.msra.mxu0 0
      %373 = vmatprep.subr.bf16.mxu0 0
      %374 = vmatpush1.bf16.msra.mxu0 0
      %375 = vmatprep.subr.bf16.mxu0 0
      %376 = vmatpush1.bf16.msra.mxu0 0
      %377 = vmatprep.subr.bf16.mxu0 0
      %378 = vmatpush1.bf16.msra.mxu0 0
      %379 = vmatprep.subr.bf16.mxu0 0
      %380 = vmatpush1.bf16.msra.mxu0 0
      %381 = vmatprep.subr.bf16.mxu0 0
      %382 = vmatpush1.bf16.msra.mxu0 0
      %383 = vmatprep.subr.bf16.mxu0 0
      %384 = vmatpush1.bf16.msra.mxu0 0
      %385 = vmatprep.subr.bf16.mxu0 0
      %386 = vmatpush1.bf16.msra.mxu0 %v369
      %387 = vmatprep.subr.bf16.mxu0 0
      %388 = vmatpush2.bf16.msra.mxu0 0
      %389 = vmatprep.subr.bf16.mxu0 0
      %390 = vmatpush2.bf16.msra.mxu0 0
      %391 = vmatprep.subr.bf16.mxu0 0
      %392 = vmatpush2.bf16.msra.mxu0 0
      %393 = vmatprep.subr.bf16.mxu0 0
      %394 = vmatpush2.bf16.msra.mxu0 0
      %395 = vmatprep.subr.bf16.mxu0 0
      %396 = vmatpush2.bf16.msra.mxu0 0
      %397 = vmatprep.subr.bf16.mxu0 0
      %398 = vmatpush2.bf16.msra.mxu0 0
      %399 = vmatprep.subr.bf16.mxu0 0
      %400 = vmatpush2.bf16.msra.mxu0 0
      %401 = vmatprep.subr.bf16.mxu0 0
      %402 = vmatpush2.bf16.msra.mxu0 0
      %403 = vmatprep.mubr.bf16.mxu0 0
      %404 = vmatmul.mubr.bf16.gmra.mxu0 %v342
      %v405 = vpop.f32.mrf.mxu0
      %v406 = vadd.f32 %v338, %v405
      %v407 = vpop.f32.mrf.mxu0
      %v408 = vpop.f32.mrf.mxu0
      %v409 = vadd.f32 %v338, %v408
      %v410 = vpop.f32.mrf.mxu0
      %411 = vmatprep.mubr.bf16.mxu0 0
      %412 = vmatmul.mubr.bf16.gmra.mxu0 %v345
      %v413 = vpop.f32.mrf.mxu0
      %v414 = vadd.f32 %v338, %v413
      %v415 = vpop.f32.mrf.mxu0
      %v416 = vpop.f32.mrf.mxu0
      %v417 = vadd.f32 %v338, %v416
      %v418 = vpop.f32.mrf.mxu0
      %419 = vmatprep.mubr.bf16.mxu0 0
      %420 = vmatmul.mubr.bf16.gmra.mxu0 %v348
      %v421 = vpop.f32.mrf.mxu0
      %v422 = vadd.f32 %v338, %v421
      %v423 = vpop.f32.mrf.mxu0
      %v424 = vpop.f32.mrf.mxu0
      %v425 = vadd.f32 %v338, %v424
      %v426 = vpop.f32.mrf.mxu0
      %427 = vmatprep.mubr.bf16.mxu0 0
      %428 = vmatmul.mubr.bf16.gmra.mxu0 %v351
      %v429 = vpop.f32.mrf.mxu0
      %v430 = vadd.f32 %v338, %v429
      %v431 = vpop.f32.mrf.mxu0
      %v432 = vpop.f32.mrf.mxu0
      %v433 = vadd.f32 %v338, %v432
      %v434 = vpop.f32.mrf.mxu0
      %435 = vmatprep.mubr.bf16.mxu0 0
      %436 = vmatmul.mubr.bf16.gmra.mxu0 %v354
      %v437 = vpop.f32.mrf.mxu0
      %v438 = vadd.f32 %v338, %v437
      %v439 = vpop.f32.mrf.mxu0
      %v440 = vpop.f32.mrf.mxu0
      %v441 = vadd.f32 %v338, %v440
      %v442 = vpop.f32.mrf.mxu0
      %443 = vmatprep.mubr.bf16.mxu0 0
      %444 = vmatmul.mubr.bf16.gmra.mxu0 %v357
      %v445 = vpop.f32.mrf.mxu0
      %v446 = vadd.f32 %v338, %v445
      %v447 = vpop.f32.mrf.mxu0
      %v448 = vpop.f32.mrf.mxu0
      %v449 = vadd.f32 %v338, %v448
      %v450 = vpop.f32.mrf.mxu0
      %451 = vmatprep.mubr.bf16.mxu0 0
      %452 = vmatmul.mubr.bf16.gmra.mxu0 %v360
      %v453 = vpop.f32.mrf.mxu0
      %v454 = vadd.f32 %v338, %v453
      %v455 = vpop.f32.mrf.mxu0
      %v456 = vpop.f32.mrf.mxu0
      %v457 = vadd.f32 %v338, %v456
      %v458 = vpop.f32.mrf.mxu0
      %459 = vmatprep.mubr.bf16.mxu0 0
      %460 = vmatmul.mubr.bf16.gmra.mxu0 %v363
      %v461 = vpop.f32.mrf.mxu0
      %v462 = vadd.f32 %v338, %v461
      %v463 = vpop.f32.mrf.mxu0
      %v464 = vpop.f32.mrf.mxu0
      %v465 = vadd.f32 %v338, %v464
      %v466 = vpop.f32.mrf.mxu0
      %467 = vdwg.mxu0
      %vm468 = vcmask 31744
      %v469 = vsel %vm468, %v406, 0.0
      %v470 = vsel %vm468, %v409, 0.0
      %v471 = vadd.f32 %v469, %v470
      %v472 = vsel %vm468, %v414, 0.0
      %v473 = vadd.f32 %v471, %v472
      %v474 = vsel %vm468, %v417, 0.0
      %v475 = vadd.f32 %v473, %v474
      %v476 = vsel %vm468, %v422, 0.0
      %v477 = vadd.f32 %v475, %v476
      %v478 = vsel %vm468, %v425, 0.0
      %v479 = vadd.f32 %v477, %v478
      %v480 = vsel %vm468, %v430, 0.0
      %v481 = vadd.f32 %v479, %v480
      %v482 = vsel %vm468, %v433, 0.0
      %v483 = vadd.f32 %v481, %v482
      %v484 = vsel %vm468, %v438, 0.0
      %v485 = vadd.f32 %v483, %v484
      %v486 = vsel %vm468, %v441, 0.0
      %v487 = vadd.f32 %v485, %v486
      %v488 = vsel %vm468, %v446, 0.0
      %v489 = vadd.f32 %v487, %v488
      %v490 = vsel %vm468, %v449, 0.0
      %v491 = vadd.f32 %v489, %v490
      %v492 = vsel %vm468, %v454, 0.0
      %v493 = vadd.f32 %v491, %v492
      %v494 = vsel %vm468, %v457, 0.0
      %v495 = vadd.f32 %v493, %v494
      %v496 = vsel %vm468, %v462, 0.0
      %v497 = vadd.f32 %v495, %v496
      %v498 = vsel %vm468, %v465, 0.0
      %v499 = vadd.f32 %v497, %v498
      %v500 = vrot.slane %v499, 4
      %v501 = vadd.f32 %v499, %v500
      %v502 = vrot.slane %v501, 2
      %v503 = vadd.f32 %v501, %v502
      %v504 = vrot.slane %v503, 1
      %v505 = vadd.f32 %v503, %v504
      %v506 = vmul.f32 %v406, %v406
      %v507 = vmul.f32 %v409, %v409
      %v508 = vmul.f32 %v414, %v414
      %v509 = vmul.f32 %v417, %v417
      %v510 = vmul.f32 %v422, %v422
      %v511 = vmul.f32 %v425, %v425
      %v512 = vmul.f32 %v430, %v430
      %v513 = vmul.f32 %v433, %v433
      %v514 = vmul.f32 %v438, %v438
      %v515 = vmul.f32 %v441, %v441
      %v516 = vmul.f32 %v446, %v446
      %v517 = vmul.f32 %v449, %v449
      %v518 = vmul.f32 %v454, %v454
      %v519 = vmul.f32 %v457, %v457
      %v520 = vmul.f32 %v462, %v462
      %v521 = vmul.f32 %v465, %v465
      %v522 = vsel %vm468, %v506, 0.0
      %v523 = vsel %vm468, %v507, 0.0
      %v524 = vadd.f32 %v522, %v523
      %v525 = vsel %vm468, %v508, 0.0
      %v526 = vadd.f32 %v524, %v525
      %v527 = vsel %vm468, %v509, 0.0
      %v528 = vadd.f32 %v526, %v527
      %v529 = vsel %vm468, %v510, 0.0
      %v530 = vadd.f32 %v528, %v529
      %v531 = vsel %vm468, %v511, 0.0
      %v532 = vadd.f32 %v530, %v531
      %v533 = vsel %vm468, %v512, 0.0
      %v534 = vadd.f32 %v532, %v533
      %v535 = vsel %vm468, %v513, 0.0
      %v536 = vadd.f32 %v534, %v535
      %v537 = vsel %vm468, %v514, 0.0
      %v538 = vadd.f32 %v536, %v537
      %v539 = vsel %vm468, %v515, 0.0
      %v540 = vadd.f32 %v538, %v539
      %v541 = vsel %vm468, %v516, 0.0
      %v542 = vadd.f32 %v540, %v541
      %v543 = vsel %vm468, %v517, 0.0
      %v544 = vadd.f32 %v542, %v543
      %v545 = vsel %vm468, %v518, 0.0
      %v546 = vadd.f32 %v544, %v545
      %v547 = vsel %vm468, %v519, 0.0
      %v548 = vadd.f32 %v546, %v547
      %v549 = vsel %vm468, %v520, 0.0
      %v550 = vadd.f32 %v548, %v549
      %v551 = vsel %vm468, %v521, 0.0
      %v552 = vadd.f32 %v550, %v551
      %v553 = vrot.slane %v552, 4
      %v554 = vadd.f32 %v552, %v553
      %v555 = vrot.slane %v554, 2
      %v556 = vadd.f32 %v554, %v555
      %v557 = vrot.slane %v556, 1
      %v558 = vadd.f32 %v556, %v557
      %v559 = vsel %vm365, %v505, %v558
      %vm560 = vcmask 25600
      %561 = vst.msk [vmem:[%s228] sm:$0x3] %vm560, %v559
      %p562 = scmp.lt.s32.totalorder %s20, 3
      %s563 = scalar_select %p562, %s20, 3
      %s564 = smul.addr %s563, 2
      %s565 = scalar_lea.vmem %s5, %s564
      // Predicated region
      $region41: #{resnet_block_pallas_nchw.6} parent=39 // pred_check
        %p566 = pneg %p148
      $region42: #{resnet_block_pallas_nchw.6} parent=39 // pred_check_branch
        %568 = sbr.rel (%p566) target = $region44
      $region43: #{resnet_block_pallas_nchw.6} parent=39 // pred_region
        _
      $region44: #{resnet_block_pallas_nchw.6} parent=39 // pred_fallthru
        _
    $region40: #{resnet_block_pallas_nchw.6} parent=5 // pred_fallthru
      _
    %p569 = scmp.le.s32.totalorder 2, %s15
    // Predicated region
    $region45: #{resnet_block_pallas_nchw.6} parent=5 // pred_check
      %p570 = pneg %p569
    $region46: #{resnet_block_pallas_nchw.6} parent=5 // pred_check_branch
      %572 = sbr.rel (%p570) target = $region48
    $region47: #{resnet_block_pallas_nchw.6} parent=5 // pred_region
      %s573 = ssub.s32 %s15, 2
      // Predicated region
      $region49: #{resnet_block_pallas_nchw.6} parent=47 // pred_check
        %p574 = pneg %p154
      $region50: #{resnet_block_pallas_nchw.6} parent=47 // pred_check_branch
        %576 = sbr.rel (%p574) target = $region52
      $region51: #{resnet_block_pallas_nchw.6} parent=47 // pred_region
        %p577 = scmp.lt.s32.totalorder %s21, 3
        %s578 = scalar_select %p577, %s21, 3
        %s579 = smul.addr %s578, 2
        %s580 = scalar_lea.vmem %s5, %s579
      $region52: #{resnet_block_pallas_nchw.6} parent=47 // pred_fallthru
        _
    $region48: #{resnet_block_pallas_nchw.6} parent=5 // pred_fallthru
      _
  $region6: #{resnet_block_pallas_nchw.6} parent=0 // loop_footer
    %s19 = sadd.s32 1, %s15
  $region7: #{resnet_block_pallas_nchw.6} parent=0 // loop_footer_branch
    %14 = sbr.rel target = $region3
  $region8: #{resnet_block_pallas_nchw.6} parent=0 // loop_exit
    _

// kernel: resnet_block_pallas_nchw.5
$region0: #{resnet_block_pallas_nchw.5}
  #allocation0 [shape = 'u32[]', space=smem, size = 0x4, offset = 0x4, fixed_abs, tag = 'smem constant byte address 0x4 - core index']
  #allocation1 [shape = 'u32[144,128]{1,0:T(1,128)}', space=vmem, size = 0x12000, scoped, tag = 'internal scratch']
  #allocation2 [shape = 'bf16[18,18,1]{2,1,0:T(8,128)(2,1)}', space=vmem, size = 0x1b000, scoped, tag = 'scratch operand']
  #allocation3 [shape = 'f32[1,1]{1,0:T(1,128)S(1)}', space=vmem, size = 0x200, scoped, tag = 'scoped memory for resnet_block_pallas_nchw.5']
  #allocation4 [shape = 'f32[1,1]{1,0:T(1,128)S(1)}', space=vmem, size = 0x200, scoped, tag = 'scoped memory for resnet_block_pallas_nchw.5']
  #allocation5 [shape = 'f32[1,1]{1,0:T(1,128)S(1)}', space=vmem, size = 0x200, scoped, tag = 'scoped memory for resnet_block_pallas_nchw.5']
  %s0 = inlined_call_operand.vmem [shape: bf16[2,16,16,1], index: 0, kind: input, shape index: {}]
  %s1 = inlined_call_operand.<no memory space> [shape: f32[1,1], index: 1, kind: input, shape index: {}]
  %s2 = inlined_call_operand.<no memory space> [shape: f32[1,1], index: 2, kind: input, shape index: {}]
  %s3 = inlined_call_operand.vmem [shape: bf16[3,3,1], index: 3, kind: input, shape index: {}]
  %s4 = inlined_call_operand.<no memory space> [shape: f32[1,1], index: 4, kind: input, shape index: {}]
  %s5 = inlined_call_operand.vmem [shape: bf16[2,16,16,1], index: 5, kind: output, shape index: {0}]
  %s6 = inlined_call_operand.vmem [shape: f32[2,2,1], index: 6, kind: output, shape index: {1}]
  %7 = xla_tuple %s5, %s6
  %s8 = sld [smem:[#allocation0]]
  $region61: #{resnet_block_pallas_nchw.5} parent=0
    _
  %s10 = ssub.s32 1, %s8
  %s11 = scalar_select 0, %s10, %s8
  %v12 = vstv %s1
  %13 = vst [vmem:[#allocation3] sm:$0x1] %v12
  %v14 = vstv %s2
  %15 = vst [vmem:[#allocation4] sm:$0x1] %v14
  %v16 = vstv %s4
  %17 = vst [vmem:[#allocation5] sm:$0x1] %v16
  loop: start=0, step=1, limit=4
  $region2: #{resnet_block_pallas_nchw.5} parent=0 // loop_pre_header
    _
  $region3: #{resnet_block_pallas_nchw.5} parent=0 // loop_header
    %s19 = sphi 0, %s23
    %p20 = scmp.ge.s32.totalorder %s19, 4
    %s29 = sphi 0, %s31
    %s32 = sphi 0, %s29
    %s33 = sphi 0, %s32
    %s49 = sphi 0, %s33
    %s53 = sphi 0, %s53
    %s55 = sphi 0, %s53
    %s56 = sphi 0, %s55
    %s70 = sphi 0, %s56
    %s74 = sphi 0, %s74
    %s76 = sphi 0, %s74
    %s77 = sphi 0, %s76
    %s91 = sphi 0, %s77
    %s95 = sphi 0, %s95
    %s97 = sphi 0, %s95
    %s98 = sphi 0, %s97
    %s112 = sphi 0, %s98
    %s116 = sphi 0, %s116
    %s118 = sphi 0, %s116
    %s119 = sphi 0, %s118
    %s133 = sphi 0, %s119
    %s139 = sphi 0, %s141
    %s142 = sphi 0, %s139
    %s143 = sphi 0, %s142
    %s159 = sphi 0, %s143
    %s165 = sphi 0, %s167
    %s168 = sphi 0, %s165
    %s169 = sphi 0, %s168
    %s185 = sphi 0, %s169
  $region4: #{resnet_block_pallas_nchw.5} parent=0 // loop_header_branch
    %22 = sbr.rel (%p20) target = $region8
  $region5: #{resnet_block_pallas_nchw.5} parent=0 // loop_body
    %s24 = ssub.s32 %s19, 1
    %s25 = ssub.s32 %s19, 2
    %s26 = sadd.s32 %s19, 1
    %s27 = ssub.s32 %s19, %s26
    %p28 = scmp.eq.s32.totalorder %s27, 0
    %s30 = sadd.s32 %s29, 1
    %s31 = scalar_select %p28, %s29, %s30
    %p34 = pneg %p28
    %p35 = scmp.eq.s32.totalorder %s19, 1
    %p36 = por %p34, %p35
    %p37 = scmp.ne.s32.totalorder %s29, %s32
    %p38 = scmp.eq.s32.totalorder %s19, 0
    %p39 = por %p37, %p38
    %p40 = scmp.ne.s32.totalorder %s29, %s32
    %p41 = scmp.eq.s32.totalorder %s24, 1
    %p42 = por %p40, %p41
    %p43 = scmp.ne.s32.totalorder %s32, %s33
    %p44 = scmp.eq.s32.totalorder %s24, 0
    %p45 = por %p43, %p44
    %p46 = scmp.ne.s32.totalorder %s32, %s33
    %p47 = scmp.eq.s32.totalorder %s25, 1
    %p48 = por %p46, %p47
    %p50 = scmp.ne.s32.totalorder %s33, %s49
    %p51 = scmp.eq.s32.totalorder %s25, 0
    %p52 = por %p50, %p51
    %s54 = sadd.s32 %s53, 1
    %p57 = scmp.eq.s32.totalorder %s19, 1
    %p58 = scmp.ne.s32.totalorder %s53, %s55
    %p59 = scmp.eq.s32.totalorder %s19, 0
    %p60 = por %p58, %p59
    %p61 = scmp.ne.s32.totalorder %s53, %s55
    %p62 = scmp.eq.s32.totalorder %s24, 1
    %p63 = por %p61, %p62
    %p64 = scmp.ne.s32.totalorder %s55, %s56
    %p65 = scmp.eq.s32.totalorder %s24, 0
    %p66 = por %p64, %p65
    %p67 = scmp.ne.s32.totalorder %s55, %s56
    %p68 = scmp.eq.s32.totalorder %s25, 1
    %p69 = por %p67, %p68
    %p71 = scmp.ne.s32.totalorder %s56, %s70
    %p72 = scmp.eq.s32.totalorder %s25, 0
    %p73 = por %p71, %p72
    %s75 = sadd.s32 %s74, 1
    %p78 = scmp.eq.s32.totalorder %s19, 1
    %p79 = scmp.ne.s32.totalorder %s74, %s76
    %p80 = scmp.eq.s32.totalorder %s19, 0
    %p81 = por %p79, %p80
    %p82 = scmp.ne.s32.totalorder %s74, %s76
    %p83 = scmp.eq.s32.totalorder %s24, 1
    %p84 = por %p82, %p83
    %p85 = scmp.ne.s32.totalorder %s76, %s77
    %p86 = scmp.eq.s32.totalorder %s24, 0
    %p87 = por %p85, %p86
    %p88 = scmp.ne.s32.totalorder %s76, %s77
    %p89 = scmp.eq.s32.totalorder %s25, 1
    %p90 = por %p88, %p89
    %p92 = scmp.ne.s32.totalorder %s77, %s91
    %p93 = scmp.eq.s32.totalorder %s25, 0
    %p94 = por %p92, %p93
    %s96 = sadd.s32 %s95, 1
    %p99 = scmp.eq.s32.totalorder %s19, 1
    %p100 = scmp.ne.s32.totalorder %s95, %s97
    %p101 = scmp.eq.s32.totalorder %s19, 0
    %p102 = por %p100, %p101
    %p103 = scmp.ne.s32.totalorder %s95, %s97
    %p104 = scmp.eq.s32.totalorder %s24, 1
    %p105 = por %p103, %p104
    %p106 = scmp.ne.s32.totalorder %s97, %s98
    %p107 = scmp.eq.s32.totalorder %s24, 0
    %p108 = por %p106, %p107
    %p109 = scmp.ne.s32.totalorder %s97, %s98
    %p110 = scmp.eq.s32.totalorder %s25, 1
    %p111 = por %p109, %p110
    %p113 = scmp.ne.s32.totalorder %s98, %s112
    %p114 = scmp.eq.s32.totalorder %s25, 0
    %p115 = por %p113, %p114
    %s117 = sadd.s32 %s116, 1
    %p120 = scmp.eq.s32.totalorder %s19, 1
    %p121 = scmp.ne.s32.totalorder %s116, %s118
    %p122 = scmp.eq.s32.totalorder %s19, 0
    %p123 = por %p121, %p122
    %p124 = scmp.ne.s32.totalorder %s116, %s118
    %p125 = scmp.eq.s32.totalorder %s24, 1
    %p126 = por %p124, %p125
    %p127 = scmp.ne.s32.totalorder %s118, %s119
    %p128 = scmp.eq.s32.totalorder %s24, 0
    %p129 = por %p127, %p128
    %p130 = scmp.ne.s32.totalorder %s118, %s119
    %p131 = scmp.eq.s32.totalorder %s25, 1
    %p132 = por %p130, %p131
    %p134 = scmp.ne.s32.totalorder %s119, %s133
    %p135 = scmp.eq.s32.totalorder %s25, 0
    %p136 = por %p134, %p135
    %s137 = ssub.s32 %s19, %s26
    %p138 = scmp.eq.s32.totalorder %s137, 0
    %s140 = sadd.s32 %s139, 1
    %s141 = scalar_select %p138, %s139, %s140
    %p144 = pneg %p138
    %p145 = scmp.eq.s32.totalorder %s19, 1
    %p146 = por %p144, %p145
    %p147 = scmp.ne.s32.totalorder %s139, %s142
    %p148 = scmp.eq.s32.totalorder %s19, 0
    %p149 = por %p147, %p148
    %p150 = scmp.ne.s32.totalorder %s139, %s142
    %p151 = scmp.eq.s32.totalorder %s24, 1
    %p152 = por %p150, %p151
    %p153 = scmp.ne.s32.totalorder %s142, %s143
    %p154 = scmp.eq.s32.totalorder %s24, 0
    %p155 = por %p153, %p154
    %p156 = scmp.ne.s32.totalorder %s142, %s143
    %p157 = scmp.eq.s32.totalorder %s25, 1
    %p158 = por %p156, %p157
    %p160 = scmp.ne.s32.totalorder %s143, %s159
    %p161 = scmp.eq.s32.totalorder %s25, 0
    %p162 = por %p160, %p161
    %s163 = ssub.s32 %s19, %s26
    %p164 = scmp.eq.s32.totalorder %s163, 0
    %s166 = sadd.s32 %s165, 1
    %s167 = scalar_select %p164, %s165, %s166
    %p170 = pneg %p164
    %p171 = scmp.eq.s32.totalorder %s19, 1
    %p172 = por %p170, %p171
    %p173 = scmp.ne.s32.totalorder %s165, %s168
    %p174 = scmp.eq.s32.totalorder %s19, 0
    %p175 = por %p173, %p174
    %p176 = scmp.ne.s32.totalorder %s165, %s168
    %p177 = scmp.eq.s32.totalorder %s24, 1
    %p178 = por %p176, %p177
    %p179 = scmp.ne.s32.totalorder %s168, %s169
    %p180 = scmp.eq.s32.totalorder %s24, 0
    %p181 = por %p179, %p180
    %p182 = scmp.ne.s32.totalorder %s168, %s169
    %p183 = scmp.eq.s32.totalorder %s25, 1
    %p184 = por %p182, %p183
    %p186 = scmp.ne.s32.totalorder %s169, %s185
    %p187 = scmp.eq.s32.totalorder %s25, 0
    %p188 = por %p186, %p187
    %p189 = scmp.le.s32.totalorder 1, %s19
    %p190 = scmp.lt.s32.totalorder %s19, 3
    %p191 = pnand %p189, %p190
    %p192 = pneg %p191
    // Predicated region
    $region9: #{resnet_block_pallas_nchw.5} parent=5 // pred_check
      _
    $region10: #{resnet_block_pallas_nchw.5} parent=5 // pred_check_branch
      %194 = sbr.rel (%p191) target = $region12
    $region11: #{resnet_block_pallas_nchw.5} parent=5 // pred_region
      %s195 = ssub.s32 %s19, 1
      // Predicated region
      $region13: #{resnet_block_pallas_nchw.5} parent=11 // pred_check
        %p196 = pneg %p66
      $region14: #{resnet_block_pallas_nchw.5} parent=11 // pred_check_branch
        %198 = sbr.rel (%p196) target = $region16
      $region15: #{resnet_block_pallas_nchw.5} parent=11 // pred_region
        _
      $region16: #{resnet_block_pallas_nchw.5} parent=11 // pred_fallthru
        _
      // Predicated region
      $region17: #{resnet_block_pallas_nchw.5} parent=11 // pred_check
        %p199 = pneg %p87
      $region18: #{resnet_block_pallas_nchw.5} parent=11 // pred_check_branch
        %201 = sbr.rel (%p199) target = $region20
      $region19: #{resnet_block_pallas_nchw.5} parent=11 // pred_region
        _
      $region20: #{resnet_block_pallas_nchw.5} parent=11 // pred_fallthru
        _
      // Predicated region
      $region21: #{resnet_block_pallas_nchw.5} parent=11 // pred_check
        %p202 = pneg %p108
      $region22: #{resnet_block_pallas_nchw.5} parent=11 // pred_check_branch
        %204 = sbr.rel (%p202) target = $region24
      $region23: #{resnet_block_pallas_nchw.5} parent=11 // pred_region
        _
      $region24: #{resnet_block_pallas_nchw.5} parent=11 // pred_fallthru
        _
      // Predicated region
      $region25: #{resnet_block_pallas_nchw.5} parent=11 // pred_check
        %p205 = pneg %p129
      $region26: #{resnet_block_pallas_nchw.5} parent=11 // pred_check_branch
        %207 = sbr.rel (%p205) target = $region28
      $region27: #{resnet_block_pallas_nchw.5} parent=11 // pred_region
        _
      $region28: #{resnet_block_pallas_nchw.5} parent=11 // pred_fallthru
        _
    $region12: #{resnet_block_pallas_nchw.5} parent=5 // pred_fallthru
      _
    %p208 = scmp.lt.s32.totalorder %s19, 2
    // Predicated region
    $region29: #{resnet_block_pallas_nchw.5} parent=5 // pred_check
      %p209 = pneg %p208
    $region30: #{resnet_block_pallas_nchw.5} parent=5 // pred_check_branch
      %211 = sbr.rel (%p209) target = $region32
    $region31: #{resnet_block_pallas_nchw.5} parent=5 // pred_region
      // Predicated region
      $region33: #{resnet_block_pallas_nchw.5} parent=31 // pred_check
        %p212 = pneg %p39
      $region34: #{resnet_block_pallas_nchw.5} parent=31 // pred_check_branch
        %214 = sbr.rel (%p212) target = $region36
      $region35: #{resnet_block_pallas_nchw.5} parent=31 // pred_region
        %p215 = scmp.lt.s32.totalorder %s19, 1
        %s216 = scalar_select %p215, %s19, 1
        %s217 = smul.addr %s216, 32
        %s218 = smul.addr %s217, 4
        %s219 = scalar_lea.vmem %s0, %s218
      $region36: #{resnet_block_pallas_nchw.5} parent=31 // pred_fallthru
        _
    $region32: #{resnet_block_pallas_nchw.5} parent=5 // pred_fallthru
      _
    %p220 = scmp.le.s32.totalorder 1, %s19
    %p221 = scmp.lt.s32.totalorder %s19, 3
    %p222 = pnand %p220, %p221
    %p223 = pneg %p222
    // Predicated region
    $region37: #{resnet_block_pallas_nchw.5} parent=5 // pred_check
      _
    $region38: #{resnet_block_pallas_nchw.5} parent=5 // pred_check_branch
      %225 = sbr.rel (%p222) target = $region40
    $region39: #{resnet_block_pallas_nchw.5} parent=5 // pred_region
      %s226 = ssub.s32 %s19, 1
      %p227 = scmp.lt.s32.totalorder %s24, 1
      %s228 = scalar_select %p227, %s24, 1
      %s229 = smul.addr %s228, 32
      %s230 = smul.addr %s229, 4
      %s231 = scalar_lea.vmem %s0, %s230
      %p232 = pneg %p45
      %p233 = pneg %p42
      %p234 = pneg %p66
      %p235 = pneg %p63
      %p236 = pneg %p87
      %p237 = pneg %p84
      %p238 = pneg %p108
      %p239 = pneg %p105
      %p240 = pneg %p129
      %p241 = pneg %p126
      %p242 = pneg %p155
      %p243 = pneg %p152
      %p244 = scmp.lt.s32.totalorder %s24, 1
      %s245 = scalar_select %p244, %s24, 1
      %s246 = smul.addr %s245, 32
      %s247 = smul.addr %s246, 4
      %s248 = scalar_lea.vmem %s5, %s247
      %p249 = pneg %p181
      %p250 = pneg %p178
      %p251 = scmp.lt.s32.totalorder %s24, 1
      %s252 = scalar_select %p251, %s24, 1
      %s253 = smul.addr %s252, 2
      %s254 = scalar_lea.vmem %s6, %s253
      %p255 = scmp.lt.s32.totalorder %s24, 1
      %s256 = scalar_select %p255, %s24, 1
      %s257 = smul.addr %s256, 32
      %s258 = smul.addr %s257, 4
      %s259 = scalar_lea.vmem %s0, %s258
      %p260 = scmp.lt.s32.totalorder %s24, 1
      %s261 = scalar_select %p260, %s24, 1
      %s262 = smul.addr %s261, 32
      %s263 = smul.addr %s262, 4
      %s264 = scalar_lea.vmem %s5, %s263
      %p265 = scmp.lt.s32.totalorder %s24, 1
      %s266 = scalar_select %p265, %s24, 1
      %s267 = smul.addr %s266, 2
      %s268 = scalar_lea.vmem %s6, %s267
      %v270 = vld [vmem:[%s259] sm:$0xf]
      %v271 = vld [vmem:[%s259 + $0x4] sm:$0xf]
      %v272 = vld [vmem:[%s259 + $0x8] sm:$0xf]
      %v273 = vld [vmem:[%s259 + $0xc] sm:$0xf]
      %v274 = vld [vmem:[%s259 + $0x10] sm:$0xf]
      %v275 = vld [vmem:[%s259 + $0x14] sm:$0xf]
      %v276 = vld [vmem:[%s259 + $0x18] sm:$0xf]
      %v277 = vld [vmem:[%s259 + $0x1c] sm:$0xf]
      %v278 = vld [vmem:[%s259 + $0x20] sm:$0xf]
      %v279 = vld [vmem:[%s259 + $0x24] sm:$0xf]
      %v280 = vld [vmem:[%s259 + $0x28] sm:$0xf]
      %v281 = vld [vmem:[%s259 + $0x2c] sm:$0xf]
      %v282 = vld [vmem:[%s259 + $0x30] sm:$0xf]
      %v283 = vld [vmem:[%s259 + $0x34] sm:$0xf]
      %v284 = vld [vmem:[%s259 + $0x38] sm:$0xf]
      %v285 = vld [vmem:[%s259 + $0x3c] sm:$0xf]
      %v286 = vld [vmem:[%s259 + $0x40] sm:$0xf]
      %v287 = vld [vmem:[%s259 + $0x44] sm:$0xf]
      %v288 = vld [vmem:[%s259 + $0x48] sm:$0xf]
      %v289 = vld [vmem:[%s259 + $0x4c] sm:$0xf]
      %v290 = vld [vmem:[%s259 + $0x50] sm:$0xf]
      %v291 = vld [vmem:[%s259 + $0x54] sm:$0xf]
      %v292 = vld [vmem:[%s259 + $0x58] sm:$0xf]
      %v293 = vld [vmem:[%s259 + $0x5c] sm:$0xf]
      %v294 = vld [vmem:[%s259 + $0x60] sm:$0xf]
      %v295 = vld [vmem:[%s259 + $0x64] sm:$0xf]
      %v296 = vld [vmem:[%s259 + $0x68] sm:$0xf]
      %v297 = vld [vmem:[%s259 + $0x6c] sm:$0xf]
      %v298 = vld [vmem:[%s259 + $0x70] sm:$0xf]
      %v299 = vld [vmem:[%s259 + $0x74] sm:$0xf]
      %v300 = vld [vmem:[%s259 + $0x78] sm:$0xf]
      %v301 = vld [vmem:[%s259 + $0x7c] sm:$0xf]
      %v302 = vld [vmem:[#allocation3] sm:$0x1]
      %v303 = vunpack.c.l.bf16 %v270
      %v304 = vunpack.c.l.bf16 %v271
      %v305 = vunpack.c.l.bf16 %v272
      %v306 = vunpack.c.l.bf16 %v273
      %v307 = vunpack.c.l.bf16 %v274
      %v308 = vunpack.c.l.bf16 %v275
      %v309 = vunpack.c.l.bf16 %v276
      %v310 = vunpack.c.l.bf16 %v277
      %v311 = vunpack.c.l.bf16 %v278
      %v312 = vunpack.c.l.bf16 %v279
      %v313 = vunpack.c.l.bf16 %v280
      %v314 = vunpack.c.l.bf16 %v281
      %v315 = vunpack.c.l.bf16 %v282
      %v316 = vunpack.c.l.bf16 %v283
      %v317 = vunpack.c.l.bf16 %v284
      %v318 = vunpack.c.l.bf16 %v285
      %v319 = vunpack.c.l.bf16 %v286
      %v320 = vunpack.c.l.bf16 %v287
      %v321 = vunpack.c.l.bf16 %v288
      %v322 = vunpack.c.l.bf16 %v289
      %v323 = vunpack.c.l.bf16 %v290
      %v324 = vunpack.c.l.bf16 %v291
      %v325 = vunpack.c.l.bf16 %v292
      %v326 = vunpack.c.l.bf16 %v293
      %v327 = vunpack.c.l.bf16 %v294
      %v328 = vunpack.c.l.bf16 %v295
      %v329 = vunpack.c.l.bf16 %v296
      %v330 = vunpack.c.l.bf16 %v297
      %v331 = vunpack.c.l.bf16 %v298
      %v332 = vunpack.c.l.bf16 %v299
      %v333 = vunpack.c.l.bf16 %v300
      %v334 = vunpack.c.l.bf16 %v301
      %v336 = vlaneseq
      %v337 = vshrl.u32 %v336, 7
      %v338 = vsub.s32 0, %v337
      %v339 = vrot.slane %v302, %v338
      %v341 = vmul.f32 %v303, %v339
      %v342 = vmul.f32 %v304, %v339
      %v343 = vmul.f32 %v305, %v339
      %v344 = vmul.f32 %v306, %v339
      %v345 = vmul.f32 %v307, %v339
      %v346 = vmul.f32 %v308, %v339
      %v347 = vmul.f32 %v309, %v339
      %v348 = vmul.f32 %v310, %v339
      %v349 = vmul.f32 %v311, %v339
      %v350 = vmul.f32 %v312, %v339
      %v351 = vmul.f32 %v313, %v339
      %v352 = vmul.f32 %v314, %v339
      %v353 = vmul.f32 %v315, %v339
      %v354 = vmul.f32 %v316, %v339
      %v355 = vmul.f32 %v317, %v339
      %v356 = vmul.f32 %v318, %v339
      %v357 = vmul.f32 %v319, %v339
      %v358 = vmul.f32 %v320, %v339
      %v359 = vmul.f32 %v321, %v339
      %v360 = vmul.f32 %v322, %v339
      %v361 = vmul.f32 %v323, %v339
      %v362 = vmul.f32 %v324, %v339
      %v363 = vmul.f32 %v325, %v339
      %v364 = vmul.f32 %v326, %v339
      %v365 = vmul.f32 %v327, %v339
      %v366 = vmul.f32 %v328, %v339
      %v367 = vmul.f32 %v329, %v339
      %v368 = vmul.f32 %v330, %v339
      %v369 = vmul.f32 %v331, %v339
      %v370 = vmul.f32 %v332, %v339
      %v371 = vmul.f32 %v333, %v339
      %v372 = vmul.f32 %v334, %v339
      %v373 = vld [vmem:[#allocation4] sm:$0x1]
      %v375 = vlaneseq
      %v376 = vshrl.u32 %v375, 7
      %v377 = vsub.s32 0, %v376
      %v378 = vrot.slane %v373, %v377
      %v380 = vadd.f32 %v341, %v378
      %v381 = vadd.f32 %v342, %v378
      %v382 = vadd.f32 %v343, %v378
      %v383 = vadd.f32 %v344, %v378
      %v384 = vadd.f32 %v345, %v378
      %v385 = vadd.f32 %v346, %v378
      %v386 = vadd.f32 %v347, %v378
      %v387 = vadd.f32 %v348, %v378
      %v388 = vadd.f32 %v349, %v378
      %v389 = vadd.f32 %v350, %v378
      %v390 = vadd.f32 %v351, %v378
      %v391 = vadd.f32 %v352, %v378
      %v392 = vadd.f32 %v353, %v378
      %v393 = vadd.f32 %v354, %v378
      %v394 = vadd.f32 %v355, %v378
      %v395 = vadd.f32 %v356, %v378
      %v396 = vadd.f32 %v357, %v378
      %v397 = vadd.f32 %v358, %v378
      %v398 = vadd.f32 %v359, %v378
      %v399 = vadd.f32 %v360, %v378
      %v400 = vadd.f32 %v361, %v378
      %v401 = vadd.f32 %v362, %v378
      %v402 = vadd.f32 %v363, %v378
      %v403 = vadd.f32 %v364, %v378
      %v404 = vadd.f32 %v365, %v378
      %v405 = vadd.f32 %v366, %v378
      %v406 = vadd.f32 %v367, %v378
      %v407 = vadd.f32 %v368, %v378
      %v408 = vadd.f32 %v369, %v378
      %v409 = vadd.f32 %v370, %v378
      %v410 = vadd.f32 %v371, %v378
      %v411 = vadd.f32 %v372, %v378
      %v412 = vmax.f32 %v380, 0.0
      %v413 = vmax.f32 %v381, 0.0
      %v414 = vmax.f32 %v382, 0.0
      %v415 = vmax.f32 %v383, 0.0
      %v416 = vmax.f32 %v384, 0.0
      %v417 = vmax.f32 %v385, 0.0
      %v418 = vmax.f32 %v386, 0.0
      %v419 = vmax.f32 %v387, 0.0
      %v420 = vmax.f32 %v388, 0.0
      %v421 = vmax.f32 %v389, 0.0
      %v422 = vmax.f32 %v390, 0.0
      %v423 = vmax.f32 %v391, 0.0
      %v424 = vmax.f32 %v392, 0.0
      %v425 = vmax.f32 %v393, 0.0
      %v426 = vmax.f32 %v394, 0.0
      %v427 = vmax.f32 %v395, 0.0
      %v428 = vmax.f32 %v396, 0.0
      %v429 = vmax.f32 %v397, 0.0
      %v430 = vmax.f32 %v398, 0.0
      %v431 = vmax.f32 %v399, 0.0
      %v432 = vmax.f32 %v400, 0.0
      %v433 = vmax.f32 %v401, 0.0
      %v434 = vmax.f32 %v402, 0.0
      %v435 = vmax.f32 %v403, 0.0
      %v436 = vmax.f32 %v404, 0.0
      %v437 = vmax.f32 %v405, 0.0
      %v438 = vmax.f32 %v406, 0.0
      %v439 = vmax.f32 %v407, 0.0
      %v440 = vmax.f32 %v408, 0.0
      %v441 = vmax.f32 %v409, 0.0
      %v442 = vmax.f32 %v410, 0.0
      %v443 = vmax.f32 %v411, 0.0
      %v444 = vpack.c.bf16 %v413, %v412
      %v445 = vpack.c.bf16 %v415, %v414
      %v446 = vpack.c.bf16 %v417, %v416
      %v447 = vpack.c.bf16 %v419, %v418
      %v448 = vpack.c.bf16 %v421, %v420
      %v449 = vpack.c.bf16 %v423, %v422
      %v450 = vpack.c.bf16 %v425, %v424
      %v451 = vpack.c.bf16 %v427, %v426
      %v452 = vpack.c.bf16 %v429, %v428
      %v453 = vpack.c.bf16 %v431, %v430
      %v454 = vpack.c.bf16 %v433, %v432
      %v455 = vpack.c.bf16 %v435, %v434
      %v456 = vpack.c.bf16 %v437, %v436
      %v457 = vpack.c.bf16 %v439, %v438
      %v458 = vpack.c.bf16 %v441, %v440
      %v459 = vpack.c.bf16 %v443, %v442
      %vm460 = vcmask 3072
      %461 = vst.msk [vmem:[#allocation2] sm:$0xf] %vm460, 0
      %462 = vst.msk [vmem:[#allocation2 + $0x4] sm:$0xf] %vm460, 0
      %vm463 = vcmask 0
      %464 = vst.msk [vmem:[#allocation2 + $0x8] sm:$0x1] %vm463, 0
      %s465 = scalar_lea.vmem [#allocation2], 204
      %466 = vst.msk [vmem:[%s465] sm:$0xf] %vm460, 0
      %467 = vst.msk [vmem:[%s465 + $0x4] sm:$0xf] %vm460, 0
      %468 = vst.msk [vmem:[%s465 + $0x8] sm:$0x1] %vm463, 0
      %v470 = vshrl.u32 %v444, 16
      %v472 = vrot.slane %v470, 7
      %v473 = vshll.u32 %v444, 16
      %v475 = vor.u32 %v472, %v473
      %v477 = vshrl.u32 %v445, 16
      %v479 = vrot.slane %v477, 7
      %v480 = vshll.u32 %v445, 16
      %v482 = vor.u32 %v479, %v480
      %v484 = vshrl.u32 %v446, 16
      %v486 = vrot.slane %v484, 7
      %v487 = vshll.u32 %v446, 16
      %v489 = vor.u32 %v486, %v487
      %v491 = vshrl.u32 %v447, 16
      %v493 = vrot.slane %v491, 7
      %v494 = vshll.u32 %v447, 16
      %v496 = vor.u32 %v493, %v494
      %v498 = vshrl.u32 %v448, 16
      %v500 = vrot.slane %v498, 7
      %v501 = vshll.u32 %v448, 16
      %v503 = vor.u32 %v500, %v501
      %v505 = vshrl.u32 %v449, 16
      %v507 = vrot.slane %v505, 7
      %v508 = vshll.u32 %v449, 16
      %v510 = vor.u32 %v507, %v508
      %v512 = vshrl.u32 %v450, 16
      %v514 = vrot.slane %v512, 7
      %v515 = vshll.u32 %v450, 16
      %v517 = vor.u32 %v514, %v515
      %v519 = vshrl.u32 %v451, 16
      %v521 = vrot.slane %v519, 7
      %v522 = vshll.u32 %v451, 16
      %v524 = vor.u32 %v521, %v522
      %v526 = vshrl.u32 %v452, 16
      %v528 = vrot.slane %v526, 7
      %v529 = vshll.u32 %v452, 16
      %v531 = vor.u32 %v528, %v529
      %v533 = vshrl.u32 %v453, 16
      %v535 = vrot.slane %v533, 7
      %v536 = vshll.u32 %v453, 16
      %v538 = vor.u32 %v535, %v536
      %v540 = vshrl.u32 %v454, 16
      %v542 = vrot.slane %v540, 7
      %v543 = vshll.u32 %v454, 16
      %v545 = vor.u32 %v542, %v543
      %v547 = vshrl.u32 %v455, 16
      %v549 = vrot.slane %v547, 7
      %v550 = vshll.u32 %v455, 16
      %v552 = vor.u32 %v549, %v550
      %v554 = vshrl.u32 %v456, 16
      %v556 = vrot.slane %v554, 7
      %v557 = vshll.u32 %v456, 16
      %v559 = vor.u32 %v556, %v557
      %v561 = vshrl.u32 %v457, 16
      %v563 = vrot.slane %v561, 7
      %v564 = vshll.u32 %v457, 16
      %v566 = vor.u32 %v563, %v564
      %v568 = vshrl.u32 %v458, 16
      %v570 = vrot.slane %v568, 7
      %v571 = vshll.u32 %v458, 16
      %v573 = vor.u32 %v570, %v571
      %v575 = vshrl.u32 %v459, 16
      %v577 = vrot.slane %v575, 7
      %v578 = vshll.u32 %v459, 16
      %v580 = vor.u32 %v577, %v578
      %vm613 = vcmask 1040384
      %vm614 = vsmask.f32 256
      %vm615 = vmand %vm613, %vm614
      %v616 = vsel %vm615, 0, %v475
      %v617 = vsel %vm615, 0, %v482
      %v618 = vsel %vm615, 0, %v489
      %v619 = vsel %vm615, 0, %v496
      %v620 = vsel %vm615, 0, %v503
      %v621 = vsel %vm615, 0, %v510
      %v622 = vsel %vm615, 0, %v517
      %v623 = vsel %vm615, 0, %v524
      %v624 = vsel %vm615, 0, %v531
      %v625 = vsel %vm615, 0, %v538
      %v626 = vsel %vm615, 0, %v545
      %v627 = vsel %vm615, 0, %v552
      %v628 = vsel %vm615, 0, %v559
      %v629 = vsel %vm615, 0, %v566
      %v630 = vsel %vm615, 0, %v573
      %v631 = vsel %vm615, 0, %v580
      %v632 = vsel %vm615, %v472, 0
      %v633 = vsel %vm615, %v479, 0
      %v634 = vsel %vm615, %v486, 0
      %v635 = vsel %vm615, %v493, 0
      %v636 = vsel %vm615, %v500, 0
      %v637 = vsel %vm615, %v507, 0
      %v638 = vsel %vm615, %v514, 0
      %v639 = vsel %vm615, %v521, 0
      %v640 = vsel %vm615, %v528, 0
      %v641 = vsel %vm615, %v535, 0
      %v642 = vsel %vm615, %v542, 0
      %v643 = vsel %vm615, %v549, 0
      %v644 = vsel %vm615, %v556, 0
      %v645 = vsel %vm615, %v563, 0
      %v646 = vsel %vm615, %v570, 0
      %v647 = vsel %vm615, %v577, 0
      %v680 = vunpack.c.l.b16 %v616
      %v681 = vunpack.c.h.b16 %v616
      %v682 = vunpack.c.l.b16 %v632
      %v683 = vunpack.c.l.b16 %v617
      %v684 = vunpack.c.h.b16 %v617
      %v685 = vunpack.c.l.b16 %v633
      %v686 = vunpack.c.l.b16 %v618
      %v687 = vunpack.c.h.b16 %v618
      %v688 = vunpack.c.l.b16 %v634
      %v689 = vunpack.c.l.b16 %v619
      %v690 = vunpack.c.h.b16 %v619
      %v691 = vunpack.c.l.b16 %v635
      %v692 = vunpack.c.l.b16 %v620
      %v693 = vunpack.c.h.b16 %v620
      %v694 = vunpack.c.l.b16 %v636
      %v695 = vunpack.c.l.b16 %v621
      %v696 = vunpack.c.h.b16 %v621
      %v697 = vunpack.c.l.b16 %v637
      %v698 = vunpack.c.l.b16 %v622
      %v699 = vunpack.c.h.b16 %v622
      %v700 = vunpack.c.l.b16 %v638
      %v701 = vunpack.c.l.b16 %v623
      %v702 = vunpack.c.h.b16 %v623
      %v703 = vunpack.c.l.b16 %v639
      %v704 = vunpack.c.l.b16 %v624
      %v705 = vunpack.c.h.b16 %v624
      %v706 = vunpack.c.l.b16 %v640
      %v707 = vunpack.c.l.b16 %v625
      %v708 = vunpack.c.h.b16 %v625
      %v709 = vunpack.c.l.b16 %v641
      %v710 = vunpack.c.l.b16 %v626
      %v711 = vunpack.c.h.b16 %v626
      %v712 = vunpack.c.l.b16 %v642
      %v713 = vunpack.c.l.b16 %v627
      %v714 = vunpack.c.h.b16 %v627
      %v715 = vunpack.c.l.b16 %v643
      %v716 = vunpack.c.l.b16 %v628
      %v717 = vunpack.c.h.b16 %v628
      %v718 = vunpack.c.l.b16 %v644
      %v719 = vunpack.c.l.b16 %v629
      %v720 = vunpack.c.h.b16 %v629
      %v721 = vunpack.c.l.b16 %v645
      %v722 = vunpack.c.l.b16 %v630
      %v723 = vunpack.c.h.b16 %v630
      %v724 = vunpack.c.l.b16 %v646
      %v725 = vunpack.c.l.b16 %v631
      %v726 = vunpack.c.h.b16 %v631
      %v727 = vunpack.c.l.b16 %v647
      %v728 = vpack.c.b16 %v680, %v680
      %v729 = vpack.c.b16 %v681, %v681
      %v730 = vpack.c.b16 %v682, %v682
      %v731 = vpack.c.b16 %v683, %v683
      %v732 = vpack.c.b16 %v684, %v684
      %v733 = vpack.c.b16 %v685, %v685
      %v734 = vpack.c.b16 %v686, %v686
      %v735 = vpack.c.b16 %v687, %v687
      %v736 = vpack.c.b16 %v688, %v688
      %v737 = vpack.c.b16 %v689, %v689
      %v738 = vpack.c.b16 %v690, %v690
      %v739 = vpack.c.b16 %v691, %v691
      %v740 = vpack.c.b16 %v692, %v692
      %v741 = vpack.c.b16 %v693, %v693
      %v742 = vpack.c.b16 %v694, %v694
      %v743 = vpack.c.b16 %v695, %v695
      %v744 = vpack.c.b16 %v696, %v696
      %v745 = vpack.c.b16 %v697, %v697
      %v746 = vpack.c.b16 %v698, %v698
      %v747 = vpack.c.b16 %v699, %v699
      %v748 = vpack.c.b16 %v700, %v700
      %v749 = vpack.c.b16 %v701, %v701
      %v750 = vpack.c.b16 %v702, %v702
      %v751 = vpack.c.b16 %v703, %v703
      %v752 = vpack.c.b16 %v704, %v704
      %v753 = vpack.c.b16 %v705, %v705
      %v754 = vpack.c.b16 %v706, %v706
      %v755 = vpack.c.b16 %v707, %v707
      %v756 = vpack.c.b16 %v708, %v708
      %v757 = vpack.c.b16 %v709, %v709
      %v758 = vpack.c.b16 %v710, %v710
      %v759 = vpack.c.b16 %v711, %v711
      %v760 = vpack.c.b16 %v712, %v712
      %v761 = vpack.c.b16 %v713, %v713
      %v762 = vpack.c.b16 %v714, %v714
      %v763 = vpack.c.b16 %v715, %v715
      %v764 = vpack.c.b16 %v716, %v716
      %v765 = vpack.c.b16 %v717, %v717
      %v766 = vpack.c.b16 %v718, %v718
      %v767 = vpack.c.b16 %v719, %v719
      %v768 = vpack.c.b16 %v720, %v720
      %v769 = vpack.c.b16 %v721, %v721
      %v770 = vpack.c.b16 %v722, %v722
      %v771 = vpack.c.b16 %v723, %v723
      %v772 = vpack.c.b16 %v724, %v724
      %v773 = vpack.c.b16 %v725, %v725
      %v774 = vpack.c.b16 %v726, %v726
      %v775 = vpack.c.b16 %v727, %v727
      %s824 = scalar_lea.vmem [#allocation2], 12
      %825 = vst.msk [vmem:[%s824] sm:$0xf] %vm460, %v728
      %826 = vst.msk [vmem:[%s824 + $0x4] sm:$0xf] %vm460, %v729
      %827 = vst.msk [vmem:[%s824 + $0x8] sm:$0x1] %vm463, %v730
      %828 = vst.msk [vmem:[%s824 + $0xc] sm:$0xf] %vm460, %v731
      %829 = vst.msk [vmem:[%s824 + $0x10] sm:$0xf] %vm460, %v732
      %830 = vst.msk [vmem:[%s824 + $0x14] sm:$0x1] %vm463, %v733
      %831 = vst.msk [vmem:[%s824 + $0x18] sm:$0xf] %vm460, %v734
      %832 = vst.msk [vmem:[%s824 + $0x1c] sm:$0xf] %vm460, %v735
      %833 = vst.msk [vmem:[%s824 + $0x20] sm:$0x1] %vm463, %v736
      %834 = vst.msk [vmem:[%s824 + $0x24] sm:$0xf] %vm460, %v737
      %835 = vst.msk [vmem:[%s824 + $0x28] sm:$0xf] %vm460, %v738
      %836 = vst.msk [vmem:[%s824 + $0x2c] sm:$0x1] %vm463, %v739
      %837 = vst.msk [vmem:[%s824 + $0x30] sm:$0xf] %vm460, %v740
      %838 = vst.msk [vmem:[%s824 + $0x34] sm:$0xf] %vm460, %v741
      %839 = vst.msk [vmem:[%s824 + $0x38] sm:$0x1] %vm463, %v742
      %840 = vst.msk [vmem:[%s824 + $0x3c] sm:$0xf] %vm460, %v743
      %841 = vst.msk [vmem:[%s824 + $0x40] sm:$0xf] %vm460, %v744
      %842 = vst.msk [vmem:[%s824 + $0x44] sm:$0x1] %vm463, %v745
      %843 = vst.msk [vmem:[%s824 + $0x48] sm:$0xf] %vm460, %v746
      %844 = vst.msk [vmem:[%s824 + $0x4c] sm:$0xf] %vm460, %v747
      %845 = vst.msk [vmem:[%s824 + $0x50] sm:$0x1] %vm463, %v748
      %846 = vst.msk [vmem:[%s824 + $0x54] sm:$0xf] %vm460, %v749
      %847 = vst.msk [vmem:[%s824 + $0x58] sm:$0xf] %vm460, %v750
      %848 = vst.msk [vmem:[%s824 + $0x5c] sm:$0x1] %vm463, %v751
      %849 = vst.msk [vmem:[%s824 + $0x60] sm:$0xf] %vm460, %v752
      %850 = vst.msk [vmem:[%s824 + $0x64] sm:$0xf] %vm460, %v753
      %851 = vst.msk [vmem:[%s824 + $0x68] sm:$0x1] %vm463, %v754
      %852 = vst.msk [vmem:[%s824 + $0x6c] sm:$0xf] %vm460, %v755
      %853 = vst.msk [vmem:[%s824 + $0x70] sm:$0xf] %vm460, %v756
      %854 = vst.msk [vmem:[%s824 + $0x74] sm:$0x1] %vm463, %v757
      %855 = vst.msk [vmem:[%s824 + $0x78] sm:$0xf] %vm460, %v758
      %856 = vst.msk [vmem:[%s824 + $0x7c] sm:$0xf] %vm460, %v759
      %857 = vst.msk [vmem:[%s824 + $0x80] sm:$0x1] %vm463, %v760
      %858 = vst.msk [vmem:[%s824 + $0x84] sm:$0xf] %vm460, %v761
      %859 = vst.msk [vmem:[%s824 + $0x88] sm:$0xf] %vm460, %v762
      %860 = vst.msk [vmem:[%s824 + $0x8c] sm:$0x1] %vm463, %v763
      %861 = vst.msk [vmem:[%s824 + $0x90] sm:$0xf] %vm460, %v764
      %862 = vst.msk [vmem:[%s824 + $0x94] sm:$0xf] %vm460, %v765
      %863 = vst.msk [vmem:[%s824 + $0x98] sm:$0x1] %vm463, %v766
      %864 = vst.msk [vmem:[%s824 + $0x9c] sm:$0xf] %vm460, %v767
      %865 = vst.msk [vmem:[%s824 + $0xa0] sm:$0xf] %vm460, %v768
      %866 = vst.msk [vmem:[%s824 + $0xa4] sm:$0x1] %vm463, %v769
      %867 = vst.msk [vmem:[%s824 + $0xa8] sm:$0xf] %vm460, %v770
      %868 = vst.msk [vmem:[%s824 + $0xac] sm:$0xf] %vm460, %v771
      %869 = vst.msk [vmem:[%s824 + $0xb0] sm:$0x1] %vm463, %v772
      %870 = vst.msk [vmem:[%s824 + $0xb4] sm:$0xf] %vm460, %v773
      %871 = vst.msk [vmem:[%s824 + $0xb8] sm:$0xf] %vm460, %v774
      %872 = vst.msk [vmem:[%s824 + $0xbc] sm:$0x1] %vm463, %v775
      %v873 = vld [vmem:[#allocation2] sm:$0xf]
      %v874 = vld [vmem:[#allocation2 + $0x4] sm:$0xf]
      %v875 = vld [vmem:[#allocation2 + $0xc] sm:$0xf]
      %v876 = vld [vmem:[#allocation2 + $0x10] sm:$0xf]
      %v877 = vld [vmem:[#allocation2 + $0x18] sm:$0xf]
      %v878 = vld [vmem:[#allocation2 + $0x1c] sm:$0xf]
      %v879 = vld [vmem:[#allocation2 + $0x24] sm:$0xf]
      %v880 = vld [vmem:[#allocation2 + $0x28] sm:$0xf]
      %v881 = vld [vmem:[#allocation2 + $0x30] sm:$0xf]
      %v882 = vld [vmem:[#allocation2 + $0x34] sm:$0xf]
      %v883 = vld [vmem:[#allocation2 + $0x3c] sm:$0xf]
      %v884 = vld [vmem:[#allocation2 + $0x40] sm:$0xf]
      %v885 = vld [vmem:[#allocation2 + $0x48] sm:$0xf]
      %v886 = vld [vmem:[#allocation2 + $0x4c] sm:$0xf]
      %v887 = vld [vmem:[#allocation2 + $0x54] sm:$0xf]
      %v888 = vld [vmem:[#allocation2 + $0x58] sm:$0xf]
      %v889 = vld [vmem:[#allocation2 + $0x60] sm:$0xf]
      %v890 = vld [vmem:[#allocation2 + $0x64] sm:$0xf]
      %v891 = vld [vmem:[#allocation2 + $0x6c] sm:$0xf]
      %v892 = vld [vmem:[#allocation2 + $0x70] sm:$0xf]
      %v893 = vld [vmem:[#allocation2 + $0x78] sm:$0xf]
      %v894 = vld [vmem:[#allocation2 + $0x7c] sm:$0xf]
      %v895 = vld [vmem:[#allocation2 + $0x84] sm:$0xf]
      %v896 = vld [vmem:[#allocation2 + $0x88] sm:$0xf]
      %v897 = vld [vmem:[#allocation2 + $0x90] sm:$0xf]
      %v898 = vld [vmem:[#allocation2 + $0x94] sm:$0xf]
      %v899 = vld [vmem:[#allocation2 + $0x9c] sm:$0xf]
      %v900 = vld [vmem:[#allocation2 + $0xa0] sm:$0xf]
      %v901 = vld [vmem:[#allocation2 + $0xa8] sm:$0xf]
      %v902 = vld [vmem:[#allocation2 + $0xac] sm:$0xf]
      %v903 = vld [vmem:[#allocation2 + $0xb4] sm:$0xf]
      %v904 = vld [vmem:[#allocation2 + $0xb8] sm:$0xf]
      %v905 = vld [vmem:[%s824] sm:$0xf]
      %v906 = vld [vmem:[%s824 + $0x4] sm:$0xf]
      %v907 = vld [vmem:[%s824 + $0xc] sm:$0xf]
      %v908 = vld [vmem:[%s824 + $0x10] sm:$0xf]
      %v909 = vld [vmem:[%s824 + $0x18] sm:$0xf]
      %v910 = vld [vmem:[%s824 + $0x1c] sm:$0xf]
      %v911 = vld [vmem:[%s824 + $0x24] sm:$0xf]
      %v912 = vld [vmem:[%s824 + $0x28] sm:$0xf]
      %v913 = vld [vmem:[%s824 + $0x30] sm:$0xf]
      %v914 = vld [vmem:[%s824 + $0x34] sm:$0xf]
      %v915 = vld [vmem:[%s824 + $0x3c] sm:$0xf]
      %v916 = vld [vmem:[%s824 + $0x40] sm:$0xf]
      %v917 = vld [vmem:[%s824 + $0x48] sm:$0xf]
      %v918 = vld [vmem:[%s824 + $0x4c] sm:$0xf]
      %v919 = vld [vmem:[%s824 + $0x54] sm:$0xf]
      %v920 = vld [vmem:[%s824 + $0x58] sm:$0xf]
      %v921 = vld [vmem:[%s824 + $0x60] sm:$0xf]
      %v922 = vld [vmem:[%s824 + $0x64] sm:$0xf]
      %v923 = vld [vmem:[%s824 + $0x6c] sm:$0xf]
      %v924 = vld [vmem:[%s824 + $0x70] sm:$0xf]
      %v925 = vld [vmem:[%s824 + $0x78] sm:$0xf]
      %v926 = vld [vmem:[%s824 + $0x7c] sm:$0xf]
      %v927 = vld [vmem:[%s824 + $0x84] sm:$0xf]
      %v928 = vld [vmem:[%s824 + $0x88] sm:$0xf]
      %v929 = vld [vmem:[%s824 + $0x90] sm:$0xf]
      %v930 = vld [vmem:[%s824 + $0x94] sm:$0xf]
      %v931 = vld [vmem:[%s824 + $0x9c] sm:$0xf]
      %v932 = vld [vmem:[%s824 + $0xa0] sm:$0xf]
      %v933 = vld [vmem:[%s824 + $0xa8] sm:$0xf]
      %v934 = vld [vmem:[%s824 + $0xac] sm:$0xf]
      %v935 = vld [vmem:[%s824 + $0xb4] sm:$0xf]
      %v936 = vld [vmem:[%s824 + $0xb8] sm:$0xf]
      %s937 = scalar_lea.vmem [#allocation2], 24
      %v938 = vld [vmem:[%s937] sm:$0xf]
      %v939 = vld [vmem:[%s937 + $0x4] sm:$0xf]
      %v940 = vld [vmem:[%s937 + $0xc] sm:$0xf]
      %v941 = vld [vmem:[%s937 + $0x10] sm:$0xf]
      %v942 = vld [vmem:[%s937 + $0x18] sm:$0xf]
      %v943 = vld [vmem:[%s937 + $0x1c] sm:$0xf]
      %v944 = vld [vmem:[%s937 + $0x24] sm:$0xf]
      %v945 = vld [vmem:[%s937 + $0x28] sm:$0xf]
      %v946 = vld [vmem:[%s937 + $0x30] sm:$0xf]
      %v947 = vld [vmem:[%s937 + $0x34] sm:$0xf]
      %v948 = vld [vmem:[%s937 + $0x3c] sm:$0xf]
      %v949 = vld [vmem:[%s937 + $0x40] sm:$0xf]
      %v950 = vld [vmem:[%s937 + $0x48] sm:$0xf]
      %v951 = vld [vmem:[%s937 + $0x4c] sm:$0xf]
      %v952 = vld [vmem:[%s937 + $0x54] sm:$0xf]
      %v953 = vld [vmem:[%s937 + $0x58] sm:$0xf]
      %v954 = vld [vmem:[%s937 + $0x60] sm:$0xf]
      %v955 = vld [vmem:[%s937 + $0x64] sm:$0xf]
      %v956 = vld [vmem:[%s937 + $0x6c] sm:$0xf]
      %v957 = vld [vmem:[%s937 + $0x70] sm:$0xf]
      %v958 = vld [vmem:[%s937 + $0x78] sm:$0xf]
      %v959 = vld [vmem:[%s937 + $0x7c] sm:$0xf]
      %v960 = vld [vmem:[%s937 + $0x84] sm:$0xf]
      %v961 = vld [vmem:[%s937 + $0x88] sm:$0xf]
      %v962 = vld [vmem:[%s937 + $0x90] sm:$0xf]
      %v963 = vld [vmem:[%s937 + $0x94] sm:$0xf]
      %v964 = vld [vmem:[%s937 + $0x9c] sm:$0xf]
      %v965 = vld [vmem:[%s937 + $0xa0] sm:$0xf]
      %v966 = vld [vmem:[%s937 + $0xa8] sm:$0xf]
      %v967 = vld [vmem:[%s937 + $0xac] sm:$0xf]
      %v968 = vld [vmem:[%s937 + $0xb4] sm:$0xf]
      %v969 = vld [vmem:[%s937 + $0xb8] sm:$0xf]
      %v1002 = vunpack.c.l.b16 %v873
      %v1003 = vunpack.c.l.b16 %v874
      %v1004 = vunpack.c.l.b16 %v875
      %v1005 = vunpack.c.l.b16 %v876
      %v1006 = vunpack.c.l.b16 %v877
      %v1007 = vunpack.c.l.b16 %v878
      %v1008 = vunpack.c.l.b16 %v879
      %v1009 = vunpack.c.l.b16 %v880
      %v1010 = vunpack.c.l.b16 %v881
      %v1011 = vunpack.c.l.b16 %v882
      %v1012 = vunpack.c.l.b16 %v883
      %v1013 = vunpack.c.l.b16 %v884
      %v1014 = vunpack.c.l.b16 %v885
      %v1015 = vunpack.c.l.b16 %v886
      %v1016 = vunpack.c.l.b16 %v887
      %v1017 = vunpack.c.l.b16 %v888
      %v1018 = vunpack.c.l.b16 %v889
      %v1019 = vunpack.c.l.b16 %v890
      %v1020 = vunpack.c.l.b16 %v891
      %v1021 = vunpack.c.l.b16 %v892
      %v1022 = vunpack.c.l.b16 %v893
      %v1023 = vunpack.c.l.b16 %v894
      %v1024 = vunpack.c.l.b16 %v895
      %v1025 = vunpack.c.l.b16 %v896
      %v1026 = vunpack.c.l.b16 %v897
      %v1027 = vunpack.c.l.b16 %v898
      %v1028 = vunpack.c.l.b16 %v899
      %v1029 = vunpack.c.l.b16 %v900
      %v1030 = vunpack.c.l.b16 %v901
      %v1031 = vunpack.c.l.b16 %v902
      %v1032 = vunpack.c.l.b16 %v903
      %v1033 = vunpack.c.l.b16 %v904
      %v1034 = vpack.c.b16 %v1003, %v1002
      %v1035 = vpack.c.b16 %v1005, %v1004
      %v1036 = vpack.c.b16 %v1007, %v1006
      %v1037 = vpack.c.b16 %v1009, %v1008
      %v1038 = vpack.c.b16 %v1011, %v1010
      %v1039 = vpack.c.b16 %v1013, %v1012
      %v1040 = vpack.c.b16 %v1015, %v1014
      %v1041 = vpack.c.b16 %v1017, %v1016
      %v1042 = vpack.c.b16 %v1019, %v1018
      %v1043 = vpack.c.b16 %v1021, %v1020
      %v1044 = vpack.c.b16 %v1023, %v1022
      %v1045 = vpack.c.b16 %v1025, %v1024
      %v1046 = vpack.c.b16 %v1027, %v1026
      %v1047 = vpack.c.b16 %v1029, %v1028
      %v1048 = vpack.c.b16 %v1031, %v1030
      %v1049 = vpack.c.b16 %v1033, %v1032
      %v1082 = vunpack.c.l.b16 %v905
      %v1083 = vunpack.c.l.b16 %v906
      %v1084 = vunpack.c.l.b16 %v907
      %v1085 = vunpack.c.l.b16 %v908
      %v1086 = vunpack.c.l.b16 %v909
      %v1087 = vunpack.c.l.b16 %v910
      %v1088 = vunpack.c.l.b16 %v911
      %v1089 = vunpack.c.l.b16 %v912
      %v1090 = vunpack.c.l.b16 %v913
      %v1091 = vunpack.c.l.b16 %v914
      %v1092 = vunpack.c.l.b16 %v915
      %v1093 = vunpack.c.l.b16 %v916
      %v1094 = vunpack.c.l.b16 %v917
      %v1095 = vunpack.c.l.b16 %v918
      %v1096 = vunpack.c.l.b16 %v919
      %v1097 = vunpack.c.l.b16 %v920
      %v1098 = vunpack.c.l.b16 %v921
      %v1099 = vunpack.c.l.b16 %v922
      %v1100 = vunpack.c.l.b16 %v923
      %v1101 = vunpack.c.l.b16 %v924
      %v1102 = vunpack.c.l.b16 %v925
      %v1103 = vunpack.c.l.b16 %v926
      %v1104 = vunpack.c.l.b16 %v927
      %v1105 = vunpack.c.l.b16 %v928
      %v1106 = vunpack.c.l.b16 %v929
      %v1107 = vunpack.c.l.b16 %v930
      %v1108 = vunpack.c.l.b16 %v931
      %v1109 = vunpack.c.l.b16 %v932
      %v1110 = vunpack.c.l.b16 %v933
      %v1111 = vunpack.c.l.b16 %v934
      %v1112 = vunpack.c.l.b16 %v935
      %v1113 = vunpack.c.l.b16 %v936
      %v1114 = vpack.c.b16 %v1083, %v1082
      %v1115 = vpack.c.b16 %v1085, %v1084
      %v1116 = vpack.c.b16 %v1087, %v1086
      %v1117 = vpack.c.b16 %v1089, %v1088
      %v1118 = vpack.c.b16 %v1091, %v1090
      %v1119 = vpack.c.b16 %v1093, %v1092
      %v1120 = vpack.c.b16 %v1095, %v1094
      %v1121 = vpack.c.b16 %v1097, %v1096
      %v1122 = vpack.c.b16 %v1099, %v1098
      %v1123 = vpack.c.b16 %v1101, %v1100
      %v1124 = vpack.c.b16 %v1103, %v1102
      %v1125 = vpack.c.b16 %v1105, %v1104
      %v1126 = vpack.c.b16 %v1107, %v1106
      %v1127 = vpack.c.b16 %v1109, %v1108
      %v1128 = vpack.c.b16 %v1111, %v1110
      %v1129 = vpack.c.b16 %v1113, %v1112
      %1130 = vrot.lane.b32.xlu0 %v1114, 1
      %v1131 = vpop.permute.xlu0 %1130
      %1132 = vrot.lane.b32.xlu0 %v1115, 1
      %v1133 = vpop.permute.xlu0 %1132
      %1134 = vrot.lane.b32.xlu0 %v1116, 1
      %v1135 = vpop.permute.xlu0 %1134
      %1136 = vrot.lane.b32.xlu0 %v1117, 1
      %v1137 = vpop.permute.xlu0 %1136
      %1138 = vrot.lane.b32.xlu0 %v1118, 1
      %v1139 = vpop.permute.xlu0 %1138
      %1140 = vrot.lane.b32.xlu0 %v1119, 1
      %v1141 = vpop.permute.xlu0 %1140
      %1142 = vrot.lane.b32.xlu0 %v1120, 1
      %v1143 = vpop.permute.xlu0 %1142
      %1144 = vrot.lane.b32.xlu0 %v1121, 1
      %v1145 = vpop.permute.xlu0 %1144
      %1146 = vrot.lane.b32.xlu0 %v1122, 1
      %v1147 = vpop.permute.xlu0 %1146
      %1148 = vrot.lane.b32.xlu0 %v1123, 1
      %v1149 = vpop.permute.xlu0 %1148
      %1150 = vrot.lane.b32.xlu0 %v1124, 1
      %v1151 = vpop.permute.xlu0 %1150
      %1152 = vrot.lane.b32.xlu0 %v1125, 1
      %v1153 = vpop.permute.xlu0 %1152
      %1154 = vrot.lane.b32.xlu0 %v1126, 1
      %v1155 = vpop.permute.xlu0 %1154
      %1156 = vrot.lane.b32.xlu0 %v1127, 1
      %v1157 = vpop.permute.xlu0 %1156
      %1158 = vrot.lane.b32.xlu0 %v1128, 1
      %v1159 = vpop.permute.xlu0 %1158
      %1160 = vrot.lane.b32.xlu0 %v1129, 1
      %v1161 = vpop.permute.xlu0 %1160
      %v1194 = vunpack.c.l.b16 %v938
      %v1195 = vunpack.c.l.b16 %v939
      %v1196 = vunpack.c.l.b16 %v940
      %v1197 = vunpack.c.l.b16 %v941
      %v1198 = vunpack.c.l.b16 %v942
      %v1199 = vunpack.c.l.b16 %v943
      %v1200 = vunpack.c.l.b16 %v944
      %v1201 = vunpack.c.l.b16 %v945
      %v1202 = vunpack.c.l.b16 %v946
      %v1203 = vunpack.c.l.b16 %v947
      %v1204 = vunpack.c.l.b16 %v948
      %v1205 = vunpack.c.l.b16 %v949
      %v1206 = vunpack.c.l.b16 %v950
      %v1207 = vunpack.c.l.b16 %v951
      %v1208 = vunpack.c.l.b16 %v952
      %v1209 = vunpack.c.l.b16 %v953
      %v1210 = vunpack.c.l.b16 %v954
      %v1211 = vunpack.c.l.b16 %v955
      %v1212 = vunpack.c.l.b16 %v956
      %v1213 = vunpack.c.l.b16 %v957
      %v1214 = vunpack.c.l.b16 %v958
      %v1215 = vunpack.c.l.b16 %v959
      %v1216 = vunpack.c.l.b16 %v960
      %v1217 = vunpack.c.l.b16 %v961
      %v1218 = vunpack.c.l.b16 %v962
      %v1219 = vunpack.c.l.b16 %v963
      %v1220 = vunpack.c.l.b16 %v964
      %v1221 = vunpack.c.l.b16 %v965
      %v1222 = vunpack.c.l.b16 %v966
      %v1223 = vunpack.c.l.b16 %v967
      %v1224 = vunpack.c.l.b16 %v968
      %v1225 = vunpack.c.l.b16 %v969
      %v1226 = vpack.c.b16 %v1195, %v1194
      %v1227 = vpack.c.b16 %v1197, %v1196
      %v1228 = vpack.c.b16 %v1199, %v1198
      %v1229 = vpack.c.b16 %v1201, %v1200
      %v1230 = vpack.c.b16 %v1203, %v1202
      %v1231 = vpack.c.b16 %v1205, %v1204
      %v1232 = vpack.c.b16 %v1207, %v1206
      %v1233 = vpack.c.b16 %v1209, %v1208
      %v1234 = vpack.c.b16 %v1211, %v1210
      %v1235 = vpack.c.b16 %v1213, %v1212
      %v1236 = vpack.c.b16 %v1215, %v1214
      %v1237 = vpack.c.b16 %v1217, %v1216
      %v1238 = vpack.c.b16 %v1219, %v1218
      %v1239 = vpack.c.b16 %v1221, %v1220
      %v1240 = vpack.c.b16 %v1223, %v1222
      %v1241 = vpack.c.b16 %v1225, %v1224
      %1242 = vrot.lane.b32.xlu0 %v1226, 2
      %v1243 = vpop.permute.xlu0 %1242
      %1244 = vrot.lane.b32.xlu0 %v1227, 2
      %v1245 = vpop.permute.xlu0 %1244
      %1246 = vrot.lane.b32.xlu0 %v1228, 2
      %v1247 = vpop.permute.xlu0 %1246
      %1248 = vrot.lane.b32.xlu0 %v1229, 2
      %v1249 = vpop.permute.xlu0 %1248
      %1250 = vrot.lane.b32.xlu0 %v1230, 2
      %v1251 = vpop.permute.xlu0 %1250
      %1252 = vrot.lane.b32.xlu0 %v1231, 2
      %v1253 = vpop.permute.xlu0 %1252
      %1254 = vrot.lane.b32.xlu0 %v1232, 2
      %v1255 = vpop.permute.xlu0 %1254
      %1256 = vrot.lane.b32.xlu0 %v1233, 2
      %v1257 = vpop.permute.xlu0 %1256
      %1258 = vrot.lane.b32.xlu0 %v1234, 2
      %v1259 = vpop.permute.xlu0 %1258
      %1260 = vrot.lane.b32.xlu0 %v1235, 2
      %v1261 = vpop.permute.xlu0 %1260
      %1262 = vrot.lane.b32.xlu0 %v1236, 2
      %v1263 = vpop.permute.xlu0 %1262
      %1264 = vrot.lane.b32.xlu0 %v1237, 2
      %v1265 = vpop.permute.xlu0 %1264
      %1266 = vrot.lane.b32.xlu0 %v1238, 2
      %v1267 = vpop.permute.xlu0 %1266
      %1268 = vrot.lane.b32.xlu0 %v1239, 2
      %v1269 = vpop.permute.xlu0 %1268
      %1270 = vrot.lane.b32.xlu0 %v1240, 2
      %v1271 = vpop.permute.xlu0 %1270
      %1272 = vrot.lane.b32.xlu0 %v1241, 2
      %v1273 = vpop.permute.xlu0 %1272
      %vm1274 = vcmask 7168
      %v1277 = vsel %vm1274, %v1034, %v1131
      %v1280 = vsel %vm1274, %v1035, %v1133
      %v1283 = vsel %vm1274, %v1036, %v1135
      %v1286 = vsel %vm1274, %v1037, %v1137
      %v1289 = vsel %vm1274, %v1038, %v1139
      %v1292 = vsel %vm1274, %v1039, %v1141
      %v1295 = vsel %vm1274, %v1040, %v1143
      %v1298 = vsel %vm1274, %v1041, %v1145
      %v1301 = vsel %vm1274, %v1042, %v1147
      %v1304 = vsel %vm1274, %v1043, %v1149
      %v1307 = vsel %vm1274, %v1044, %v1151
      %v1310 = vsel %vm1274, %v1045, %v1153
      %v1313 = vsel %vm1274, %v1046, %v1155
      %v1316 = vsel %vm1274, %v1047, %v1157
      %v1319 = vsel %vm1274, %v1048, %v1159
      %v1322 = vsel %vm1274, %v1049, %v1161
      %vm1323 = vcmask 15360
      %v1325 = vsel %vm1323, %v1277, %v1243
      %v1327 = vsel %vm1323, %v1280, %v1245
      %v1329 = vsel %vm1323, %v1283, %v1247
      %v1331 = vsel %vm1323, %v1286, %v1249
      %v1333 = vsel %vm1323, %v1289, %v1251
      %v1335 = vsel %vm1323, %v1292, %v1253
      %v1337 = vsel %vm1323, %v1295, %v1255
      %v1339 = vsel %vm1323, %v1298, %v1257
      %v1341 = vsel %vm1323, %v1301, %v1259
      %v1343 = vsel %vm1323, %v1304, %v1261
      %v1345 = vsel %vm1323, %v1307, %v1263
      %v1347 = vsel %vm1323, %v1310, %v1265
      %v1349 = vsel %vm1323, %v1313, %v1267
      %v1351 = vsel %vm1323, %v1316, %v1269
      %v1353 = vsel %vm1323, %v1319, %v1271
      %v1355 = vsel %vm1323, %v1322, %v1273
      %v1356 = vld [vmem:[%s3] sm:$0x3]
      %v1357 = vld [vmem:[#allocation2 + $0x8] sm:$0x1]
      %v1358 = vld [vmem:[#allocation2 + $0x14] sm:$0x1]
      %v1359 = vld [vmem:[#allocation2 + $0x20] sm:$0x1]
      %v1360 = vld [vmem:[#allocation2 + $0x2c] sm:$0x1]
      %v1361 = vld [vmem:[#allocation2 + $0x38] sm:$0x1]
      %v1362 = vld [vmem:[#allocation2 + $0x44] sm:$0x1]
      %v1363 = vld [vmem:[#allocation2 + $0x50] sm:$0x1]
      %v1364 = vld [vmem:[#allocation2 + $0x5c] sm:$0x1]
      %v1365 = vld [vmem:[#allocation2 + $0x68] sm:$0x1]
      %v1366 = vld [vmem:[#allocation2 + $0x74] sm:$0x1]
      %v1367 = vld [vmem:[#allocation2 + $0x80] sm:$0x1]
      %v1368 = vld [vmem:[#allocation2 + $0x8c] sm:$0x1]
      %v1369 = vld [vmem:[#allocation2 + $0x98] sm:$0x1]
      %v1370 = vld [vmem:[#allocation2 + $0xa4] sm:$0x1]
      %v1371 = vld [vmem:[#allocation2 + $0xb0] sm:$0x1]
      %v1372 = vld [vmem:[#allocation2 + $0xbc] sm:$0x1]
      %v1373 = vld [vmem:[%s824 + $0x8] sm:$0x1]
      %v1374 = vld [vmem:[%s824 + $0x14] sm:$0x1]
      %v1375 = vld [vmem:[%s824 + $0x20] sm:$0x1]
      %v1376 = vld [vmem:[%s824 + $0x2c] sm:$0x1]
      %v1377 = vld [vmem:[%s824 + $0x38] sm:$0x1]
      %v1378 = vld [vmem:[%s824 + $0x44] sm:$0x1]
      %v1379 = vld [vmem:[%s824 + $0x50] sm:$0x1]
      %v1380 = vld [vmem:[%s824 + $0x5c] sm:$0x1]
      %v1381 = vld [vmem:[%s824 + $0x68] sm:$0x1]
      %v1382 = vld [vmem:[%s824 + $0x74] sm:$0x1]
      %v1383 = vld [vmem:[%s824 + $0x80] sm:$0x1]
      %v1384 = vld [vmem:[%s824 + $0x8c] sm:$0x1]
      %v1385 = vld [vmem:[%s824 + $0x98] sm:$0x1]
      %v1386 = vld [vmem:[%s824 + $0xa4] sm:$0x1]
      %v1387 = vld [vmem:[%s824 + $0xb0] sm:$0x1]
      %v1388 = vld [vmem:[%s824 + $0xbc] sm:$0x1]
      %v1389 = vld [vmem:[%s937 + $0x8] sm:$0x1]
      %v1390 = vld [vmem:[%s937 + $0x14] sm:$0x1]
      %v1391 = vld [vmem:[%s937 + $0x20] sm:$0x1]
      %v1392 = vld [vmem:[%s937 + $0x2c] sm:$0x1]
      %v1393 = vld [vmem:[%s937 + $0x38] sm:$0x1]
      %v1394 = vld [vmem:[%s937 + $0x44] sm:$0x1]
      %v1395 = vld [vmem:[%s937 + $0x50] sm:$0x1]
      %v1396 = vld [vmem:[%s937 + $0x5c] sm:$0x1]
      %v1397 = vld [vmem:[%s937 + $0x68] sm:$0x1]
      %v1398 = vld [vmem:[%s937 + $0x74] sm:$0x1]
      %v1399 = vld [vmem:[%s937 + $0x80] sm:$0x1]
      %v1400 = vld [vmem:[%s937 + $0x8c] sm:$0x1]
      %v1401 = vld [vmem:[%s937 + $0x98] sm:$0x1]
      %v1402 = vld [vmem:[%s937 + $0xa4] sm:$0x1]
      %v1403 = vld [vmem:[%s937 + $0xb0] sm:$0x1]
      %v1404 = vld [vmem:[%s937 + $0xbc] sm:$0x1]
      %v1421 = vunpack.c.l.b16 %v1357
      %v1422 = vunpack.c.l.b16 %v1358
      %v1423 = vunpack.c.l.b16 %v1359
      %v1424 = vunpack.c.l.b16 %v1360
      %v1425 = vunpack.c.l.b16 %v1361
      %v1426 = vunpack.c.l.b16 %v1362
      %v1427 = vunpack.c.l.b16 %v1363
      %v1428 = vunpack.c.l.b16 %v1364
      %v1429 = vunpack.c.l.b16 %v1365
      %v1430 = vunpack.c.l.b16 %v1366
      %v1431 = vunpack.c.l.b16 %v1367
      %v1432 = vunpack.c.l.b16 %v1368
      %v1433 = vunpack.c.l.b16 %v1369
      %v1434 = vunpack.c.l.b16 %v1370
      %v1435 = vunpack.c.l.b16 %v1371
      %v1436 = vunpack.c.l.b16 %v1372
      %v1437 = vpack.c.b16 %v1421, %v1421
      %v1438 = vpack.c.b16 %v1422, %v1422
      %v1439 = vpack.c.b16 %v1423, %v1423
      %v1440 = vpack.c.b16 %v1424, %v1424
      %v1441 = vpack.c.b16 %v1425, %v1425
      %v1442 = vpack.c.b16 %v1426, %v1426
      %v1443 = vpack.c.b16 %v1427, %v1427
      %v1444 = vpack.c.b16 %v1428, %v1428
      %v1445 = vpack.c.b16 %v1429, %v1429
      %v1446 = vpack.c.b16 %v1430, %v1430
      %v1447 = vpack.c.b16 %v1431, %v1431
      %v1448 = vpack.c.b16 %v1432, %v1432
      %v1449 = vpack.c.b16 %v1433, %v1433
      %v1450 = vpack.c.b16 %v1434, %v1434
      %v1451 = vpack.c.b16 %v1435, %v1435
      %v1452 = vpack.c.b16 %v1436, %v1436
      %v1469 = vunpack.c.l.b16 %v1373
      %v1470 = vunpack.c.l.b16 %v1374
      %v1471 = vunpack.c.l.b16 %v1375
      %v1472 = vunpack.c.l.b16 %v1376
      %v1473 = vunpack.c.l.b16 %v1377
      %v1474 = vunpack.c.l.b16 %v1378
      %v1475 = vunpack.c.l.b16 %v1379
      %v1476 = vunpack.c.l.b16 %v1380
      %v1477 = vunpack.c.l.b16 %v1381
      %v1478 = vunpack.c.l.b16 %v1382
      %v1479 = vunpack.c.l.b16 %v1383
      %v1480 = vunpack.c.l.b16 %v1384
      %v1481 = vunpack.c.l.b16 %v1385
      %v1482 = vunpack.c.l.b16 %v1386
      %v1483 = vunpack.c.l.b16 %v1387
      %v1484 = vunpack.c.l.b16 %v1388
      %v1485 = vpack.c.b16 %v1469, %v1469
      %v1486 = vpack.c.b16 %v1470, %v1470
      %v1487 = vpack.c.b16 %v1471, %v1471
      %v1488 = vpack.c.b16 %v1472, %v1472
      %v1489 = vpack.c.b16 %v1473, %v1473
      %v1490 = vpack.c.b16 %v1474, %v1474
      %v1491 = vpack.c.b16 %v1475, %v1475
      %v1492 = vpack.c.b16 %v1476, %v1476
      %v1493 = vpack.c.b16 %v1477, %v1477
      %v1494 = vpack.c.b16 %v1478, %v1478
      %v1495 = vpack.c.b16 %v1479, %v1479
      %v1496 = vpack.c.b16 %v1480, %v1480
      %v1497 = vpack.c.b16 %v1481, %v1481
      %v1498 = vpack.c.b16 %v1482, %v1482
      %v1499 = vpack.c.b16 %v1483, %v1483
      %v1500 = vpack.c.b16 %v1484, %v1484
      %1501 = vrot.lane.b32.xlu0 %v1485, 1
      %v1502 = vpop.permute.xlu0 %1501
      %1503 = vrot.lane.b32.xlu0 %v1486, 1
      %v1504 = vpop.permute.xlu0 %1503
      %1505 = vrot.lane.b32.xlu0 %v1487, 1
      %v1506 = vpop.permute.xlu0 %1505
      %1507 = vrot.lane.b32.xlu0 %v1488, 1
      %v1508 = vpop.permute.xlu0 %1507
      %1509 = vrot.lane.b32.xlu0 %v1489, 1
      %v1510 = vpop.permute.xlu0 %1509
      %1511 = vrot.lane.b32.xlu0 %v1490, 1
      %v1512 = vpop.permute.xlu0 %1511
      %1513 = vrot.lane.b32.xlu0 %v1491, 1
      %v1514 = vpop.permute.xlu0 %1513
      %1515 = vrot.lane.b32.xlu0 %v1492, 1
      %v1516 = vpop.permute.xlu0 %1515
      %1517 = vrot.lane.b32.xlu0 %v1493, 1
      %v1518 = vpop.permute.xlu0 %1517
      %1519 = vrot.lane.b32.xlu0 %v1494, 1
      %v1520 = vpop.permute.xlu0 %1519
      %1521 = vrot.lane.b32.xlu0 %v1495, 1
      %v1522 = vpop.permute.xlu0 %1521
      %1523 = vrot.lane.b32.xlu0 %v1496, 1
      %v1524 = vpop.permute.xlu0 %1523
      %1525 = vrot.lane.b32.xlu0 %v1497, 1
      %v1526 = vpop.permute.xlu0 %1525
      %1527 = vrot.lane.b32.xlu0 %v1498, 1
      %v1528 = vpop.permute.xlu0 %1527
      %1529 = vrot.lane.b32.xlu0 %v1499, 1
      %v1530 = vpop.permute.xlu0 %1529
      %1531 = vrot.lane.b32.xlu0 %v1500, 1
      %v1532 = vpop.permute.xlu0 %1531
      %v1549 = vunpack.c.l.b16 %v1389
      %v1550 = vunpack.c.l.b16 %v1390
      %v1551 = vunpack.c.l.b16 %v1391
      %v1552 = vunpack.c.l.b16 %v1392
      %v1553 = vunpack.c.l.b16 %v1393
      %v1554 = vunpack.c.l.b16 %v1394
      %v1555 = vunpack.c.l.b16 %v1395
      %v1556 = vunpack.c.l.b16 %v1396
      %v1557 = vunpack.c.l.b16 %v1397
      %v1558 = vunpack.c.l.b16 %v1398
      %v1559 = vunpack.c.l.b16 %v1399
      %v1560 = vunpack.c.l.b16 %v1400
      %v1561 = vunpack.c.l.b16 %v1401
      %v1562 = vunpack.c.l.b16 %v1402
      %v1563 = vunpack.c.l.b16 %v1403
      %v1564 = vunpack.c.l.b16 %v1404
      %v1565 = vpack.c.b16 %v1549, %v1549
      %v1566 = vpack.c.b16 %v1550, %v1550
      %v1567 = vpack.c.b16 %v1551, %v1551
      %v1568 = vpack.c.b16 %v1552, %v1552
      %v1569 = vpack.c.b16 %v1553, %v1553
      %v1570 = vpack.c.b16 %v1554, %v1554
      %v1571 = vpack.c.b16 %v1555, %v1555
      %v1572 = vpack.c.b16 %v1556, %v1556
      %v1573 = vpack.c.b16 %v1557, %v1557
      %v1574 = vpack.c.b16 %v1558, %v1558
      %v1575 = vpack.c.b16 %v1559, %v1559
      %v1576 = vpack.c.b16 %v1560, %v1560
      %v1577 = vpack.c.b16 %v1561, %v1561
      %v1578 = vpack.c.b16 %v1562, %v1562
      %v1579 = vpack.c.b16 %v1563, %v1563
      %v1580 = vpack.c.b16 %v1564, %v1564
      %1581 = vrot.lane.b32.xlu0 %v1565, 2
      %v1582 = vpop.permute.xlu0 %1581
      %1583 = vrot.lane.b32.xlu0 %v1566, 2
      %v1584 = vpop.permute.xlu0 %1583
      %1585 = vrot.lane.b32.xlu0 %v1567, 2
      %v1586 = vpop.permute.xlu0 %1585
      %1587 = vrot.lane.b32.xlu0 %v1568, 2
      %v1588 = vpop.permute.xlu0 %1587
      %1589 = vrot.lane.b32.xlu0 %v1569, 2
      %v1590 = vpop.permute.xlu0 %1589
      %1591 = vrot.lane.b32.xlu0 %v1570, 2
      %v1592 = vpop.permute.xlu0 %1591
      %1593 = vrot.lane.b32.xlu0 %v1571, 2
      %v1594 = vpop.permute.xlu0 %1593
      %1595 = vrot.lane.b32.xlu0 %v1572, 2
      %v1596 = vpop.permute.xlu0 %1595
      %1597 = vrot.lane.b32.xlu0 %v1573, 2
      %v1598 = vpop.permute.xlu0 %1597
      %1599 = vrot.lane.b32.xlu0 %v1574, 2
      %v1600 = vpop.permute.xlu0 %1599
      %1601 = vrot.lane.b32.xlu0 %v1575, 2
      %v1602 = vpop.permute.xlu0 %1601
      %1603 = vrot.lane.b32.xlu0 %v1576, 2
      %v1604 = vpop.permute.xlu0 %1603
      %1605 = vrot.lane.b32.xlu0 %v1577, 2
      %v1606 = vpop.permute.xlu0 %1605
      %1607 = vrot.lane.b32.xlu0 %v1578, 2
      %v1608 = vpop.permute.xlu0 %1607
      %1609 = vrot.lane.b32.xlu0 %v1579, 2
      %v1610 = vpop.permute.xlu0 %1609
      %1611 = vrot.lane.b32.xlu0 %v1580, 2
      %v1612 = vpop.permute.xlu0 %1611
      %v1615 = vsel %vm1274, %v1437, %v1502
      %v1618 = vsel %vm1274, %v1438, %v1504
      %v1621 = vsel %vm1274, %v1439, %v1506
      %v1624 = vsel %vm1274, %v1440, %v1508
      %v1627 = vsel %vm1274, %v1441, %v1510
      %v1630 = vsel %vm1274, %v1442, %v1512
      %v1633 = vsel %vm1274, %v1443, %v1514
      %v1636 = vsel %vm1274, %v1444, %v1516
      %v1639 = vsel %vm1274, %v1445, %v1518
      %v1642 = vsel %vm1274, %v1446, %v1520
      %v1645 = vsel %vm1274, %v1447, %v1522
      %v1648 = vsel %vm1274, %v1448, %v1524
      %v1651 = vsel %vm1274, %v1449, %v1526
      %v1654 = vsel %vm1274, %v1450, %v1528
      %v1657 = vsel %vm1274, %v1451, %v1530
      %v1660 = vsel %vm1274, %v1452, %v1532
      %v1662 = vsel %vm1323, %v1615, %v1582
      %v1664 = vsel %vm1323, %v1618, %v1584
      %v1666 = vsel %vm1323, %v1621, %v1586
      %v1668 = vsel %vm1323, %v1624, %v1588
      %v1670 = vsel %vm1323, %v1627, %v1590
      %v1672 = vsel %vm1323, %v1630, %v1592
      %v1674 = vsel %vm1323, %v1633, %v1594
      %v1676 = vsel %vm1323, %v1636, %v1596
      %v1678 = vsel %vm1323, %v1639, %v1598
      %v1680 = vsel %vm1323, %v1642, %v1600
      %v1682 = vsel %vm1323, %v1645, %v1602
      %v1684 = vsel %vm1323, %v1648, %v1604
      %v1686 = vsel %vm1323, %v1651, %v1606
      %v1688 = vsel %vm1323, %v1654, %v1608
      %v1690 = vsel %vm1323, %v1657, %v1610
      %v1692 = vsel %vm1323, %v1660, %v1612
      %vm1693 = vsmask.f32 7424
      %v1694 = vshrl.u32 %v1325, 16
      %v1696 = vshll.u32 %v1325, 16
      %v1698 = vrot.slane %v1696, 1
      %v1699 = vor.u32 %v1694, %v1698
      %v1700 = vshll.u32 %v1662, 16
      %v1702 = vrot.slane %v1700, 1
      %v1703 = vsel %vm1693, %v1699, %v1702
      %v1704 = vshrl.u32 %v1327, 16
      %v1706 = vshll.u32 %v1327, 16
      %v1708 = vrot.slane %v1706, 1
      %v1709 = vor.u32 %v1704, %v1708
      %v1710 = vshll.u32 %v1664, 16
      %v1712 = vrot.slane %v1710, 1
      %v1713 = vsel %vm1693, %v1709, %v1712
      %v1714 = vshrl.u32 %v1329, 16
      %v1716 = vshll.u32 %v1329, 16
      %v1718 = vrot.slane %v1716, 1
      %v1719 = vor.u32 %v1714, %v1718
      %v1720 = vshll.u32 %v1666, 16
      %v1722 = vrot.slane %v1720, 1
      %v1723 = vsel %vm1693, %v1719, %v1722
      %v1724 = vshrl.u32 %v1331, 16
      %v1726 = vshll.u32 %v1331, 16
      %v1728 = vrot.slane %v1726, 1
      %v1729 = vor.u32 %v1724, %v1728
      %v1730 = vshll.u32 %v1668, 16
      %v1732 = vrot.slane %v1730, 1
      %v1733 = vsel %vm1693, %v1729, %v1732
      %v1734 = vshrl.u32 %v1333, 16
      %v1736 = vshll.u32 %v1333, 16
      %v1738 = vrot.slane %v1736, 1
      %v1739 = vor.u32 %v1734, %v1738
      %v1740 = vshll.u32 %v1670, 16
      %v1742 = vrot.slane %v1740, 1
      %v1743 = vsel %vm1693, %v1739, %v1742
      %v1744 = vshrl.u32 %v1335, 16
      %v1746 = vshll.u32 %v1335, 16
      %v1748 = vrot.slane %v1746, 1
      %v1749 = vor.u32 %v1744, %v1748
      %v1750 = vshll.u32 %v1672, 16
      %v1752 = vrot.slane %v1750, 1
      %v1753 = vsel %vm1693, %v1749, %v1752
      %v1754 = vshrl.u32 %v1337, 16
      %v1756 = vshll.u32 %v1337, 16
      %v1758 = vrot.slane %v1756, 1
      %v1759 = vor.u32 %v1754, %v1758
      %v1760 = vshll.u32 %v1674, 16
      %v1762 = vrot.slane %v1760, 1
      %v1763 = vsel %vm1693, %v1759, %v1762
      %v1764 = vshrl.u32 %v1339, 16
      %v1766 = vshll.u32 %v1339, 16
      %v1768 = vrot.slane %v1766, 1
      %v1769 = vor.u32 %v1764, %v1768
      %v1770 = vshll.u32 %v1676, 16
      %v1772 = vrot.slane %v1770, 1
      %v1773 = vsel %vm1693, %v1769, %v1772
      %v1774 = vshrl.u32 %v1341, 16
      %v1776 = vshll.u32 %v1341, 16
      %v1778 = vrot.slane %v1776, 1
      %v1779 = vor.u32 %v1774, %v1778
      %v1780 = vshll.u32 %v1678, 16
      %v1782 = vrot.slane %v1780, 1
      %v1783 = vsel %vm1693, %v1779, %v1782
      %v1784 = vshrl.u32 %v1343, 16
      %v1786 = vshll.u32 %v1343, 16
      %v1788 = vrot.slane %v1786, 1
      %v1789 = vor.u32 %v1784, %v1788
      %v1790 = vshll.u32 %v1680, 16
      %v1792 = vrot.slane %v1790, 1
      %v1793 = vsel %vm1693, %v1789, %v1792
      %v1794 = vshrl.u32 %v1345, 16
      %v1796 = vshll.u32 %v1345, 16
      %v1798 = vrot.slane %v1796, 1
      %v1799 = vor.u32 %v1794, %v1798
      %v1800 = vshll.u32 %v1682, 16
      %v1802 = vrot.slane %v1800, 1
      %v1803 = vsel %vm1693, %v1799, %v1802
      %v1804 = vshrl.u32 %v1347, 16
      %v1806 = vshll.u32 %v1347, 16
      %v1808 = vrot.slane %v1806, 1
      %v1809 = vor.u32 %v1804, %v1808
      %v1810 = vshll.u32 %v1684, 16
      %v1812 = vrot.slane %v1810, 1
      %v1813 = vsel %vm1693, %v1809, %v1812
      %v1814 = vshrl.u32 %v1349, 16
      %v1816 = vshll.u32 %v1349, 16
      %v1818 = vrot.slane %v1816, 1
      %v1819 = vor.u32 %v1814, %v1818
      %v1820 = vshll.u32 %v1686, 16
      %v1822 = vrot.slane %v1820, 1
      %v1823 = vsel %vm1693, %v1819, %v1822
      %v1824 = vshrl.u32 %v1351, 16
      %v1826 = vshll.u32 %v1351, 16
      %v1828 = vrot.slane %v1826, 1
      %v1829 = vor.u32 %v1824, %v1828
      %v1830 = vshll.u32 %v1688, 16
      %v1832 = vrot.slane %v1830, 1
      %v1833 = vsel %vm1693, %v1829, %v1832
      %v1834 = vshrl.u32 %v1353, 16
      %v1836 = vshll.u32 %v1353, 16
      %v1838 = vrot.slane %v1836, 1
      %v1839 = vor.u32 %v1834, %v1838
      %v1840 = vshll.u32 %v1690, 16
      %v1842 = vrot.slane %v1840, 1
      %v1843 = vsel %vm1693, %v1839, %v1842
      %v1844 = vshrl.u32 %v1355, 16
      %v1846 = vshll.u32 %v1355, 16
      %v1848 = vrot.slane %v1846, 1
      %v1849 = vor.u32 %v1844, %v1848
      %v1850 = vshll.u32 %v1692, 16
      %v1852 = vrot.slane %v1850, 1
      %v1853 = vsel %vm1693, %v1849, %v1852
      %s1854 = scalar_lea.vmem %s3, 2
      %v1855 = vld [vmem:[%s1854] sm:$0x3]
      %vm1856 = vcmask 23552
      %v1858 = vsel %vm1856, %v1703, 0
      %v1861 = vsel %vm1856, %v1713, 0
      %v1864 = vsel %vm1856, %v1723, 0
      %v1867 = vsel %vm1856, %v1733, 0
      %v1870 = vsel %vm1856, %v1743, 0
      %v1873 = vsel %vm1856, %v1753, 0
      %v1876 = vsel %vm1856, %v1763, 0
      %v1879 = vsel %vm1856, %v1773, 0
      %v1882 = vsel %vm1856, %v1783, 0
      %v1885 = vsel %vm1856, %v1793, 0
      %v1888 = vsel %vm1856, %v1803, 0
      %v1891 = vsel %vm1856, %v1813, 0
      %v1894 = vsel %vm1856, %v1823, 0
      %v1897 = vsel %vm1856, %v1833, 0
      %v1900 = vsel %vm1856, %v1843, 0
      %v1903 = vsel %vm1856, %v1853, 0
      %vm1905 = vcmask 1040384
      %vm1906 = vcmask 1041408
      %v1907 = vsel %vm1905, 4294967295, 65535
      %v1908 = vsel %vm1906, %v1907, 0
      %v1910 = vand.u32 %v1855, %v1908
      %1912 = vmatprep.subr.bf16.mxu0 0
      %1913 = vmatpush1.bf16.msra.mxu0 0
      %1914 = vmatprep.subr.bf16.mxu0 0
      %1915 = vmatpush1.bf16.msra.mxu0 0
      %1916 = vmatprep.subr.bf16.mxu0 0
      %1917 = vmatpush1.bf16.msra.mxu0 0
      %1918 = vmatprep.subr.bf16.mxu0 0
      %1919 = vmatpush1.bf16.msra.mxu0 0
      %1920 = vmatprep.subr.bf16.mxu0 0
      %1921 = vmatpush1.bf16.msra.mxu0 0
      %1922 = vmatprep.subr.bf16.mxu0 0
      %1923 = vmatpush1.bf16.msra.mxu0 0
      %1924 = vmatprep.subr.bf16.mxu0 0
      %1925 = vmatpush1.bf16.msra.mxu0 0
      %1926 = vmatprep.subr.bf16.mxu0 0
      %1927 = vmatpush1.bf16.msra.mxu0 %v1910
      %1928 = vmatprep.subr.bf16.mxu0 0
      %1929 = vmatpush2.bf16.msra.mxu0 0
      %1930 = vmatprep.subr.bf16.mxu0 0
      %1931 = vmatpush2.bf16.msra.mxu0 0
      %1932 = vmatprep.subr.bf16.mxu0 0
      %1933 = vmatpush2.bf16.msra.mxu0 0
      %1934 = vmatprep.subr.bf16.mxu0 0
      %1935 = vmatpush2.bf16.msra.mxu0 0
      %1936 = vmatprep.subr.bf16.mxu0 0
      %1937 = vmatpush2.bf16.msra.mxu0 0
      %1938 = vmatprep.subr.bf16.mxu0 0
      %1939 = vmatpush2.bf16.msra.mxu0 0
      %1940 = vmatprep.subr.bf16.mxu0 0
      %1941 = vmatpush2.bf16.msra.mxu0 0
      %1942 = vmatprep.subr.bf16.mxu0 0
      %1943 = vmatpush2.bf16.msra.mxu0 0
      %1944 = vmatprep.mubr.bf16.mxu0 0
      %1945 = vmatmul.mubr.bf16.gmra.mxu0 %v1858
      %v1946 = vpop.f32.mrf.mxu0
      %v1947 = vadd.f32 0.0, %v1946
      %v1948 = vpop.f32.mrf.mxu0
      %v1949 = vpop.f32.mrf.mxu0
      %v1950 = vadd.f32 0.0, %v1949
      %v1951 = vpop.f32.mrf.mxu0
      %1952 = vmatprep.mubr.bf16.mxu0 0
      %1953 = vmatmul.mubr.bf16.gmra.mxu0 %v1861
      %v1954 = vpop.f32.mrf.mxu0
      %v1955 = vadd.f32 0.0, %v1954
      %v1956 = vpop.f32.mrf.mxu0
      %v1957 = vpop.f32.mrf.mxu0
      %v1958 = vadd.f32 0.0, %v1957
      %v1959 = vpop.f32.mrf.mxu0
      %1960 = vmatprep.mubr.bf16.mxu0 0
      %1961 = vmatmul.mubr.bf16.gmra.mxu0 %v1864
      %v1962 = vpop.f32.mrf.mxu0
      %v1963 = vadd.f32 0.0, %v1962
      %v1964 = vpop.f32.mrf.mxu0
      %v1965 = vpop.f32.mrf.mxu0
      %v1966 = vadd.f32 0.0, %v1965
      %v1967 = vpop.f32.mrf.mxu0
      %1968 = vmatprep.mubr.bf16.mxu0 0
      %1969 = vmatmul.mubr.bf16.gmra.mxu0 %v1867
      %v1970 = vpop.f32.mrf.mxu0
      %v1971 = vadd.f32 0.0, %v1970
      %v1972 = vpop.f32.mrf.mxu0
      %v1973 = vpop.f32.mrf.mxu0
      %v1974 = vadd.f32 0.0, %v1973
      %v1975 = vpop.f32.mrf.mxu0
      %1976 = vmatprep.mubr.bf16.mxu0 0
      %1977 = vmatmul.mubr.bf16.gmra.mxu0 %v1870
      %v1978 = vpop.f32.mrf.mxu0
      %v1979 = vadd.f32 0.0, %v1978
      %v1980 = vpop.f32.mrf.mxu0
      %v1981 = vpop.f32.mrf.mxu0
      %v1982 = vadd.f32 0.0, %v1981
      %v1983 = vpop.f32.mrf.mxu0
      %1984 = vmatprep.mubr.bf16.mxu0 0
      %1985 = vmatmul.mubr.bf16.gmra.mxu0 %v1873
      %v1986 = vpop.f32.mrf.mxu0
      %v1987 = vadd.f32 0.0, %v1986
      %v1988 = vpop.f32.mrf.mxu0
      %v1989 = vpop.f32.mrf.mxu0
      %v1990 = vadd.f32 0.0, %v1989
      %v1991 = vpop.f32.mrf.mxu0
      %1992 = vmatprep.mubr.bf16.mxu0 0
      %1993 = vmatmul.mubr.bf16.gmra.mxu0 %v1876
      %v1994 = vpop.f32.mrf.mxu0
      %v1995 = vadd.f32 0.0, %v1994
      %v1996 = vpop.f32.mrf.mxu0
      %v1997 = vpop.f32.mrf.mxu0
      %v1998 = vadd.f32 0.0, %v1997
      %v1999 = vpop.f32.mrf.mxu0
      %2000 = vmatprep.mubr.bf16.mxu0 0
      %2001 = vmatmul.mubr.bf16.gmra.mxu0 %v1879
      %v2002 = vpop.f32.mrf.mxu0
      %v2003 = vadd.f32 0.0, %v2002
      %v2004 = vpop.f32.mrf.mxu0
      %v2005 = vpop.f32.mrf.mxu0
      %v2006 = vadd.f32 0.0, %v2005
      %v2007 = vpop.f32.mrf.mxu0
      %2008 = vmatprep.mubr.bf16.mxu0 0
      %2009 = vmatmul.mubr.bf16.gmra.mxu0 %v1882
      %v2010 = vpop.f32.mrf.mxu0
      %v2011 = vadd.f32 0.0, %v2010
      %v2012 = vpop.f32.mrf.mxu0
      %v2013 = vpop.f32.mrf.mxu0
      %v2014 = vadd.f32 0.0, %v2013
      %v2015 = vpop.f32.mrf.mxu0
      %2016 = vmatprep.mubr.bf16.mxu0 0
      %2017 = vmatmul.mubr.bf16.gmra.mxu0 %v1885
      %v2018 = vpop.f32.mrf.mxu0
      %v2019 = vadd.f32 0.0, %v2018
      %v2020 = vpop.f32.mrf.mxu0
      %v2021 = vpop.f32.mrf.mxu0
      %v2022 = vadd.f32 0.0, %v2021
      %v2023 = vpop.f32.mrf.mxu0
      %2024 = vmatprep.mubr.bf16.mxu0 0
      %2025 = vmatmul.mubr.bf16.gmra.mxu0 %v1888
      %v2026 = vpop.f32.mrf.mxu0
      %v2027 = vadd.f32 0.0, %v2026
      %v2028 = vpop.f32.mrf.mxu0
      %v2029 = vpop.f32.mrf.mxu0
      %v2030 = vadd.f32 0.0, %v2029
      %v2031 = vpop.f32.mrf.mxu0
      %2032 = vmatprep.mubr.bf16.mxu0 0
      %2033 = vmatmul.mubr.bf16.gmra.mxu0 %v1891
      %v2034 = vpop.f32.mrf.mxu0
      %v2035 = vadd.f32 0.0, %v2034
      %v2036 = vpop.f32.mrf.mxu0
      %v2037 = vpop.f32.mrf.mxu0
      %v2038 = vadd.f32 0.0, %v2037
      %v2039 = vpop.f32.mrf.mxu0
      %2040 = vmatprep.mubr.bf16.mxu0 0
      %2041 = vmatmul.mubr.bf16.gmra.mxu0 %v1894
      %v2042 = vpop.f32.mrf.mxu0
      %v2043 = vadd.f32 0.0, %v2042
      %v2044 = vpop.f32.mrf.mxu0
      %v2045 = vpop.f32.mrf.mxu0
      %v2046 = vadd.f32 0.0, %v2045
      %v2047 = vpop.f32.mrf.mxu0
      %2048 = vmatprep.mubr.bf16.mxu0 0
      %2049 = vmatmul.mubr.bf16.gmra.mxu0 %v1897
      %v2050 = vpop.f32.mrf.mxu0
      %v2051 = vadd.f32 0.0, %v2050
      %v2052 = vpop.f32.mrf.mxu0
      %v2053 = vpop.f32.mrf.mxu0
      %v2054 = vadd.f32 0.0, %v2053
      %v2055 = vpop.f32.mrf.mxu0
      %2056 = vmatprep.mubr.bf16.mxu0 0
      %2057 = vmatmul.mubr.bf16.gmra.mxu0 %v1900
      %v2058 = vpop.f32.mrf.mxu0
      %v2059 = vadd.f32 0.0, %v2058
      %v2060 = vpop.f32.mrf.mxu0
      %v2061 = vpop.f32.mrf.mxu0
      %v2062 = vadd.f32 0.0, %v2061
      %v2063 = vpop.f32.mrf.mxu0
      %2064 = vmatprep.mubr.bf16.mxu0 0
      %2065 = vmatmul.mubr.bf16.gmra.mxu0 %v1903
      %v2066 = vpop.f32.mrf.mxu0
      %v2067 = vadd.f32 0.0, %v2066
      %v2068 = vpop.f32.mrf.mxu0
      %v2069 = vpop.f32.mrf.mxu0
      %v2070 = vadd.f32 0.0, %v2069
      %v2071 = vpop.f32.mrf.mxu0
      %2072 = vdwg.mxu0
      %v2073 = vsel %vm1856, %v1325, 0
      %v2075 = vsel %vm1856, %v1327, 0
      %v2077 = vsel %vm1856, %v1329, 0
      %v2079 = vsel %vm1856, %v1331, 0
      %v2081 = vsel %vm1856, %v1333, 0
      %v2083 = vsel %vm1856, %v1335, 0
      %v2085 = vsel %vm1856, %v1337, 0
      %v2087 = vsel %vm1856, %v1339, 0
      %v2089 = vsel %vm1856, %v1341, 0
      %v2091 = vsel %vm1856, %v1343, 0
      %v2093 = vsel %vm1856, %v1345, 0
      %v2095 = vsel %vm1856, %v1347, 0
      %v2097 = vsel %vm1856, %v1349, 0
      %v2099 = vsel %vm1856, %v1351, 0
      %v2101 = vsel %vm1856, %v1353, 0
      %v2103 = vsel %vm1856, %v1355, 0
      %v2106 = vand.u32 %v1356, %v1908
      %2108 = vmatprep.subr.bf16.mxu0 0
      %2109 = vmatpush1.bf16.msra.mxu0 0
      %2110 = vmatprep.subr.bf16.mxu0 0
      %2111 = vmatpush1.bf16.msra.mxu0 0
      %2112 = vmatprep.subr.bf16.mxu0 0
      %2113 = vmatpush1.bf16.msra.mxu0 0
      %2114 = vmatprep.subr.bf16.mxu0 0
      %2115 = vmatpush1.bf16.msra.mxu0 0
      %2116 = vmatprep.subr.bf16.mxu0 0
      %2117 = vmatpush1.bf16.msra.mxu0 0
      %2118 = vmatprep.subr.bf16.mxu0 0
      %2119 = vmatpush1.bf16.msra.mxu0 0
      %2120 = vmatprep.subr.bf16.mxu0 0
      %2121 = vmatpush1.bf16.msra.mxu0 0
      %2122 = vmatprep.subr.bf16.mxu0 0
      %2123 = vmatpush1.bf16.msra.mxu0 %v2106
      %2124 = vmatprep.subr.bf16.mxu0 0
      %2125 = vmatpush2.bf16.msra.mxu0 0
      %2126 = vmatprep.subr.bf16.mxu0 0
      %2127 = vmatpush2.bf16.msra.mxu0 0
      %2128 = vmatprep.subr.bf16.mxu0 0
      %2129 = vmatpush2.bf16.msra.mxu0 0
      %2130 = vmatprep.subr.bf16.mxu0 0
      %2131 = vmatpush2.bf16.msra.mxu0 0
      %2132 = vmatprep.subr.bf16.mxu0 0
      %2133 = vmatpush2.bf16.msra.mxu0 0
      %2134 = vmatprep.subr.bf16.mxu0 0
      %2135 = vmatpush2.bf16.msra.mxu0 0
      %2136 = vmatprep.subr.bf16.mxu0 0
      %2137 = vmatpush2.bf16.msra.mxu0 0
      %2138 = vmatprep.subr.bf16.mxu0 0
      %2139 = vmatpush2.bf16.msra.mxu0 0
      %2140 = vmatprep.mubr.bf16.mxu0 0
      %2141 = vmatmul.mubr.bf16.gmra.mxu0 %v2073
      %v2142 = vpop.f32.mrf.mxu0
      %v2143 = vadd.f32 %v1947, %v2142
      %v2144 = vpop.f32.mrf.mxu0
      %v2145 = vpop.f32.mrf.mxu0
      %v2146 = vadd.f32 %v1950, %v2145
      %v2147 = vpop.f32.mrf.mxu0
      %2148 = vmatprep.mubr.bf16.mxu0 0
      %2149 = vmatmul.mubr.bf16.gmra.mxu0 %v2075
      %v2150 = vpop.f32.mrf.mxu0
      %v2151 = vadd.f32 %v1955, %v2150
      %v2152 = vpop.f32.mrf.mxu0
      %v2153 = vpop.f32.mrf.mxu0
      %v2154 = vadd.f32 %v1958, %v2153
      %v2155 = vpop.f32.mrf.mxu0
      %2156 = vmatprep.mubr.bf16.mxu0 0
      %2157 = vmatmul.mubr.bf16.gmra.mxu0 %v2077
      %v2158 = vpop.f32.mrf.mxu0
      %v2159 = vadd.f32 %v1963, %v2158
      %v2160 = vpop.f32.mrf.mxu0
      %v2161 = vpop.f32.mrf.mxu0
      %v2162 = vadd.f32 %v1966, %v2161
      %v2163 = vpop.f32.mrf.mxu0
      %2164 = vmatprep.mubr.bf16.mxu0 0
      %2165 = vmatmul.mubr.bf16.gmra.mxu0 %v2079
      %v2166 = vpop.f32.mrf.mxu0
      %v2167 = vadd.f32 %v1971, %v2166
      %v2168 = vpop.f32.mrf.mxu0
      %v2169 = vpop.f32.mrf.mxu0
      %v2170 = vadd.f32 %v1974, %v2169
      %v2171 = vpop.f32.mrf.mxu0
      %2172 = vmatprep.mubr.bf16.mxu0 0
      %2173 = vmatmul.mubr.bf16.gmra.mxu0 %v2081
      %v2174 = vpop.f32.mrf.mxu0
      %v2175 = vadd.f32 %v1979, %v2174
      %v2176 = vpop.f32.mrf.mxu0
      %v2177 = vpop.f32.mrf.mxu0
      %v2178 = vadd.f32 %v1982, %v2177
      %v2179 = vpop.f32.mrf.mxu0
      %2180 = vmatprep.mubr.bf16.mxu0 0
      %2181 = vmatmul.mubr.bf16.gmra.mxu0 %v2083
      %v2182 = vpop.f32.mrf.mxu0
      %v2183 = vadd.f32 %v1987, %v2182
      %v2184 = vpop.f32.mrf.mxu0
      %v2185 = vpop.f32.mrf.mxu0
      %v2186 = vadd.f32 %v1990, %v2185
      %v2187 = vpop.f32.mrf.mxu0
      %2188 = vmatprep.mubr.bf16.mxu0 0
      %2189 = vmatmul.mubr.bf16.gmra.mxu0 %v2085
      %v2190 = vpop.f32.mrf.mxu0
      %v2191 = vadd.f32 %v1995, %v2190
      %v2192 = vpop.f32.mrf.mxu0
      %v2193 = vpop.f32.mrf.mxu0
      %v2194 = vadd.f32 %v1998, %v2193
      %v2195 = vpop.f32.mrf.mxu0
      %2196 = vmatprep.mubr.bf16.mxu0 0
      %2197 = vmatmul.mubr.bf16.gmra.mxu0 %v2087
      %v2198 = vpop.f32.mrf.mxu0
      %v2199 = vadd.f32 %v2003, %v2198
      %v2200 = vpop.f32.mrf.mxu0
      %v2201 = vpop.f32.mrf.mxu0
      %v2202 = vadd.f32 %v2006, %v2201
      %v2203 = vpop.f32.mrf.mxu0
      %2204 = vmatprep.mubr.bf16.mxu0 0
      %2205 = vmatmul.mubr.bf16.gmra.mxu0 %v2089
      %v2206 = vpop.f32.mrf.mxu0
      %v2207 = vadd.f32 %v2011, %v2206
      %v2208 = vpop.f32.mrf.mxu0
      %v2209 = vpop.f32.mrf.mxu0
      %v2210 = vadd.f32 %v2014, %v2209
      %v2211 = vpop.f32.mrf.mxu0
      %2212 = vmatprep.mubr.bf16.mxu0 0
      %2213 = vmatmul.mubr.bf16.gmra.mxu0 %v2091
      %v2214 = vpop.f32.mrf.mxu0
      %v2215 = vadd.f32 %v2019, %v2214
      %v2216 = vpop.f32.mrf.mxu0
      %v2217 = vpop.f32.mrf.mxu0
      %v2218 = vadd.f32 %v2022, %v2217
      %v2219 = vpop.f32.mrf.mxu0
      %2220 = vmatprep.mubr.bf16.mxu0 0
      %2221 = vmatmul.mubr.bf16.gmra.mxu0 %v2093
      %v2222 = vpop.f32.mrf.mxu0
      %v2223 = vadd.f32 %v2027, %v2222
      %v2224 = vpop.f32.mrf.mxu0
      %v2225 = vpop.f32.mrf.mxu0
      %v2226 = vadd.f32 %v2030, %v2225
      %v2227 = vpop.f32.mrf.mxu0
      %2228 = vmatprep.mubr.bf16.mxu0 0
      %2229 = vmatmul.mubr.bf16.gmra.mxu0 %v2095
      %v2230 = vpop.f32.mrf.mxu0
      %v2231 = vadd.f32 %v2035, %v2230
      %v2232 = vpop.f32.mrf.mxu0
      %v2233 = vpop.f32.mrf.mxu0
      %v2234 = vadd.f32 %v2038, %v2233
      %v2235 = vpop.f32.mrf.mxu0
      %2236 = vmatprep.mubr.bf16.mxu0 0
      %2237 = vmatmul.mubr.bf16.gmra.mxu0 %v2097
      %v2238 = vpop.f32.mrf.mxu0
      %v2239 = vadd.f32 %v2043, %v2238
      %v2240 = vpop.f32.mrf.mxu0
      %v2241 = vpop.f32.mrf.mxu0
      %v2242 = vadd.f32 %v2046, %v2241
      %v2243 = vpop.f32.mrf.mxu0
      %2244 = vmatprep.mubr.bf16.mxu0 0
      %2245 = vmatmul.mubr.bf16.gmra.mxu0 %v2099
      %v2246 = vpop.f32.mrf.mxu0
      %v2247 = vadd.f32 %v2051, %v2246
      %v2248 = vpop.f32.mrf.mxu0
      %v2249 = vpop.f32.mrf.mxu0
      %v2250 = vadd.f32 %v2054, %v2249
      %v2251 = vpop.f32.mrf.mxu0
      %2252 = vmatprep.mubr.bf16.mxu0 0
      %2253 = vmatmul.mubr.bf16.gmra.mxu0 %v2101
      %v2254 = vpop.f32.mrf.mxu0
      %v2255 = vadd.f32 %v2059, %v2254
      %v2256 = vpop.f32.mrf.mxu0
      %v2257 = vpop.f32.mrf.mxu0
      %v2258 = vadd.f32 %v2062, %v2257
      %v2259 = vpop.f32.mrf.mxu0
      %2260 = vmatprep.mubr.bf16.mxu0 0
      %2261 = vmatmul.mubr.bf16.gmra.mxu0 %v2103
      %v2262 = vpop.f32.mrf.mxu0
      %v2263 = vadd.f32 %v2067, %v2262
      %v2264 = vpop.f32.mrf.mxu0
      %v2265 = vpop.f32.mrf.mxu0
      %v2266 = vadd.f32 %v2070, %v2265
      %v2267 = vpop.f32.mrf.mxu0
      %2268 = vdwg.mxu0
      %v2269 = vld [vmem:[#allocation2] sm:$0xe]
      %v2270 = vld [vmem:[#allocation2 + $0xc] sm:$0xe]
      %v2271 = vld [vmem:[#allocation2 + $0x18] sm:$0xe]
      %v2272 = vld [vmem:[#allocation2 + $0x24] sm:$0xe]
      %v2273 = vld [vmem:[#allocation2 + $0x30] sm:$0xe]
      %v2274 = vld [vmem:[#allocation2 + $0x3c] sm:$0xe]
      %v2275 = vld [vmem:[#allocation2 + $0x48] sm:$0xe]
      %v2276 = vld [vmem:[#allocation2 + $0x54] sm:$0xe]
      %v2277 = vld [vmem:[#allocation2 + $0x60] sm:$0xe]
      %v2278 = vld [vmem:[#allocation2 + $0x6c] sm:$0xe]
      %v2279 = vld [vmem:[#allocation2 + $0x78] sm:$0xe]
      %v2280 = vld [vmem:[#allocation2 + $0x84] sm:$0xe]
      %v2281 = vld [vmem:[#allocation2 + $0x90] sm:$0xe]
      %v2282 = vld [vmem:[#allocation2 + $0x9c] sm:$0xe]
      %v2283 = vld [vmem:[#allocation2 + $0xa8] sm:$0xe]
      %v2284 = vld [vmem:[#allocation2 + $0xb4] sm:$0xe]
      %v2285 = vld [vmem:[%s824] sm:$0xe]
      %v2286 = vld [vmem:[%s824 + $0xc] sm:$0xe]
      %v2287 = vld [vmem:[%s824 + $0x18] sm:$0xe]
      %v2288 = vld [vmem:[%s824 + $0x24] sm:$0xe]
      %v2289 = vld [vmem:[%s824 + $0x30] sm:$0xe]
      %v2290 = vld [vmem:[%s824 + $0x3c] sm:$0xe]
      %v2291 = vld [vmem:[%s824 + $0x48] sm:$0xe]
      %v2292 = vld [vmem:[%s824 + $0x54] sm:$0xe]
      %v2293 = vld [vmem:[%s824 + $0x60] sm:$0xe]
      %v2294 = vld [vmem:[%s824 + $0x6c] sm:$0xe]
      %v2295 = vld [vmem:[%s824 + $0x78] sm:$0xe]
      %v2296 = vld [vmem:[%s824 + $0x84] sm:$0xe]
      %v2297 = vld [vmem:[%s824 + $0x90] sm:$0xe]
      %v2298 = vld [vmem:[%s824 + $0x9c] sm:$0xe]
      %v2299 = vld [vmem:[%s824 + $0xa8] sm:$0xe]
      %v2300 = vld [vmem:[%s824 + $0xb4] sm:$0xe]
      %v2301 = vld [vmem:[%s937] sm:$0xe]
      %v2302 = vld [vmem:[%s937 + $0xc] sm:$0xe]
      %v2303 = vld [vmem:[%s937 + $0x18] sm:$0xe]
      %v2304 = vld [vmem:[%s937 + $0x24] sm:$0xe]
      %v2305 = vld [vmem:[%s937 + $0x30] sm:$0xe]
      %v2306 = vld [vmem:[%s937 + $0x3c] sm:$0xe]
      %v2307 = vld [vmem:[%s937 + $0x48] sm:$0xe]
      %v2308 = vld [vmem:[%s937 + $0x54] sm:$0xe]
      %v2309 = vld [vmem:[%s937 + $0x60] sm:$0xe]
      %v2310 = vld [vmem:[%s937 + $0x6c] sm:$0xe]
      %v2311 = vld [vmem:[%s937 + $0x78] sm:$0xe]
      %v2312 = vld [vmem:[%s937 + $0x84] sm:$0xe]
      %v2313 = vld [vmem:[%s937 + $0x90] sm:$0xe]
      %v2314 = vld [vmem:[%s937 + $0x9c] sm:$0xe]
      %v2315 = vld [vmem:[%s937 + $0xa8] sm:$0xe]
      %v2316 = vld [vmem:[%s937 + $0xb4] sm:$0xe]
      %v2333 = vunpack.c.l.b16 %v2269
      %v2334 = vunpack.c.l.b16 %v2270
      %v2335 = vunpack.c.l.b16 %v2271
      %v2336 = vunpack.c.l.b16 %v2272
      %v2337 = vunpack.c.l.b16 %v2273
      %v2338 = vunpack.c.l.b16 %v2274
      %v2339 = vunpack.c.l.b16 %v2275
      %v2340 = vunpack.c.l.b16 %v2276
      %v2341 = vunpack.c.l.b16 %v2277
      %v2342 = vunpack.c.l.b16 %v2278
      %v2343 = vunpack.c.l.b16 %v2279
      %v2344 = vunpack.c.l.b16 %v2280
      %v2345 = vunpack.c.l.b16 %v2281
      %v2346 = vunpack.c.l.b16 %v2282
      %v2347 = vunpack.c.l.b16 %v2283
      %v2348 = vunpack.c.l.b16 %v2284
      %v2349 = vpack.c.b16 %v1003, %v2333
      %v2350 = vpack.c.b16 %v1005, %v2334
      %v2351 = vpack.c.b16 %v1007, %v2335
      %v2352 = vpack.c.b16 %v1009, %v2336
      %v2353 = vpack.c.b16 %v1011, %v2337
      %v2354 = vpack.c.b16 %v1013, %v2338
      %v2355 = vpack.c.b16 %v1015, %v2339
      %v2356 = vpack.c.b16 %v1017, %v2340
      %v2357 = vpack.c.b16 %v1019, %v2341
      %v2358 = vpack.c.b16 %v1021, %v2342
      %v2359 = vpack.c.b16 %v1023, %v2343
      %v2360 = vpack.c.b16 %v1025, %v2344
      %v2361 = vpack.c.b16 %v1027, %v2345
      %v2362 = vpack.c.b16 %v1029, %v2346
      %v2363 = vpack.c.b16 %v1031, %v2347
      %v2364 = vpack.c.b16 %v1033, %v2348
      %v2381 = vunpack.c.l.b16 %v2285
      %v2382 = vunpack.c.l.b16 %v2286
      %v2383 = vunpack.c.l.b16 %v2287
      %v2384 = vunpack.c.l.b16 %v2288
      %v2385 = vunpack.c.l.b16 %v2289
      %v2386 = vunpack.c.l.b16 %v2290
      %v2387 = vunpack.c.l.b16 %v2291
      %v2388 = vunpack.c.l.b16 %v2292
      %v2389 = vunpack.c.l.b16 %v2293
      %v2390 = vunpack.c.l.b16 %v2294
      %v2391 = vunpack.c.l.b16 %v2295
      %v2392 = vunpack.c.l.b16 %v2296
      %v2393 = vunpack.c.l.b16 %v2297
      %v2394 = vunpack.c.l.b16 %v2298
      %v2395 = vunpack.c.l.b16 %v2299
      %v2396 = vunpack.c.l.b16 %v2300
      %v2397 = vpack.c.b16 %v1083, %v2381
      %v2398 = vpack.c.b16 %v1085, %v2382
      %v2399 = vpack.c.b16 %v1087, %v2383
      %v2400 = vpack.c.b16 %v1089, %v2384
      %v2401 = vpack.c.b16 %v1091, %v2385
      %v2402 = vpack.c.b16 %v1093, %v2386
      %v2403 = vpack.c.b16 %v1095, %v2387
      %v2404 = vpack.c.b16 %v1097, %v2388
      %v2405 = vpack.c.b16 %v1099, %v2389
      %v2406 = vpack.c.b16 %v1101, %v2390
      %v2407 = vpack.c.b16 %v1103, %v2391
      %v2408 = vpack.c.b16 %v1105, %v2392
      %v2409 = vpack.c.b16 %v1107, %v2393
      %v2410 = vpack.c.b16 %v1109, %v2394
      %v2411 = vpack.c.b16 %v1111, %v2395
      %v2412 = vpack.c.b16 %v1113, %v2396
      %2413 = vrot.lane.b32.xlu0 %v2397, 1
      %v2414 = vpop.permute.xlu0 %2413
      %2415 = vrot.lane.b32.xlu0 %v2398, 1
      %v2416 = vpop.permute.xlu0 %2415
      %2417 = vrot.lane.b32.xlu0 %v2399, 1
      %v2418 = vpop.permute.xlu0 %2417
      %2419 = vrot.lane.b32.xlu0 %v2400, 1
      %v2420 = vpop.permute.xlu0 %2419
      %2421 = vrot.lane.b32.xlu0 %v2401, 1
      %v2422 = vpop.permute.xlu0 %2421
      %2423 = vrot.lane.b32.xlu0 %v2402, 1
      %v2424 = vpop.permute.xlu0 %2423
      %2425 = vrot.lane.b32.xlu0 %v2403, 1
      %v2426 = vpop.permute.xlu0 %2425
      %2427 = vrot.lane.b32.xlu0 %v2404, 1
      %v2428 = vpop.permute.xlu0 %2427
      %2429 = vrot.lane.b32.xlu0 %v2405, 1
      %v2430 = vpop.permute.xlu0 %2429
      %2431 = vrot.lane.b32.xlu0 %v2406, 1
      %v2432 = vpop.permute.xlu0 %2431
      %2433 = vrot.lane.b32.xlu0 %v2407, 1
      %v2434 = vpop.permute.xlu0 %2433
      %2435 = vrot.lane.b32.xlu0 %v2408, 1
      %v2436 = vpop.permute.xlu0 %2435
      %2437 = vrot.lane.b32.xlu0 %v2409, 1
      %v2438 = vpop.permute.xlu0 %2437
      %2439 = vrot.lane.b32.xlu0 %v2410, 1
      %v2440 = vpop.permute.xlu0 %2439
      %2441 = vrot.lane.b32.xlu0 %v2411, 1
      %v2442 = vpop.permute.xlu0 %2441
      %2443 = vrot.lane.b32.xlu0 %v2412, 1
      %v2444 = vpop.permute.xlu0 %2443
      %v2461 = vunpack.c.l.b16 %v2301
      %v2462 = vunpack.c.l.b16 %v2302
      %v2463 = vunpack.c.l.b16 %v2303
      %v2464 = vunpack.c.l.b16 %v2304
      %v2465 = vunpack.c.l.b16 %v2305
      %v2466 = vunpack.c.l.b16 %v2306
      %v2467 = vunpack.c.l.b16 %v2307
      %v2468 = vunpack.c.l.b16 %v2308
      %v2469 = vunpack.c.l.b16 %v2309
      %v2470 = vunpack.c.l.b16 %v2310
      %v2471 = vunpack.c.l.b16 %v2311
      %v2472 = vunpack.c.l.b16 %v2312
      %v2473 = vunpack.c.l.b16 %v2313
      %v2474 = vunpack.c.l.b16 %v2314
      %v2475 = vunpack.c.l.b16 %v2315
      %v2476 = vunpack.c.l.b16 %v2316
      %v2477 = vpack.c.b16 %v1195, %v2461
      %v2478 = vpack.c.b16 %v1197, %v2462
      %v2479 = vpack.c.b16 %v1199, %v2463
      %v2480 = vpack.c.b16 %v1201, %v2464
      %v2481 = vpack.c.b16 %v1203, %v2465
      %v2482 = vpack.c.b16 %v1205, %v2466
      %v2483 = vpack.c.b16 %v1207, %v2467
      %v2484 = vpack.c.b16 %v1209, %v2468
      %v2485 = vpack.c.b16 %v1211, %v2469
      %v2486 = vpack.c.b16 %v1213, %v2470
      %v2487 = vpack.c.b16 %v1215, %v2471
      %v2488 = vpack.c.b16 %v1217, %v2472
      %v2489 = vpack.c.b16 %v1219, %v2473
      %v2490 = vpack.c.b16 %v1221, %v2474
      %v2491 = vpack.c.b16 %v1223, %v2475
      %v2492 = vpack.c.b16 %v1225, %v2476
      %2493 = vrot.lane.b32.xlu0 %v2477, 2
      %v2494 = vpop.permute.xlu0 %2493
      %2495 = vrot.lane.b32.xlu0 %v2478, 2
      %v2496 = vpop.permute.xlu0 %2495
      %2497 = vrot.lane.b32.xlu0 %v2479, 2
      %v2498 = vpop.permute.xlu0 %2497
      %2499 = vrot.lane.b32.xlu0 %v2480, 2
      %v2500 = vpop.permute.xlu0 %2499
      %2501 = vrot.lane.b32.xlu0 %v2481, 2
      %v2502 = vpop.permute.xlu0 %2501
      %2503 = vrot.lane.b32.xlu0 %v2482, 2
      %v2504 = vpop.permute.xlu0 %2503
      %2505 = vrot.lane.b32.xlu0 %v2483, 2
      %v2506 = vpop.permute.xlu0 %2505
      %2507 = vrot.lane.b32.xlu0 %v2484, 2
      %v2508 = vpop.permute.xlu0 %2507
      %2509 = vrot.lane.b32.xlu0 %v2485, 2
      %v2510 = vpop.permute.xlu0 %2509
      %2511 = vrot.lane.b32.xlu0 %v2486, 2
      %v2512 = vpop.permute.xlu0 %2511
      %2513 = vrot.lane.b32.xlu0 %v2487, 2
      %v2514 = vpop.permute.xlu0 %2513
      %2515 = vrot.lane.b32.xlu0 %v2488, 2
      %v2516 = vpop.permute.xlu0 %2515
      %2517 = vrot.lane.b32.xlu0 %v2489, 2
      %v2518 = vpop.permute.xlu0 %2517
      %2519 = vrot.lane.b32.xlu0 %v2490, 2
      %v2520 = vpop.permute.xlu0 %2519
      %2521 = vrot.lane.b32.xlu0 %v2491, 2
      %v2522 = vpop.permute.xlu0 %2521
      %2523 = vrot.lane.b32.xlu0 %v2492, 2
      %v2524 = vpop.permute.xlu0 %2523
      %v2527 = vsel %vm1274, %v2349, %v2414
      %v2530 = vsel %vm1274, %v2350, %v2416
      %v2533 = vsel %vm1274, %v2351, %v2418
      %v2536 = vsel %vm1274, %v2352, %v2420
      %v2539 = vsel %vm1274, %v2353, %v2422
      %v2542 = vsel %vm1274, %v2354, %v2424
      %v2545 = vsel %vm1274, %v2355, %v2426
      %v2548 = vsel %vm1274, %v2356, %v2428
      %v2551 = vsel %vm1274, %v2357, %v2430
      %v2554 = vsel %vm1274, %v2358, %v2432
      %v2557 = vsel %vm1274, %v2359, %v2434
      %v2560 = vsel %vm1274, %v2360, %v2436
      %v2563 = vsel %vm1274, %v2361, %v2438
      %v2566 = vsel %vm1274, %v2362, %v2440
      %v2569 = vsel %vm1274, %v2363, %v2442
      %v2572 = vsel %vm1274, %v2364, %v2444
      %v2574 = vsel %vm1323, %v2527, %v2494
      %v2576 = vsel %vm1323, %v2530, %v2496
      %v2578 = vsel %vm1323, %v2533, %v2498
      %v2580 = vsel %vm1323, %v2536, %v2500
      %v2582 = vsel %vm1323, %v2539, %v2502
      %v2584 = vsel %vm1323, %v2542, %v2504
      %v2586 = vsel %vm1323, %v2545, %v2506
      %v2588 = vsel %vm1323, %v2548, %v2508
      %v2590 = vsel %vm1323, %v2551, %v2510
      %v2592 = vsel %vm1323, %v2554, %v2512
      %v2594 = vsel %vm1323, %v2557, %v2514
      %v2596 = vsel %vm1323, %v2560, %v2516
      %v2598 = vsel %vm1323, %v2563, %v2518
      %v2600 = vsel %vm1323, %v2566, %v2520
      %v2602 = vsel %vm1323, %v2569, %v2522
      %v2604 = vsel %vm1323, %v2572, %v2524
      %vm2637 = vcmask 1046528
      %v2638 = vrot.slane %v2574, 1
      %v2639 = vrot.slane %v1662, 1
      %v2640 = vsel %vm2637, %v2638, %v2639
      %v2641 = vrot.slane %v2576, 1
      %v2642 = vrot.slane %v1664, 1
      %v2643 = vsel %vm2637, %v2641, %v2642
      %v2644 = vrot.slane %v2578, 1
      %v2645 = vrot.slane %v1666, 1
      %v2646 = vsel %vm2637, %v2644, %v2645
      %v2647 = vrot.slane %v2580, 1
      %v2648 = vrot.slane %v1668, 1
      %v2649 = vsel %vm2637, %v2647, %v2648
      %v2650 = vrot.slane %v2582, 1
      %v2651 = vrot.slane %v1670, 1
      %v2652 = vsel %vm2637, %v2650, %v2651
      %v2653 = vrot.slane %v2584, 1
      %v2654 = vrot.slane %v1672, 1
      %v2655 = vsel %vm2637, %v2653, %v2654
      %v2656 = vrot.slane %v2586, 1
      %v2657 = vrot.slane %v1674, 1
      %v2658 = vsel %vm2637, %v2656, %v2657
      %v2659 = vrot.slane %v2588, 1
      %v2660 = vrot.slane %v1676, 1
      %v2661 = vsel %vm2637, %v2659, %v2660
      %v2662 = vrot.slane %v2590, 1
      %v2663 = vrot.slane %v1678, 1
      %v2664 = vsel %vm2637, %v2662, %v2663
      %v2665 = vrot.slane %v2592, 1
      %v2666 = vrot.slane %v1680, 1
      %v2667 = vsel %vm2637, %v2665, %v2666
      %v2668 = vrot.slane %v2594, 1
      %v2669 = vrot.slane %v1682, 1
      %v2670 = vsel %vm2637, %v2668, %v2669
      %v2671 = vrot.slane %v2596, 1
      %v2672 = vrot.slane %v1684, 1
      %v2673 = vsel %vm2637, %v2671, %v2672
      %v2674 = vrot.slane %v2598, 1
      %v2675 = vrot.slane %v1686, 1
      %v2676 = vsel %vm2637, %v2674, %v2675
      %v2677 = vrot.slane %v2600, 1
      %v2678 = vrot.slane %v1688, 1
      %v2679 = vsel %vm2637, %v2677, %v2678
      %v2680 = vrot.slane %v2602, 1
      %v2681 = vrot.slane %v1690, 1
      %v2682 = vsel %vm2637, %v2680, %v2681
      %v2683 = vrot.slane %v2604, 1
      %v2684 = vrot.slane %v1692, 1
      %v2685 = vsel %vm2637, %v2683, %v2684
      %s2686 = scalar_lea.vmem %s3, 4
      %v2687 = vld [vmem:[%s2686] sm:$0x3]
      %v2689 = vsel %vm1856, %v2640, 0
      %v2692 = vsel %vm1856, %v2643, 0
      %v2695 = vsel %vm1856, %v2646, 0
      %v2698 = vsel %vm1856, %v2649, 0
      %v2701 = vsel %vm1856, %v2652, 0
      %v2704 = vsel %vm1856, %v2655, 0
      %v2707 = vsel %vm1856, %v2658, 0
      %v2710 = vsel %vm1856, %v2661, 0
      %v2713 = vsel %vm1856, %v2664, 0
      %v2716 = vsel %vm1856, %v2667, 0
      %v2719 = vsel %vm1856, %v2670, 0
      %v2722 = vsel %vm1856, %v2673, 0
      %v2725 = vsel %vm1856, %v2676, 0
      %v2728 = vsel %vm1856, %v2679, 0
      %v2731 = vsel %vm1856, %v2682, 0
      %v2734 = vsel %vm1856, %v2685, 0
      %v2737 = vand.u32 %v2687, %v1908
      %2739 = vmatprep.subr.bf16.mxu0 0
      %2740 = vmatpush1.bf16.msra.mxu0 0
      %2741 = vmatprep.subr.bf16.mxu0 0
      %2742 = vmatpush1.bf16.msra.mxu0 0
      %2743 = vmatprep.subr.bf16.mxu0 0
      %2744 = vmatpush1.bf16.msra.mxu0 0
      %2745 = vmatprep.subr.bf16.mxu0 0
      %2746 = vmatpush1.bf16.msra.mxu0 0
      %2747 = vmatprep.subr.bf16.mxu0 0
      %2748 = vmatpush1.bf16.msra.mxu0 0
      %2749 = vmatprep.subr.bf16.mxu0 0
      %2750 = vmatpush1.bf16.msra.mxu0 0
      %2751 = vmatprep.subr.bf16.mxu0 0
      %2752 = vmatpush1.bf16.msra.mxu0 0
      %2753 = vmatprep.subr.bf16.mxu0 0
      %2754 = vmatpush1.bf16.msra.mxu0 %v2737
      %2755 = vmatprep.subr.bf16.mxu0 0
      %2756 = vmatpush2.bf16.msra.mxu0 0
      %2757 = vmatprep.subr.bf16.mxu0 0
      %2758 = vmatpush2.bf16.msra.mxu0 0
      %2759 = vmatprep.subr.bf16.mxu0 0
      %2760 = vmatpush2.bf16.msra.mxu0 0
      %2761 = vmatprep.subr.bf16.mxu0 0
      %2762 = vmatpush2.bf16.msra.mxu0 0
      %2763 = vmatprep.subr.bf16.mxu0 0
      %2764 = vmatpush2.bf16.msra.mxu0 0
      %2765 = vmatprep.subr.bf16.mxu0 0
      %2766 = vmatpush2.bf16.msra.mxu0 0
      %2767 = vmatprep.subr.bf16.mxu0 0
      %2768 = vmatpush2.bf16.msra.mxu0 0
      %2769 = vmatprep.subr.bf16.mxu0 0
      %2770 = vmatpush2.bf16.msra.mxu0 0
      %2771 = vmatprep.mubr.bf16.mxu0 0
      %2772 = vmatmul.mubr.bf16.gmra.mxu0 %v2689
      %v2773 = vpop.f32.mrf.mxu0
      %v2774 = vadd.f32 0.0, %v2773
      %v2775 = vpop.f32.mrf.mxu0
      %v2776 = vpop.f32.mrf.mxu0
      %v2777 = vadd.f32 0.0, %v2776
      %v2778 = vpop.f32.mrf.mxu0
      %2779 = vmatprep.mubr.bf16.mxu0 0
      %2780 = vmatmul.mubr.bf16.gmra.mxu0 %v2692
      %v2781 = vpop.f32.mrf.mxu0
      %v2782 = vadd.f32 0.0, %v2781
      %v2783 = vpop.f32.mrf.mxu0
      %v2784 = vpop.f32.mrf.mxu0
      %v2785 = vadd.f32 0.0, %v2784
      %v2786 = vpop.f32.mrf.mxu0
      %2787 = vmatprep.mubr.bf16.mxu0 0
      %2788 = vmatmul.mubr.bf16.gmra.mxu0 %v2695
      %v2789 = vpop.f32.mrf.mxu0
      %v2790 = vadd.f32 0.0, %v2789
      %v2791 = vpop.f32.mrf.mxu0
      %v2792 = vpop.f32.mrf.mxu0
      %v2793 = vadd.f32 0.0, %v2792
      %v2794 = vpop.f32.mrf.mxu0
      %2795 = vmatprep.mubr.bf16.mxu0 0
      %2796 = vmatmul.mubr.bf16.gmra.mxu0 %v2698
      %v2797 = vpop.f32.mrf.mxu0
      %v2798 = vadd.f32 0.0, %v2797
      %v2799 = vpop.f32.mrf.mxu0
      %v2800 = vpop.f32.mrf.mxu0
      %v2801 = vadd.f32 0.0, %v2800
      %v2802 = vpop.f32.mrf.mxu0
      %2803 = vmatprep.mubr.bf16.mxu0 0
      %2804 = vmatmul.mubr.bf16.gmra.mxu0 %v2701
      %v2805 = vpop.f32.mrf.mxu0
      %v2806 = vadd.f32 0.0, %v2805
      %v2807 = vpop.f32.mrf.mxu0
      %v2808 = vpop.f32.mrf.mxu0
      %v2809 = vadd.f32 0.0, %v2808
      %v2810 = vpop.f32.mrf.mxu0
      %2811 = vmatprep.mubr.bf16.mxu0 0
      %2812 = vmatmul.mubr.bf16.gmra.mxu0 %v2704
      %v2813 = vpop.f32.mrf.mxu0
      %v2814 = vadd.f32 0.0, %v2813
      %v2815 = vpop.f32.mrf.mxu0
      %v2816 = vpop.f32.mrf.mxu0
      %v2817 = vadd.f32 0.0, %v2816
      %v2818 = vpop.f32.mrf.mxu0
      %2819 = vmatprep.mubr.bf16.mxu0 0
      %2820 = vmatmul.mubr.bf16.gmra.mxu0 %v2707
      %v2821 = vpop.f32.mrf.mxu0
      %v2822 = vadd.f32 0.0, %v2821
      %v2823 = vpop.f32.mrf.mxu0
      %v2824 = vpop.f32.mrf.mxu0
      %v2825 = vadd.f32 0.0, %v2824
      %v2826 = vpop.f32.mrf.mxu0
      %2827 = vmatprep.mubr.bf16.mxu0 0
      %2828 = vmatmul.mubr.bf16.gmra.mxu0 %v2710
      %v2829 = vpop.f32.mrf.mxu0
      %v2830 = vadd.f32 0.0, %v2829
      %v2831 = vpop.f32.mrf.mxu0
      %v2832 = vpop.f32.mrf.mxu0
      %v2833 = vadd.f32 0.0, %v2832
      %v2834 = vpop.f32.mrf.mxu0
      %2835 = vmatprep.mubr.bf16.mxu0 0
      %2836 = vmatmul.mubr.bf16.gmra.mxu0 %v2713
      %v2837 = vpop.f32.mrf.mxu0
      %v2838 = vadd.f32 0.0, %v2837
      %v2839 = vpop.f32.mrf.mxu0
      %v2840 = vpop.f32.mrf.mxu0
      %v2841 = vadd.f32 0.0, %v2840
      %v2842 = vpop.f32.mrf.mxu0
      %2843 = vmatprep.mubr.bf16.mxu0 0
      %2844 = vmatmul.mubr.bf16.gmra.mxu0 %v2716
      %v2845 = vpop.f32.mrf.mxu0
      %v2846 = vadd.f32 0.0, %v2845
      %v2847 = vpop.f32.mrf.mxu0
      %v2848 = vpop.f32.mrf.mxu0
      %v2849 = vadd.f32 0.0, %v2848
      %v2850 = vpop.f32.mrf.mxu0
      %2851 = vmatprep.mubr.bf16.mxu0 0
      %2852 = vmatmul.mubr.bf16.gmra.mxu0 %v2719
      %v2853 = vpop.f32.mrf.mxu0
      %v2854 = vadd.f32 0.0, %v2853
      %v2855 = vpop.f32.mrf.mxu0
      %v2856 = vpop.f32.mrf.mxu0
      %v2857 = vadd.f32 0.0, %v2856
      %v2858 = vpop.f32.mrf.mxu0
      %2859 = vmatprep.mubr.bf16.mxu0 0
      %2860 = vmatmul.mubr.bf16.gmra.mxu0 %v2722
      %v2861 = vpop.f32.mrf.mxu0
      %v2862 = vadd.f32 0.0, %v2861
      %v2863 = vpop.f32.mrf.mxu0
      %v2864 = vpop.f32.mrf.mxu0
      %v2865 = vadd.f32 0.0, %v2864
      %v2866 = vpop.f32.mrf.mxu0
      %2867 = vmatprep.mubr.bf16.mxu0 0
      %2868 = vmatmul.mubr.bf16.gmra.mxu0 %v2725
      %v2869 = vpop.f32.mrf.mxu0
      %v2870 = vadd.f32 0.0, %v2869
      %v2871 = vpop.f32.mrf.mxu0
      %v2872 = vpop.f32.mrf.mxu0
      %v2873 = vadd.f32 0.0, %v2872
      %v2874 = vpop.f32.mrf.mxu0
      %2875 = vmatprep.mubr.bf16.mxu0 0
      %2876 = vmatmul.mubr.bf16.gmra.mxu0 %v2728
      %v2877 = vpop.f32.mrf.mxu0
      %v2878 = vadd.f32 0.0, %v2877
      %v2879 = vpop.f32.mrf.mxu0
      %v2880 = vpop.f32.mrf.mxu0
      %v2881 = vadd.f32 0.0, %v2880
      %v2882 = vpop.f32.mrf.mxu0
      %2883 = vmatprep.mubr.bf16.mxu0 0
      %2884 = vmatmul.mubr.bf16.gmra.mxu0 %v2731
      %v2885 = vpop.f32.mrf.mxu0
      %v2886 = vadd.f32 0.0, %v2885
      %v2887 = vpop.f32.mrf.mxu0
      %v2888 = vpop.f32.mrf.mxu0
      %v2889 = vadd.f32 0.0, %v2888
      %v2890 = vpop.f32.mrf.mxu0
      %2891 = vmatprep.mubr.bf16.mxu0 0
      %2892 = vmatmul.mubr.bf16.gmra.mxu0 %v2734
      %v2893 = vpop.f32.mrf.mxu0
      %v2894 = vadd.f32 0.0, %v2893
      %v2895 = vpop.f32.mrf.mxu0
      %v2896 = vpop.f32.mrf.mxu0
      %v2897 = vadd.f32 0.0, %v2896
      %v2898 = vpop.f32.mrf.mxu0
      %2899 = vdwg.mxu0
      %v2900 = vadd.f32 %v2143, %v2774
      %v2901 = vadd.f32 %v2146, %v2777
      %v2902 = vadd.f32 %v2151, %v2782
      %v2903 = vadd.f32 %v2154, %v2785
      %v2904 = vadd.f32 %v2159, %v2790
      %v2905 = vadd.f32 %v2162, %v2793
      %v2906 = vadd.f32 %v2167, %v2798
      %v2907 = vadd.f32 %v2170, %v2801
      %v2908 = vadd.f32 %v2175, %v2806
      %v2909 = vadd.f32 %v2178, %v2809
      %v2910 = vadd.f32 %v2183, %v2814
      %v2911 = vadd.f32 %v2186, %v2817
      %v2912 = vadd.f32 %v2191, %v2822
      %v2913 = vadd.f32 %v2194, %v2825
      %v2914 = vadd.f32 %v2199, %v2830
      %v2915 = vadd.f32 %v2202, %v2833
      %v2916 = vadd.f32 %v2207, %v2838
      %v2917 = vadd.f32 %v2210, %v2841
      %v2918 = vadd.f32 %v2215, %v2846
      %v2919 = vadd.f32 %v2218, %v2849
      %v2920 = vadd.f32 %v2223, %v2854
      %v2921 = vadd.f32 %v2226, %v2857
      %v2922 = vadd.f32 %v2231, %v2862
      %v2923 = vadd.f32 %v2234, %v2865
      %v2924 = vadd.f32 %v2239, %v2870
      %v2925 = vadd.f32 %v2242, %v2873
      %v2926 = vadd.f32 %v2247, %v2878
      %v2927 = vadd.f32 %v2250, %v2881
      %v2928 = vadd.f32 %v2255, %v2886
      %v2929 = vadd.f32 %v2258, %v2889
      %v2930 = vadd.f32 %v2263, %v2894
      %v2931 = vadd.f32 %v2266, %v2897
      %v2932 = vld [vmem:[#allocation5] sm:$0x1]
      %v2934 = vlaneseq
      %v2935 = vshrl.u32 %v2934, 7
      %v2936 = vsub.s32 0, %v2935
      %v2937 = vrot.slane %v2932, %v2936
      %v2939 = vadd.f32 %v2900, %v2937
      %v2940 = vadd.f32 %v2901, %v2937
      %v2941 = vadd.f32 %v2902, %v2937
      %v2942 = vadd.f32 %v2903, %v2937
      %v2943 = vadd.f32 %v2904, %v2937
      %v2944 = vadd.f32 %v2905, %v2937
      %v2945 = vadd.f32 %v2906, %v2937
      %v2946 = vadd.f32 %v2907, %v2937
      %v2947 = vadd.f32 %v2908, %v2937
      %v2948 = vadd.f32 %v2909, %v2937
      %v2949 = vadd.f32 %v2910, %v2937
      %v2950 = vadd.f32 %v2911, %v2937
      %v2951 = vadd.f32 %v2912, %v2937
      %v2952 = vadd.f32 %v2913, %v2937
      %v2953 = vadd.f32 %v2914, %v2937
      %v2954 = vadd.f32 %v2915, %v2937
      %v2955 = vadd.f32 %v2916, %v2937
      %v2956 = vadd.f32 %v2917, %v2937
      %v2957 = vadd.f32 %v2918, %v2937
      %v2958 = vadd.f32 %v2919, %v2937
      %v2959 = vadd.f32 %v2920, %v2937
      %v2960 = vadd.f32 %v2921, %v2937
      %v2961 = vadd.f32 %v2922, %v2937
      %v2962 = vadd.f32 %v2923, %v2937
      %v2963 = vadd.f32 %v2924, %v2937
      %v2964 = vadd.f32 %v2925, %v2937
      %v2965 = vadd.f32 %v2926, %v2937
      %v2966 = vadd.f32 %v2927, %v2937
      %v2967 = vadd.f32 %v2928, %v2937
      %v2968 = vadd.f32 %v2929, %v2937
      %v2969 = vadd.f32 %v2930, %v2937
      %v2970 = vadd.f32 %v2931, %v2937
      %v2971 = vpack.c.bf16 %v2940, %v2939
      %v2972 = vpack.c.bf16 %v2942, %v2941
      %v2973 = vpack.c.bf16 %v2944, %v2943
      %v2974 = vpack.c.bf16 %v2946, %v2945
      %v2975 = vpack.c.bf16 %v2948, %v2947
      %v2976 = vpack.c.bf16 %v2950, %v2949
      %v2977 = vpack.c.bf16 %v2952, %v2951
      %v2978 = vpack.c.bf16 %v2954, %v2953
      %v2979 = vpack.c.bf16 %v2956, %v2955
      %v2980 = vpack.c.bf16 %v2958, %v2957
      %v2981 = vpack.c.bf16 %v2960, %v2959
      %v2982 = vpack.c.bf16 %v2962, %v2961
      %v2983 = vpack.c.bf16 %v2964, %v2963
      %v2984 = vpack.c.bf16 %v2966, %v2965
      %v2985 = vpack.c.bf16 %v2968, %v2967
      %v2986 = vpack.c.bf16 %v2970, %v2969
      %v3003 = vunpack.c.l.b16 %v2971
      %v3004 = vunpack.c.h.b16 %v2971
      %v3005 = vunpack.c.l.b16 %v2972
      %v3006 = vunpack.c.h.b16 %v2972
      %v3007 = vunpack.c.l.b16 %v2973
      %v3008 = vunpack.c.h.b16 %v2973
      %v3009 = vunpack.c.l.b16 %v2974
      %v3010 = vunpack.c.h.b16 %v2974
      %v3011 = vunpack.c.l.b16 %v2975
      %v3012 = vunpack.c.h.b16 %v2975
      %v3013 = vunpack.c.l.b16 %v2976
      %v3014 = vunpack.c.h.b16 %v2976
      %v3015 = vunpack.c.l.b16 %v2977
      %v3016 = vunpack.c.h.b16 %v2977
      %v3017 = vunpack.c.l.b16 %v2978
      %v3018 = vunpack.c.h.b16 %v2978
      %v3019 = vunpack.c.l.b16 %v2979
      %v3020 = vunpack.c.h.b16 %v2979
      %v3021 = vunpack.c.l.b16 %v2980
      %v3022 = vunpack.c.h.b16 %v2980
      %v3023 = vunpack.c.l.b16 %v2981
      %v3024 = vunpack.c.h.b16 %v2981
      %v3025 = vunpack.c.l.b16 %v2982
      %v3026 = vunpack.c.h.b16 %v2982
      %v3027 = vunpack.c.l.b16 %v2983
      %v3028 = vunpack.c.h.b16 %v2983
      %v3029 = vunpack.c.l.b16 %v2984
      %v3030 = vunpack.c.h.b16 %v2984
      %v3031 = vunpack.c.l.b16 %v2985
      %v3032 = vunpack.c.h.b16 %v2985
      %v3033 = vunpack.c.l.b16 %v2986
      %v3034 = vunpack.c.h.b16 %v2986
      %v3035 = vpack.c.b16 %v3003, %v3003
      %v3036 = vpack.c.b16 %v3004, %v3004
      %v3037 = vpack.c.b16 %v3005, %v3005
      %v3038 = vpack.c.b16 %v3006, %v3006
      %v3039 = vpack.c.b16 %v3007, %v3007
      %v3040 = vpack.c.b16 %v3008, %v3008
      %v3041 = vpack.c.b16 %v3009, %v3009
      %v3042 = vpack.c.b16 %v3010, %v3010
      %v3043 = vpack.c.b16 %v3011, %v3011
      %v3044 = vpack.c.b16 %v3012, %v3012
      %v3045 = vpack.c.b16 %v3013, %v3013
      %v3046 = vpack.c.b16 %v3014, %v3014
      %v3047 = vpack.c.b16 %v3015, %v3015
      %v3048 = vpack.c.b16 %v3016, %v3016
      %v3049 = vpack.c.b16 %v3017, %v3017
      %v3050 = vpack.c.b16 %v3018, %v3018
      %v3051 = vpack.c.b16 %v3019, %v3019
      %v3052 = vpack.c.b16 %v3020, %v3020
      %v3053 = vpack.c.b16 %v3021, %v3021
      %v3054 = vpack.c.b16 %v3022, %v3022
      %v3055 = vpack.c.b16 %v3023, %v3023
      %v3056 = vpack.c.b16 %v3024, %v3024
      %v3057 = vpack.c.b16 %v3025, %v3025
      %v3058 = vpack.c.b16 %v3026, %v3026
      %v3059 = vpack.c.b16 %v3027, %v3027
      %v3060 = vpack.c.b16 %v3028, %v3028
      %v3061 = vpack.c.b16 %v3029, %v3029
      %v3062 = vpack.c.b16 %v3030, %v3030
      %v3063 = vpack.c.b16 %v3031, %v3031
      %v3064 = vpack.c.b16 %v3032, %v3032
      %v3065 = vpack.c.b16 %v3033, %v3033
      %v3066 = vpack.c.b16 %v3034, %v3034
      %3099 = vst.msk [vmem:[%s264] sm:$0xf] %vm460, %v3035
      %3100 = vst.msk [vmem:[%s264 + $0x4] sm:$0xf] %vm460, %v3036
      %3101 = vst.msk [vmem:[%s264 + $0x8] sm:$0xf] %vm460, %v3037
      %3102 = vst.msk [vmem:[%s264 + $0xc] sm:$0xf] %vm460, %v3038
      %3103 = vst.msk [vmem:[%s264 + $0x10] sm:$0xf] %vm460, %v3039
      %3104 = vst.msk [vmem:[%s264 + $0x14] sm:$0xf] %vm460, %v3040
      %3105 = vst.msk [vmem:[%s264 + $0x18] sm:$0xf] %vm460, %v3041
      %3106 = vst.msk [vmem:[%s264 + $0x1c] sm:$0xf] %vm460, %v3042
      %3107 = vst.msk [vmem:[%s264 + $0x20] sm:$0xf] %vm460, %v3043
      %3108 = vst.msk [vmem:[%s264 + $0x24] sm:$0xf] %vm460, %v3044
      %3109 = vst.msk [vmem:[%s264 + $0x28] sm:$0xf] %vm460, %v3045
      %3110 = vst.msk [vmem:[%s264 + $0x2c] sm:$0xf] %vm460, %v3046
      %3111 = vst.msk [vmem:[%s264 + $0x30] sm:$0xf] %vm460, %v3047
      %3112 = vst.msk [vmem:[%s264 + $0x34] sm:$0xf] %vm460, %v3048
      %3113 = vst.msk [vmem:[%s264 + $0x38] sm:$0xf] %vm460, %v3049
      %3114 = vst.msk [vmem:[%s264 + $0x3c] sm:$0xf] %vm460, %v3050
      %3115 = vst.msk [vmem:[%s264 + $0x40] sm:$0xf] %vm460, %v3051
      %3116 = vst.msk [vmem:[%s264 + $0x44] sm:$0xf] %vm460, %v3052
      %3117 = vst.msk [vmem:[%s264 + $0x48] sm:$0xf] %vm460, %v3053
      %3118 = vst.msk [vmem:[%s264 + $0x4c] sm:$0xf] %vm460, %v3054
      %3119 = vst.msk [vmem:[%s264 + $0x50] sm:$0xf] %vm460, %v3055
      %3120 = vst.msk [vmem:[%s264 + $0x54] sm:$0xf] %vm460, %v3056
      %3121 = vst.msk [vmem:[%s264 + $0x58] sm:$0xf] %vm460, %v3057
      %3122 = vst.msk [vmem:[%s264 + $0x5c] sm:$0xf] %vm460, %v3058
      %3123 = vst.msk [vmem:[%s264 + $0x60] sm:$0xf] %vm460, %v3059
      %3124 = vst.msk [vmem:[%s264 + $0x64] sm:$0xf] %vm460, %v3060
      %3125 = vst.msk [vmem:[%s264 + $0x68] sm:$0xf] %vm460, %v3061
      %3126 = vst.msk [vmem:[%s264 + $0x6c] sm:$0xf] %vm460, %v3062
      %3127 = vst.msk [vmem:[%s264 + $0x70] sm:$0xf] %vm460, %v3063
      %3128 = vst.msk [vmem:[%s264 + $0x74] sm:$0xf] %vm460, %v3064
      %3129 = vst.msk [vmem:[%s264 + $0x78] sm:$0xf] %vm460, %v3065
      %3130 = vst.msk [vmem:[%s264 + $0x7c] sm:$0xf] %vm460, %v3066
      %v3131 = vsel %vm1274, %v2939, 0.0
      %v3132 = vsel %vm1274, %v2940, 0.0
      %v3133 = vadd.f32 %v3131, %v3132
      %v3134 = vsel %vm1274, %v2941, 0.0
      %v3135 = vadd.f32 %v3133, %v3134
      %v3136 = vsel %vm1274, %v2942, 0.0
      %v3137 = vadd.f32 %v3135, %v3136
      %v3138 = vsel %vm1274, %v2943, 0.0
      %v3139 = vadd.f32 %v3137, %v3138
      %v3140 = vsel %vm1274, %v2944, 0.0
      %v3141 = vadd.f32 %v3139, %v3140
      %v3142 = vsel %vm1274, %v2945, 0.0
      %v3143 = vadd.f32 %v3141, %v3142
      %v3144 = vsel %vm1274, %v2946, 0.0
      %v3145 = vadd.f32 %v3143, %v3144
      %v3146 = vsel %vm1274, %v2947, 0.0
      %v3147 = vadd.f32 %v3145, %v3146
      %v3148 = vsel %vm1274, %v2948, 0.0
      %v3149 = vadd.f32 %v3147, %v3148
      %v3150 = vsel %vm1274, %v2949, 0.0
      %v3151 = vadd.f32 %v3149, %v3150
      %v3152 = vsel %vm1274, %v2950, 0.0
      %v3153 = vadd.f32 %v3151, %v3152
      %v3154 = vsel %vm1274, %v2951, 0.0
      %v3155 = vadd.f32 %v3153, %v3154
      %v3156 = vsel %vm1274, %v2952, 0.0
      %v3157 = vadd.f32 %v3155, %v3156
      %v3158 = vsel %vm1274, %v2953, 0.0
      %v3159 = vadd.f32 %v3157, %v3158
      %v3160 = vsel %vm1274, %v2954, 0.0
      %v3161 = vadd.f32 %v3159, %v3160
      %v3162 = vsel %vm1274, %v2955, 0.0
      %v3163 = vadd.f32 %v3161, %v3162
      %v3164 = vsel %vm1274, %v2956, 0.0
      %v3165 = vadd.f32 %v3163, %v3164
      %v3166 = vsel %vm1274, %v2957, 0.0
      %v3167 = vadd.f32 %v3165, %v3166
      %v3168 = vsel %vm1274, %v2958, 0.0
      %v3169 = vadd.f32 %v3167, %v3168
      %v3170 = vsel %vm1274, %v2959, 0.0
      %v3171 = vadd.f32 %v3169, %v3170
      %v3172 = vsel %vm1274, %v2960, 0.0
      %v3173 = vadd.f32 %v3171, %v3172
      %v3174 = vsel %vm1274, %v2961, 0.0
      %v3175 = vadd.f32 %v3173, %v3174
      %v3176 = vsel %vm1274, %v2962, 0.0
      %v3177 = vadd.f32 %v3175, %v3176
      %v3178 = vsel %vm1274, %v2963, 0.0
      %v3179 = vadd.f32 %v3177, %v3178
      %v3180 = vsel %vm1274, %v2964, 0.0
      %v3181 = vadd.f32 %v3179, %v3180
      %v3182 = vsel %vm1274, %v2965, 0.0
      %v3183 = vadd.f32 %v3181, %v3182
      %v3184 = vsel %vm1274, %v2966, 0.0
      %v3185 = vadd.f32 %v3183, %v3184
      %v3186 = vsel %vm1274, %v2967, 0.0
      %v3187 = vadd.f32 %v3185, %v3186
      %v3188 = vsel %vm1274, %v2968, 0.0
      %v3189 = vadd.f32 %v3187, %v3188
      %v3190 = vsel %vm1274, %v2969, 0.0
      %v3191 = vadd.f32 %v3189, %v3190
      %v3192 = vsel %vm1274, %v2970, 0.0
      %v3193 = vadd.f32 %v3191, %v3192
      %v3194 = vrot.slane %v3193, 4
      %v3195 = vadd.f32 %v3193, %v3194
      %v3196 = vrot.slane %v3195, 2
      %v3197 = vadd.f32 %v3195, %v3196
      %v3198 = vrot.slane %v3197, 1
      %v3199 = vadd.f32 %v3197, %v3198
      %v3200 = vmul.f32 %v2939, %v2939
      %v3201 = vmul.f32 %v2940, %v2940
      %v3202 = vmul.f32 %v2941, %v2941
      %v3203 = vmul.f32 %v2942, %v2942
      %v3204 = vmul.f32 %v2943, %v2943
      %v3205 = vmul.f32 %v2944, %v2944
      %v3206 = vmul.f32 %v2945, %v2945
      %v3207 = vmul.f32 %v2946, %v2946
      %v3208 = vmul.f32 %v2947, %v2947
      %v3209 = vmul.f32 %v2948, %v2948
      %v3210 = vmul.f32 %v2949, %v2949
      %v3211 = vmul.f32 %v2950, %v2950
      %v3212 = vmul.f32 %v2951, %v2951
      %v3213 = vmul.f32 %v2952, %v2952
      %v3214 = vmul.f32 %v2953, %v2953
      %v3215 = vmul.f32 %v2954, %v2954
      %v3216 = vmul.f32 %v2955, %v2955
      %v3217 = vmul.f32 %v2956, %v2956
      %v3218 = vmul.f32 %v2957, %v2957
      %v3219 = vmul.f32 %v2958, %v2958
      %v3220 = vmul.f32 %v2959, %v2959
      %v3221 = vmul.f32 %v2960, %v2960
      %v3222 = vmul.f32 %v2961, %v2961
      %v3223 = vmul.f32 %v2962, %v2962
      %v3224 = vmul.f32 %v2963, %v2963
      %v3225 = vmul.f32 %v2964, %v2964
      %v3226 = vmul.f32 %v2965, %v2965
      %v3227 = vmul.f32 %v2966, %v2966
      %v3228 = vmul.f32 %v2967, %v2967
      %v3229 = vmul.f32 %v2968, %v2968
      %v3230 = vmul.f32 %v2969, %v2969
      %v3231 = vmul.f32 %v2970, %v2970
      %v3232 = vsel %vm1274, %v3200, 0.0
      %v3233 = vsel %vm1274, %v3201, 0.0
      %v3234 = vadd.f32 %v3232, %v3233
      %v3235 = vsel %vm1274, %v3202, 0.0
      %v3236 = vadd.f32 %v3234, %v3235
      %v3237 = vsel %vm1274, %v3203, 0.0
      %v3238 = vadd.f32 %v3236, %v3237
      %v3239 = vsel %vm1274, %v3204, 0.0
      %v3240 = vadd.f32 %v3238, %v3239
      %v3241 = vsel %vm1274, %v3205, 0.0
      %v3242 = vadd.f32 %v3240, %v3241
      %v3243 = vsel %vm1274, %v3206, 0.0
      %v3244 = vadd.f32 %v3242, %v3243
      %v3245 = vsel %vm1274, %v3207, 0.0
      %v3246 = vadd.f32 %v3244, %v3245
      %v3247 = vsel %vm1274, %v3208, 0.0
      %v3248 = vadd.f32 %v3246, %v3247
      %v3249 = vsel %vm1274, %v3209, 0.0
      %v3250 = vadd.f32 %v3248, %v3249
      %v3251 = vsel %vm1274, %v3210, 0.0
      %v3252 = vadd.f32 %v3250, %v3251
      %v3253 = vsel %vm1274, %v3211, 0.0
      %v3254 = vadd.f32 %v3252, %v3253
      %v3255 = vsel %vm1274, %v3212, 0.0
      %v3256 = vadd.f32 %v3254, %v3255
      %v3257 = vsel %vm1274, %v3213, 0.0
      %v3258 = vadd.f32 %v3256, %v3257
      %v3259 = vsel %vm1274, %v3214, 0.0
      %v3260 = vadd.f32 %v3258, %v3259
      %v3261 = vsel %vm1274, %v3215, 0.0
      %v3262 = vadd.f32 %v3260, %v3261
      %v3263 = vsel %vm1274, %v3216, 0.0
      %v3264 = vadd.f32 %v3262, %v3263
      %v3265 = vsel %vm1274, %v3217, 0.0
      %v3266 = vadd.f32 %v3264, %v3265
      %v3267 = vsel %vm1274, %v3218, 0.0
      %v3268 = vadd.f32 %v3266, %v3267
      %v3269 = vsel %vm1274, %v3219, 0.0
      %v3270 = vadd.f32 %v3268, %v3269
      %v3271 = vsel %vm1274, %v3220, 0.0
      %v3272 = vadd.f32 %v3270, %v3271
      %v3273 = vsel %vm1274, %v3221, 0.0
      %v3274 = vadd.f32 %v3272, %v3273
      %v3275 = vsel %vm1274, %v3222, 0.0
      %v3276 = vadd.f32 %v3274, %v3275
      %v3277 = vsel %vm1274, %v3223, 0.0
      %v3278 = vadd.f32 %v3276, %v3277
      %v3279 = vsel %vm1274, %v3224, 0.0
      %v3280 = vadd.f32 %v3278, %v3279
      %v3281 = vsel %vm1274, %v3225, 0.0
      %v3282 = vadd.f32 %v3280, %v3281
      %v3283 = vsel %vm1274, %v3226, 0.0
      %v3284 = vadd.f32 %v3282, %v3283
      %v3285 = vsel %vm1274, %v3227, 0.0
      %v3286 = vadd.f32 %v3284, %v3285
      %v3287 = vsel %vm1274, %v3228, 0.0
      %v3288 = vadd.f32 %v3286, %v3287
      %v3289 = vsel %vm1274, %v3229, 0.0
      %v3290 = vadd.f32 %v3288, %v3289
      %v3291 = vsel %vm1274, %v3230, 0.0
      %v3292 = vadd.f32 %v3290, %v3291
      %v3293 = vsel %vm1274, %v3231, 0.0
      %v3294 = vadd.f32 %v3292, %v3293
      %v3295 = vrot.slane %v3294, 4
      %v3296 = vadd.f32 %v3294, %v3295
      %v3297 = vrot.slane %v3296, 2
      %v3298 = vadd.f32 %v3296, %v3297
      %v3299 = vrot.slane %v3298, 1
      %v3300 = vadd.f32 %v3298, %v3299
      %v3301 = vsel %vm1905, %v3199, %v3300
      %vm3302 = vcmask 1024
      %3303 = vst.msk [vmem:[%s268] sm:$0x3] %vm3302, %v3301
      %p3304 = scmp.lt.s32.totalorder %s24, 1
      %s3305 = scalar_select %p3304, %s24, 1
      %s3306 = smul.addr %s3305, 32
      %s3307 = smul.addr %s3306, 4
      %s3308 = scalar_lea.vmem %s5, %s3307
      %p3309 = scmp.lt.s32.totalorder %s24, 1
      %s3310 = scalar_select %p3309, %s24, 1
      %s3311 = smul.addr %s3310, 2
      %s3312 = scalar_lea.vmem %s6, %s3311
      // Predicated region
      $region41: #{resnet_block_pallas_nchw.5} parent=39 // pred_check
        %p3313 = pneg %p152
      $region42: #{resnet_block_pallas_nchw.5} parent=39 // pred_check_branch
        %3315 = sbr.rel (%p3313) target = $region44
      $region43: #{resnet_block_pallas_nchw.5} parent=39 // pred_region
        _
      $region44: #{resnet_block_pallas_nchw.5} parent=39 // pred_fallthru
        _
      // Predicated region
      $region45: #{resnet_block_pallas_nchw.5} parent=39 // pred_check
        %p3316 = pneg %p178
      $region46: #{resnet_block_pallas_nchw.5} parent=39 // pred_check_branch
        %3318 = sbr.rel (%p3316) target = $region48
      $region47: #{resnet_block_pallas_nchw.5} parent=39 // pred_region
        _
      $region48: #{resnet_block_pallas_nchw.5} parent=39 // pred_fallthru
        _
    $region40: #{resnet_block_pallas_nchw.5} parent=5 // pred_fallthru
      _
    %p3319 = scmp.le.s32.totalorder 2, %s19
    // Predicated region
    $region49: #{resnet_block_pallas_nchw.5} parent=5 // pred_check
      %p3320 = pneg %p3319
    $region50: #{resnet_block_pallas_nchw.5} parent=5 // pred_check_branch
      %3322 = sbr.rel (%p3320) target = $region52
    $region51: #{resnet_block_pallas_nchw.5} parent=5 // pred_region
      %s3323 = ssub.s32 %s19, 2
      // Predicated region
      $region53: #{resnet_block_pallas_nchw.5} parent=51 // pred_check
        %p3324 = pneg %p158
      $region54: #{resnet_block_pallas_nchw.5} parent=51 // pred_check_branch
        %3326 = sbr.rel (%p3324) target = $region56
      $region55: #{resnet_block_pallas_nchw.5} parent=51 // pred_region
        %p3327 = scmp.lt.s32.totalorder %s25, 1
        %s3328 = scalar_select %p3327, %s25, 1
        %s3329 = smul.addr %s3328, 32
        %s3330 = smul.addr %s3329, 4
        %s3331 = scalar_lea.vmem %s5, %s3330
      $region56: #{resnet_block_pallas_nchw.5} parent=51 // pred_fallthru
        _
      // Predicated region
      $region57: #{resnet_block_pallas_nchw.5} parent=51 // pred_check
        %p3332 = pneg %p184
      $region58: #{resnet_block_pallas_nchw.5} parent=51 // pred_check_branch
        %3334 = sbr.rel (%p3332) target = $region60
      $region59: #{resnet_block_pallas_nchw.5} parent=51 // pred_region
        %p3335 = scmp.lt.s32.totalorder %s25, 1
        %s3336 = scalar_select %p3335, %s25, 1
        %s3337 = smul.addr %s3336, 2
        %s3338 = scalar_lea.vmem %s6, %s3337
      $region60: #{resnet_block_pallas_nchw.5} parent=51 // pred_fallthru
        _
    $region52: #{resnet_block_pallas_nchw.5} parent=5 // pred_fallthru
      _
  $region6: #{resnet_block_pallas_nchw.5} parent=0 // loop_footer
    %s23 = sadd.s32 1, %s19
  $region7: #{resnet_block_pallas_nchw.5} parent=0 // loop_footer_branch
    %18 = sbr.rel target = $region3
  $region8: #{resnet_block_pallas_nchw.5} parent=0 // loop_exit
    _

</llo_original>
